<compile_context>
chip_gen: v5e
topology: v5e:2x2
jax: 0.10.0
libtpu: 0.0.40
codegen_flags: <defaults>
</compile_context>

<pallas_src>
import functools

import jax
import jax.numpy as jnp
from jax.experimental import pallas as pl
from jax.experimental.pallas import tpu as pltpu

LN_EPS = 1e-5                      # PyTorch LayerNorm default
HI = jax.lax.Precision.HIGHEST     # reference-only precision


# ----------------------------------------------------------------------------
# Shared helpers
# ----------------------------------------------------------------------------
def _layer_norm(x, w, b):
    mean = jnp.mean(x, axis=-1, keepdims=True)
    xc = x - mean
    var = jnp.mean(xc * xc, axis=-1, keepdims=True)
    return xc * jax.lax.rsqrt(var + LN_EPS) * w + b


# ----------------------------------------------------------------------------
# In-kernel building blocks
# ----------------------------------------------------------------------------
def _encoder_layer_in_kernel(x2, wqkc, bqkc, bo, ln1w, ln1b,
                             w1, b1, w2, b2, ln2w, ln2b, *, B, S, D, num_heads):
    """One TransformerEncoderLayer (post-norm, ReLU, dropout=identity).

    x2:   (B*S, D) activations.
    wqkc: (D, 2D + nh*D)  packed [Q*scale | K | per-head (Wv_h @ Wo_h)].
    bqkc: (1, 2D + nh*D)  packed biases (Q bias pre-scaled, V bias pre-folded).
    """
    dh = D // num_heads

    qkv2 = jnp.dot(x2, wqkc, preferred_element_type=jnp.float32) + bqkc
    qkv = qkv2.reshape(B, S, 2 * D + num_heads * D)

    attn = None
    for h in range(num_heads):                         # statically unrolled, tiny
        qh = qkv[..., h * dh:(h + 1) * dh]             # scale already folded in
        kh = qkv[..., D + h * dh: D + (h + 1) * dh]
        vh = qkv[..., 2 * D + h * D: 2 * D + (h + 1) * D]   # D-wide, Wo folded in
        s = jnp.einsum("bqd,bkd->bqk", qh, kh,
                       preferred_element_type=jnp.float32)
        s = s - jnp.max(s, axis=-1, keepdims=True)     # keep the guard
        p = jnp.exp(s)
        p = p * pl.reciprocal(jnp.sum(p, axis=-1, keepdims=True), approx=True)
        part = jnp.einsum("bqk,bkd->bqd", p, vh,
                          preferred_element_type=jnp.float32)
        attn = part if attn is None else attn + part

    attn2 = attn.reshape(B * S, D) + bo
    y2 = _layer_norm(x2 + attn2, ln1w, ln1b)
    h1 = jnp.maximum(jnp.dot(y2, w1, preferred_element_type=jnp.float32) + b1, 0.0)
    ff2 = jnp.dot(h1, w2, preferred_element_type=jnp.float32) + b2
    return _layer_norm(y2 + ff2, ln2w, ln2b)


def _lstm_gates(g, c, H):
    """PyTorch gate order i, f, g, o. g: (B, 4H), c: (B, H)."""
    i = jax.nn.sigmoid(g[:, 0:H])
    f = jax.nn.sigmoid(g[:, H:2 * H])
    gg = jnp.tanh(g[:, 2 * H:3 * H])
    o = jax.nn.sigmoid(g[:, 3 * H:4 * H])
    c_new = f * c + i * gg
    return o * jnp.tanh(c_new), c_new


def _bilstm_layer_full(x2, wih, bih, whh_bd, out_ref, *, B, S, H):
    """One bidirectional LSTM layer that writes the full sequence to VMEM.

    x2:     (B*S, Din)
    wih:    (Din, 8H)  [fwd i f g o | bwd i f g o], b_ih+b_hh folded into bih.
    whh_bd: (2H, 8H)   block-diagonal recurrence weights (fwd rows / bwd rows).
    out_ref:(B, S, 2H) VMEM scratch.
    """
    xg = (jnp.dot(x2, wih, preferred_element_type=jnp.float32) + bih
          ).reshape(B, S, 8 * H)

    h2 = jnp.zeros((B, 2 * H), jnp.float32)
    c_f = jnp.zeros((B, H), jnp.float32)
    c_b = jnp.zeros((B, H), jnp.float32)
    for t in range(S):                                  # statically unrolled
        if t == 0:                                      # skip matmul of zeros
            g_f = xg[:, 0, 0:4 * H]
            g_b = xg[:, S - 1, 4 * H:8 * H]
        else:
            hrec = jnp.dot(h2, whh_bd, preferred_element_type=jnp.float32)
            g_f = xg[:, t, 0:4 * H] + hrec[:, 0:4 * H]
            g_b = xg[:, S - 1 - t, 4 * H:8 * H] + hrec[:, 4 * H:8 * H]
        h_f, c_f = _lstm_gates(g_f, c_f, H)
        h_b, c_b = _lstm_gates(g_b, c_b, H)
        h2 = jnp.concatenate([h_f, h_b], axis=-1)
        out_ref[:, t, 0:H] = h_f                        # forward, time t
        out_ref[:, S - 1 - t, H:2 * H] = h_b            # backward, time S-1-t


def _bilstm_last_layer(x2, wih, bih, whh_bd, *, B, S, H):
    """Last BiLSTM layer: only the states the final Linear consumes.

    Forward direction runs all S steps (keeps final h only); backward direction
    runs exactly one step (its output at position S-1). Returns (B, 2H).
    """
    xg = (jnp.dot(x2, wih, preferred_element_type=jnp.float32) + bih
          ).reshape(B, S, 8 * H)
    whh_f = whh_bd[0:H, 0:4 * H]                        # forward recurrence only

    zeros_h = jnp.zeros((B, H), jnp.float32)
    h_f, c_f = _lstm_gates(xg[:, 0, 0:4 * H], zeros_h, H)
    for t in range(1, S):
        g_f = xg[:, t, 0:4 * H] + jnp.dot(h_f, whh_f,
                                          preferred_element_type=jnp.float32)
        h_f, c_f = _lstm_gates(g_f, c_f, H)

    h_b, _ = _lstm_gates(xg[:, S - 1, 4 * H:8 * H], zeros_h, H)
    return jnp.concatenate([h_f, h_b], axis=-1)


def _fused_forward_kernel(*refs, num_heads, num_tf_layers, hidden_layer_sizes):
    n_lstm = len(hidden_layer_sizes)
    n_params = 11 * num_tf_layers + 3 * n_lstm + 2
    x_ref = refs[0]
    param_refs = refs[1:1 + n_params]
    out_ref = refs[1 + n_params]
    scr_refs = refs[2 + n_params:]                      # one per intermediate LSTM

    pos = 0

    def take(n):
        nonlocal pos
        vals = [param_refs[i][...] for i in range(pos, pos + n)]
        pos += n
        return vals

    x = x_ref[...]
    B, S, D = x.shape
    x2 = x.reshape(B * S, D)

    # ---- Transformer encoder stack (2-D activations) ----
    for _ in range(num_tf_layers):
        (wqkc, bqkc, bo, ln1w, ln1b, w1, b1, w2, b2, ln2w, ln2b) = take(11)
        x2 = _encoder_layer_in_kernel(x2, wqkc, bqkc, bo, ln1w, ln1b,
                                      w1, b1, w2, b2, ln2w, ln2b,
                                      B=B, S=S, D=D, num_heads=num_heads)

    # ---- Stacked BiLSTM: intermediate layers write full sequences to VMEM ----
    cur2 = x2
    for li in range(n_lstm - 1):
        H = hidden_layer_sizes[li]
        wih, bih, whh_bd = take(3)
        _bilstm_layer_full(cur2, wih, bih, whh_bd, scr_refs[li], B=B, S=S, H=H)
        cur2 = scr_refs[li][...].reshape(B * S, 2 * H)

    # ---- Last BiLSTM layer (no scratch) + fused final Linear ----
    H_last = hidden_layer_sizes[-1]
    wih, bih, whh_bd = take(3)
    last = _bilstm_last_layer(cur2, wih, bih, whh_bd, B=B, S=S, H=H_last)

    wlin, blin = take(2)
    out_ref[...] = jnp.dot(last, wlin, preferred_element_type=jnp.float32) + blin


# ----------------------------------------------------------------------------
# Parameter packing (offline folds: scale into Q, Wo into V, whh block-diag)
# ----------------------------------------------------------------------------
def _pack_params(params, *, num_heads):
    flat = []
    for p in params["transformer"]:
        D = p["wo"].shape[0]
        dh = D // num_heads
        scale = 1.0 / (dh ** 0.5)
        wq = p["wqkv"][:, 0:D] * scale
        bq = p["bqkv"][:, 0:D] * scale
        wk = p["wqkv"][:, D:2 * D]
        bk = p["bqkv"][:, D:2 * D]
        wv_parts, bv_parts = [], []
        for h in range(num_heads):
            csl = slice(2 * D + h * dh, 2 * D + (h + 1) * dh)
            wo_h = p["wo"][h * dh:(h + 1) * dh, :]
            wv_parts.append(jnp.dot(p["wqkv"][:, csl], wo_h, precision=HI))
            bv_parts.append(jnp.dot(p["bqkv"][:, csl], wo_h, precision=HI))
        wqkc = jnp.concatenate([wq, wk] + wv_parts, axis=1)   # (D, 2D + nh*D)
        bqkc = jnp.concatenate([bq, bk] + bv_parts, axis=1)   # (1, 2D + nh*D)
        flat += [wqkc, bqkc, p["bo"], p["ln1w"], p["ln1b"],
                 p["w1"], p["b1"], p["w2"], p["b2"], p["ln2w"], p["ln2b"]]

    for p in params["bilstm"]:
        H = p["whh"].shape[1]
        z = jnp.zeros((H, 4 * H), jnp.float32)
        whh_bd = jnp.concatenate(
            [jnp.concatenate([p["whh"][0], z], axis=1),
             jnp.concatenate([z, p["whh"][1]], axis=1)], axis=0)   # (2H, 8H)
        flat += [p["wih"], p["bih"], whh_bd]

    flat += [params["linear"]["w"], params["linear"]["b"]]
    return flat


# ----------------------------------------------------------------------------
# Wrapper: one gridless pallas_call for the whole forward pass
# ----------------------------------------------------------------------------
def transformer_bilstm_forward(x, params, *, num_heads, hidden_layer_sizes):
    B, S, _ = x.shape
    hidden_layer_sizes = tuple(hidden_layer_sizes)
    flat = _pack_params(params, num_heads=num_heads)

    out_dim = params["linear"]["w"].shape[-1]
    kernel = functools.partial(
        _fused_forward_kernel,
        num_heads=num_heads,
        num_tf_layers=len(params["transformer"]),
        hidden_layer_sizes=hidden_layer_sizes)

    vmem = pl.BlockSpec(memory_space=pltpu.MemorySpace.VMEM)
    return pl.pallas_call(
        kernel,
        out_shape=jax.ShapeDtypeStruct((B, out_dim), jnp.float32),
        in_specs=[vmem] * (1 + len(flat)),
        out_specs=vmem,
        # Only the intermediate BiLSTM layers need a full-sequence scratch.
        scratch_shapes=[pltpu.VMEM((B, S, 2 * H), jnp.float32)
                        for H in hidden_layer_sizes[:-1]],
        # Working set << 1 MiB; 32 MiB is safe on v5e/v6e/v7x.
        compiler_params=pltpu.CompilerParams(vmem_limit_bytes=32 * 1024 * 1024),
    )(x, *flat)


# ----------------------------------------------------------------------------
# Pure-JAX reference (semantic params, explicit f32/HIGHEST matmul precision)
# ----------------------------------------------------------------------------
def _ref_proj(x, w, b=None):
    lead = x.shape[:-1]
    y = jnp.dot(x.reshape(-1, x.shape[-1]), w, precision=HI,
                preferred_element_type=jnp.float32)
    if b is not None:
        y = y + b
    return y.reshape(*lead, w.shape[-1])


def _ref_encoder_layer(x, p, *, num_heads):
    B, S, D = x.shape
    dh = D // num_heads
    scale = 1.0 / (dh ** 0.5)
    qkv = _ref_proj(x, p["wqkv"], p["bqkv"])
    q, k, v = qkv[..., :D], qkv[..., D:2 * D], qkv[..., 2 * D:]
    q = q.reshape(B, S, num_heads, dh).transpose(0, 2, 1, 3) * scale
    k = k.reshape(B, S, num_heads, dh).transpose(0, 2, 1, 3)
    v = v.reshape(B, S, num_heads, dh).transpose(0, 2, 1, 3)
    s = jnp.einsum("bhqd,bhkd->bhqk", q, k, precision=HI)
    pr = jax.nn.softmax(s, axis=-1)
    ctx = jnp.einsum("bhqk,bhkd->bhqd", pr, v,
                     precision=HI).transpose(0, 2, 1, 3).reshape(B, S, D)
    attn = _ref_proj(ctx, p["wo"], p["bo"])
    y = _layer_norm(x + attn, p["ln1w"], p["ln1b"])
    ff = _ref_proj(jnp.maximum(_ref_proj(y, p["w1"], p["b1"]), 0.0), p["w2"], p["b2"])
    return _layer_norm(y + ff, p["ln2w"], p["ln2b"])


def _ref_bilstm_layer(x, p, *, hidden):
    B, S, _ = x.shape
    H = hidden
    xg = _ref_proj(x, p["wih"], p["bih"])
    xg_f, xg_b = xg[..., :4 * H], xg[..., 4 * H:]

    def run(gates, whh_d):
        def step(carry, gt):
            h, c = carry
            g = gt + jnp.dot(h, whh_d, precision=HI,
                             preferred_element_type=jnp.float32)
            i = jax.nn.sigmoid(g[:, 0:H])
            f = jax.nn.sigmoid(g[:, H:2 * H])
            gg = jnp.tanh(g[:, 2 * H:3 * H])
            o = jax.nn.sigmoid(g[:, 3 * H:4 * H])
            c = f * c + i * gg
            h = o * jnp.tanh(c)
            return (h, c), h

        init = (jnp.zeros((B, H), jnp.float32), jnp.zeros((B, H), jnp.float32))
        _, hs = jax.lax.scan(step, init, jnp.swapaxes(gates, 0, 1))
        return jnp.swapaxes(hs, 0, 1)                   # (B, S, H)

    fwd = run(xg_f, p["whh"][0])
    bwd = run(xg_b[:, ::-1, :], p["whh"][1])[:, ::-1, :]
    return jnp.concatenate([fwd, bwd], axis=-1)


def transformer_bilstm_reference(x, params, *, num_heads, hidden_layer_sizes):
    out = x
    for p in params["transformer"]:
        out = _ref_encoder_layer(out, p, num_heads=num_heads)
    for p, H in zip(params["bilstm"], hidden_layer_sizes):
        out = _ref_bilstm_layer(out, p, hidden=H)
    last = out[:, -1, :]
    return jnp.dot(last, params["linear"]["w"], precision=HI,
                   preferred_element_type=jnp.float32) + params["linear"]["b"]


# ----------------------------------------------------------------------------
# Deterministic parameter init (semantic layout; kernel packing happens in the
# wrapper). Weight matrices are stored (in_features, out_features).
# ----------------------------------------------------------------------------
def _uniform(key, shape, scale=0.1):
    return jax.random.uniform(key, shape, jnp.float32, -scale, scale)


def init_params(key, input_dim, hidden_layer_sizes, hidden_dim, num_layers,
                num_heads, output_dim):
    D, F = input_dim, hidden_dim
    params = {"transformer": [], "bilstm": []}

    for _ in range(num_layers):
        key, *ks = jax.random.split(key, 9)
        params["transformer"].append(dict(
            wqkv=_uniform(ks[0], (D, 3 * D)), bqkv=_uniform(ks[1], (1, 3 * D)),
            wo=_uniform(ks[2], (D, D)), bo=_uniform(ks[3], (1, D)),
            ln1w=jnp.ones((1, D), jnp.float32),
            ln1b=jnp.zeros((1, D), jnp.float32),
            w1=_uniform(ks[4], (D, F)), b1=_uniform(ks[5], (1, F)),
            w2=_uniform(ks[6], (F, D)), b2=_uniform(ks[7], (1, D)),
            ln2w=jnp.ones((1, D), jnp.float32),
            ln2b=jnp.zeros((1, D), jnp.float32),
        ))

    in_dim = D
    for H in hidden_layer_sizes:
        key, *ks = jax.random.split(key, 7)
        wih_f = _uniform(ks[0], (in_dim, 4 * H))
        whh_f = _uniform(ks[1], (H, 4 * H))
        bf = _uniform(ks[2], (1, 4 * H))                 # b_ih + b_hh folded (fwd)
        wih_b = _uniform(ks[3], (in_dim, 4 * H))
        whh_b = _uniform(ks[4], (H, 4 * H))
        bb = _uniform(ks[5], (1, 4 * H))                 # b_ih + b_hh folded (bwd)
        params["bilstm"].append(dict(
            wih=jnp.concatenate([wih_f, wih_b], axis=1),   # (in, 8H)
            bih=jnp.concatenate([bf, bb], axis=1),         # (1, 8H)
            whh=jnp.stack([whh_f, whh_b], axis=0),         # (2, H, 4H)
        ))
        in_dim = 2 * H

    key, kw, kb = jax.random.split(key, 3)
    params["linear"] = dict(
        w=_uniform(kw, (2 * hidden_layer_sizes[-1], output_dim)),
        b=_uniform(kb, (1, output_dim)),
    )
    return params


# ----------------------------------------------------------------------------
# Demo
# ----------------------------------------------------------------------------
if __name__ == "__main__":
    batch_size = 2
    seq_len = 8
    input_dim = 16
    hidden_layer_sizes = (32, 32)
    hidden_dim = 32          # transformer feed-forward dim
    num_layers = 2           # transformer encoder layers
    num_heads = 4
    output_dim = 4

    key = jax.random.PRNGKey(0)
    kx, kp = jax.random.split(key)
    x = jax.random.normal(kx, (batch_size, seq_len, input_dim), jnp.float32)
    params = init_params(kp, input_dim, hidden_layer_sizes, hidden_dim,
                         num_layers, num_heads, output_dim)

    fwd = jax.jit(functools.partial(transformer_bilstm_forward,
                                    num_heads=num_heads,
                                    hidden_layer_sizes=hidden_layer_sizes))
    out = jax.block_until_ready(fwd(x, params))

    ref_fn = jax.jit(functools.partial(transformer_bilstm_reference,
                                       num_heads=num_heads,
                                       hidden_layer_sizes=hidden_layer_sizes))
    ref = jax.block_until_ready(ref_fn(x, params))

    assert out.shape == (batch_size, output_dim), out.shape
    assert jnp.all(jnp.isfinite(out))
    # Kernel runs default (single-pass bf16) MXU precision; reference is f32
    # HIGHEST, so allow a modest tolerance.
    assert jnp.allclose(out, ref, rtol=2e-2, atol=2e-2), (out, ref)
    print("KERNEL_OK")
</pallas_src>

<mosaic_0001>
module attributes {stable_mosaic.version = 11 : i64} {
  func.func @_fused_forward_kernel(%arg0: memref<2x8x16xf32, #tpu.memory_space<vmem>>, %arg1: memref<16x96xf32, #tpu.memory_space<vmem>>, %arg2: memref<1x96xf32, #tpu.memory_space<vmem>>, %arg3: memref<1x16xf32, #tpu.memory_space<vmem>>, %arg4: memref<1x16xf32, #tpu.memory_space<vmem>>, %arg5: memref<1x16xf32, #tpu.memory_space<vmem>>, %arg6: memref<16x32xf32, #tpu.memory_space<vmem>>, %arg7: memref<1x32xf32, #tpu.memory_space<vmem>>, %arg8: memref<32x16xf32, #tpu.memory_space<vmem>>, %arg9: memref<1x16xf32, #tpu.memory_space<vmem>>, %arg10: memref<1x16xf32, #tpu.memory_space<vmem>>, %arg11: memref<1x16xf32, #tpu.memory_space<vmem>>, %arg12: memref<16x96xf32, #tpu.memory_space<vmem>>, %arg13: memref<1x96xf32, #tpu.memory_space<vmem>>, %arg14: memref<1x16xf32, #tpu.memory_space<vmem>>, %arg15: memref<1x16xf32, #tpu.memory_space<vmem>>, %arg16: memref<1x16xf32, #tpu.memory_space<vmem>>, %arg17: memref<16x32xf32, #tpu.memory_space<vmem>>, %arg18: memref<1x32xf32, #tpu.memory_space<vmem>>, %arg19: memref<32x16xf32, #tpu.memory_space<vmem>>, %arg20: memref<1x16xf32, #tpu.memory_space<vmem>>, %arg21: memref<1x16xf32, #tpu.memory_space<vmem>>, %arg22: memref<1x16xf32, #tpu.memory_space<vmem>>, %arg23: memref<16x256xf32, #tpu.memory_space<vmem>>, %arg24: memref<1x256xf32, #tpu.memory_space<vmem>>, %arg25: memref<64x256xf32, #tpu.memory_space<vmem>>, %arg26: memref<64x256xf32, #tpu.memory_space<vmem>>, %arg27: memref<1x256xf32, #tpu.memory_space<vmem>>, %arg28: memref<64x256xf32, #tpu.memory_space<vmem>>, %arg29: memref<64x4xf32, #tpu.memory_space<vmem>>, %arg30: memref<1x4xf32, #tpu.memory_space<vmem>>, %arg31: memref<2x4xf32, #tpu.memory_space<vmem>>, %arg32: memref<2x8x64xf32, #tpu.memory_space<vmem>>) attributes {dimension_semantics = [], scalar_prefetch = 0 : i64, scratch_operands = 1 : i64, tpu.core_type = #tpu.core_type<tc>} {
    %c0 = arith.constant 0 : index
    %c0_0 = arith.constant 0 : index
    %c0_1 = arith.constant 0 : index
    %0 = vector.load %arg0[%c0, %c0_0, %c0_1] : memref<2x8x16xf32, #tpu.memory_space<vmem>>, vector<2x8x16xf32>
    %1 = vector.shape_cast %0 : vector<2x8x16xf32> to vector<16x16xf32>
    %c0_2 = arith.constant 0 : index
    %c0_3 = arith.constant 0 : index
    %2 = vector.load %arg1[%c0_2, %c0_3] : memref<16x96xf32, #tpu.memory_space<vmem>>, vector<16x96xf32>
    %c0_4 = arith.constant 0 : index
    %c0_5 = arith.constant 0 : index
    %3 = vector.load %arg2[%c0_4, %c0_5] : memref<1x96xf32, #tpu.memory_space<vmem>>, vector<1x96xf32>
    %c0_6 = arith.constant 0 : index
    %c0_7 = arith.constant 0 : index
    %4 = vector.load %arg3[%c0_6, %c0_7] : memref<1x16xf32, #tpu.memory_space<vmem>>, vector<1x16xf32>
    %c0_8 = arith.constant 0 : index
    %c0_9 = arith.constant 0 : index
    %5 = vector.load %arg4[%c0_8, %c0_9] : memref<1x16xf32, #tpu.memory_space<vmem>>, vector<1x16xf32>
    %c0_10 = arith.constant 0 : index
    %c0_11 = arith.constant 0 : index
    %6 = vector.load %arg5[%c0_10, %c0_11] : memref<1x16xf32, #tpu.memory_space<vmem>>, vector<1x16xf32>
    %c0_12 = arith.constant 0 : index
    %c0_13 = arith.constant 0 : index
    %7 = vector.load %arg6[%c0_12, %c0_13] : memref<16x32xf32, #tpu.memory_space<vmem>>, vector<16x32xf32>
    %c0_14 = arith.constant 0 : index
    %c0_15 = arith.constant 0 : index
    %8 = vector.load %arg7[%c0_14, %c0_15] : memref<1x32xf32, #tpu.memory_space<vmem>>, vector<1x32xf32>
    %c0_16 = arith.constant 0 : index
    %c0_17 = arith.constant 0 : index
    %9 = vector.load %arg8[%c0_16, %c0_17] : memref<32x16xf32, #tpu.memory_space<vmem>>, vector<32x16xf32>
    %c0_18 = arith.constant 0 : index
    %c0_19 = arith.constant 0 : index
    %10 = vector.load %arg9[%c0_18, %c0_19] : memref<1x16xf32, #tpu.memory_space<vmem>>, vector<1x16xf32>
    %c0_20 = arith.constant 0 : index
    %c0_21 = arith.constant 0 : index
    %11 = vector.load %arg10[%c0_20, %c0_21] : memref<1x16xf32, #tpu.memory_space<vmem>>, vector<1x16xf32>
    %c0_22 = arith.constant 0 : index
    %c0_23 = arith.constant 0 : index
    %12 = vector.load %arg11[%c0_22, %c0_23] : memref<1x16xf32, #tpu.memory_space<vmem>>, vector<1x16xf32>
    %cst = arith.constant dense<0.000000e+00> : vector<16x96xf32>
    %13 = tpu.matmul %1, %2, %cst {dimension_numbers = #tpu.dot_dimension_numbers<[1], [0], [0], [1], [0, 0, 1, 1], [], []>} : vector<16x16xf32>, vector<16x96xf32>, vector<16x96xf32> -> vector<16x96xf32>
    %14 = vector.broadcast %3 : vector<1x96xf32> to vector<16x96xf32>
    %15 = arith.addf %13, %14 : vector<16x96xf32>
    %16 = vector.shape_cast %15 : vector<16x96xf32> to vector<2x8x96xf32>
    %17 = vector.extract_strided_slice %16 {offsets = [0, 0, 0], sizes = [2, 8, 4], strides = [1, 1, 1]} : vector<2x8x96xf32> to vector<2x8x4xf32>
    %18 = vector.extract_strided_slice %16 {offsets = [0, 0, 16], sizes = [2, 8, 4], strides = [1, 1, 1]} : vector<2x8x96xf32> to vector<2x8x4xf32>
    %19 = vector.extract_strided_slice %16 {offsets = [0, 0, 32], sizes = [2, 8, 16], strides = [1, 1, 1]} : vector<2x8x96xf32> to vector<2x8x16xf32>
    "tpu.trace_start"() <{level = 10 : i32, message = "bqd,bkd->bqk"}> : () -> ()
    %cst_24 = arith.constant dense<0.000000e+00> : vector<2x8x8xf32>
    %20 = tpu.matmul %17, %18, %cst_24 {dimension_numbers = #tpu.dot_dimension_numbers<[2], [2], [1], [1], [0, 0, 0, 1, 1, 1], [0], [0]>} : vector<2x8x4xf32>, vector<2x8x4xf32>, vector<2x8x8xf32> -> vector<2x8x8xf32>
    "tpu.trace_stop"() : () -> ()
    %cst_25 = arith.constant dense<0xFF800000> : vector<2x8xf32>
    %21 = vector.multi_reduction <maximumf>, %20, %cst_25 [2] : vector<2x8x8xf32> to vector<2x8xf32>
    %22 = vector.shape_cast %21 : vector<2x8xf32> to vector<2x8x1xf32>
    %23 = vector.broadcast %22 : vector<2x8x1xf32> to vector<2x8x8xf32>
    %24 = arith.subf %20, %23 : vector<2x8x8xf32>
    %25 = math.exp %24 : vector<2x8x8xf32>
    %cst_26 = arith.constant dense<0.000000e+00> : vector<2x8xf32>
    %26 = vector.multi_reduction <add>, %25, %cst_26 [2] : vector<2x8x8xf32> to vector<2x8xf32>
    %27 = vector.shape_cast %26 : vector<2x8xf32> to vector<2x8x1xf32>
    %28 = tpu.reciprocal %27 {approx = true} : vector<2x8x1xf32> -> vector<2x8x1xf32>
    %29 = vector.broadcast %28 : vector<2x8x1xf32> to vector<2x8x8xf32>
    %30 = arith.mulf %25, %29 : vector<2x8x8xf32>
    "tpu.trace_start"() <{level = 10 : i32, message = "bqk,bkd->bqd"}> : () -> ()
    %cst_27 = arith.constant dense<0.000000e+00> : vector<2x8x16xf32>
    %31 = tpu.matmul %30, %19, %cst_27 {dimension_numbers = #tpu.dot_dimension_numbers<[2], [1], [1], [2], [0, 0, 0, 1, 1, 2], [0], [0]>} : vector<2x8x8xf32>, vector<2x8x16xf32>, vector<2x8x16xf32> -> vector<2x8x16xf32>
    "tpu.trace_stop"() : () -> ()
    %32 = vector.extract_strided_slice %16 {offsets = [0, 0, 4], sizes = [2, 8, 4], strides = [1, 1, 1]} : vector<2x8x96xf32> to vector<2x8x4xf32>
    %33 = vector.extract_strided_slice %16 {offsets = [0, 0, 20], sizes = [2, 8, 4], strides = [1, 1, 1]} : vector<2x8x96xf32> to vector<2x8x4xf32>
    %34 = vector.extract_strided_slice %16 {offsets = [0, 0, 48], sizes = [2, 8, 16], strides = [1, 1, 1]} : vector<2x8x96xf32> to vector<2x8x16xf32>
    "tpu.trace_start"() <{level = 10 : i32, message = "bqd,bkd->bqk"}> : () -> ()
    %cst_28 = arith.constant dense<0.000000e+00> : vector<2x8x8xf32>
    %35 = tpu.matmul %32, %33, %cst_28 {dimension_numbers = #tpu.dot_dimension_numbers<[2], [2], [1], [1], [0, 0, 0, 1, 1, 1], [0], [0]>} : vector<2x8x4xf32>, vector<2x8x4xf32>, vector<2x8x8xf32> -> vector<2x8x8xf32>
    "tpu.trace_stop"() : () -> ()
    %cst_29 = arith.constant dense<0xFF800000> : vector<2x8xf32>
    %36 = vector.multi_reduction <maximumf>, %35, %cst_29 [2] : vector<2x8x8xf32> to vector<2x8xf32>
    %37 = vector.shape_cast %36 : vector<2x8xf32> to vector<2x8x1xf32>
    %38 = vector.broadcast %37 : vector<2x8x1xf32> to vector<2x8x8xf32>
    %39 = arith.subf %35, %38 : vector<2x8x8xf32>
    %40 = math.exp %39 : vector<2x8x8xf32>
    %cst_30 = arith.constant dense<0.000000e+00> : vector<2x8xf32>
    %41 = vector.multi_reduction <add>, %40, %cst_30 [2] : vector<2x8x8xf32> to vector<2x8xf32>
    %42 = vector.shape_cast %41 : vector<2x8xf32> to vector<2x8x1xf32>
    %43 = tpu.reciprocal %42 {approx = true} : vector<2x8x1xf32> -> vector<2x8x1xf32>
    %44 = vector.broadcast %43 : vector<2x8x1xf32> to vector<2x8x8xf32>
    %45 = arith.mulf %40, %44 : vector<2x8x8xf32>
    "tpu.trace_start"() <{level = 10 : i32, message = "bqk,bkd->bqd"}> : () -> ()
    %cst_31 = arith.constant dense<0.000000e+00> : vector<2x8x16xf32>
    %46 = tpu.matmul %45, %34, %cst_31 {dimension_numbers = #tpu.dot_dimension_numbers<[2], [1], [1], [2], [0, 0, 0, 1, 1, 2], [0], [0]>} : vector<2x8x8xf32>, vector<2x8x16xf32>, vector<2x8x16xf32> -> vector<2x8x16xf32>
    "tpu.trace_stop"() : () -> ()
    %47 = arith.addf %31, %46 : vector<2x8x16xf32>
    %48 = vector.extract_strided_slice %16 {offsets = [0, 0, 8], sizes = [2, 8, 4], strides = [1, 1, 1]} : vector<2x8x96xf32> to vector<2x8x4xf32>
    %49 = vector.extract_strided_slice %16 {offsets = [0, 0, 24], sizes = [2, 8, 4], strides = [1, 1, 1]} : vector<2x8x96xf32> to vector<2x8x4xf32>
    %50 = vector.extract_strided_slice %16 {offsets = [0, 0, 64], sizes = [2, 8, 16], strides = [1, 1, 1]} : vector<2x8x96xf32> to vector<2x8x16xf32>
    "tpu.trace_start"() <{level = 10 : i32, message = "bqd,bkd->bqk"}> : () -> ()
    %cst_32 = arith.constant dense<0.000000e+00> : vector<2x8x8xf32>
    %51 = tpu.matmul %48, %49, %cst_32 {dimension_numbers = #tpu.dot_dimension_numbers<[2], [2], [1], [1], [0, 0, 0, 1, 1, 1], [0], [0]>} : vector<2x8x4xf32>, vector<2x8x4xf32>, vector<2x8x8xf32> -> vector<2x8x8xf32>
    "tpu.trace_stop"() : () -> ()
    %cst_33 = arith.constant dense<0xFF800000> : vector<2x8xf32>
    %52 = vector.multi_reduction <maximumf>, %51, %cst_33 [2] : vector<2x8x8xf32> to vector<2x8xf32>
    %53 = vector.shape_cast %52 : vector<2x8xf32> to vector<2x8x1xf32>
    %54 = vector.broadcast %53 : vector<2x8x1xf32> to vector<2x8x8xf32>
    %55 = arith.subf %51, %54 : vector<2x8x8xf32>
    %56 = math.exp %55 : vector<2x8x8xf32>
    %cst_34 = arith.constant dense<0.000000e+00> : vector<2x8xf32>
    %57 = vector.multi_reduction <add>, %56, %cst_34 [2] : vector<2x8x8xf32> to vector<2x8xf32>
    %58 = vector.shape_cast %57 : vector<2x8xf32> to vector<2x8x1xf32>
    %59 = tpu.reciprocal %58 {approx = true} : vector<2x8x1xf32> -> vector<2x8x1xf32>
    %60 = vector.broadcast %59 : vector<2x8x1xf32> to vector<2x8x8xf32>
    %61 = arith.mulf %56, %60 : vector<2x8x8xf32>
    "tpu.trace_start"() <{level = 10 : i32, message = "bqk,bkd->bqd"}> : () -> ()
    %cst_35 = arith.constant dense<0.000000e+00> : vector<2x8x16xf32>
    %62 = tpu.matmul %61, %50, %cst_35 {dimension_numbers = #tpu.dot_dimension_numbers<[2], [1], [1], [2], [0, 0, 0, 1, 1, 2], [0], [0]>} : vector<2x8x8xf32>, vector<2x8x16xf32>, vector<2x8x16xf32> -> vector<2x8x16xf32>
    "tpu.trace_stop"() : () -> ()
    %63 = arith.addf %47, %62 : vector<2x8x16xf32>
    %64 = vector.extract_strided_slice %16 {offsets = [0, 0, 12], sizes = [2, 8, 4], strides = [1, 1, 1]} : vector<2x8x96xf32> to vector<2x8x4xf32>
    %65 = vector.extract_strided_slice %16 {offsets = [0, 0, 28], sizes = [2, 8, 4], strides = [1, 1, 1]} : vector<2x8x96xf32> to vector<2x8x4xf32>
    %66 = vector.extract_strided_slice %16 {offsets = [0, 0, 80], sizes = [2, 8, 16], strides = [1, 1, 1]} : vector<2x8x96xf32> to vector<2x8x16xf32>
    "tpu.trace_start"() <{level = 10 : i32, message = "bqd,bkd->bqk"}> : () -> ()
    %cst_36 = arith.constant dense<0.000000e+00> : vector<2x8x8xf32>
    %67 = tpu.matmul %64, %65, %cst_36 {dimension_numbers = #tpu.dot_dimension_numbers<[2], [2], [1], [1], [0, 0, 0, 1, 1, 1], [0], [0]>} : vector<2x8x4xf32>, vector<2x8x4xf32>, vector<2x8x8xf32> -> vector<2x8x8xf32>
    "tpu.trace_stop"() : () -> ()
    %cst_37 = arith.constant dense<0xFF800000> : vector<2x8xf32>
    %68 = vector.multi_reduction <maximumf>, %67, %cst_37 [2] : vector<2x8x8xf32> to vector<2x8xf32>
    %69 = vector.shape_cast %68 : vector<2x8xf32> to vector<2x8x1xf32>
    %70 = vector.broadcast %69 : vector<2x8x1xf32> to vector<2x8x8xf32>
    %71 = arith.subf %67, %70 : vector<2x8x8xf32>
    %72 = math.exp %71 : vector<2x8x8xf32>
    %cst_38 = arith.constant dense<0.000000e+00> : vector<2x8xf32>
    %73 = vector.multi_reduction <add>, %72, %cst_38 [2] : vector<2x8x8xf32> to vector<2x8xf32>
    %74 = vector.shape_cast %73 : vector<2x8xf32> to vector<2x8x1xf32>
    %75 = tpu.reciprocal %74 {approx = true} : vector<2x8x1xf32> -> vector<2x8x1xf32>
    %76 = vector.broadcast %75 : vector<2x8x1xf32> to vector<2x8x8xf32>
    %77 = arith.mulf %72, %76 : vector<2x8x8xf32>
    "tpu.trace_start"() <{level = 10 : i32, message = "bqk,bkd->bqd"}> : () -> ()
    %cst_39 = arith.constant dense<0.000000e+00> : vector<2x8x16xf32>
    %78 = tpu.matmul %77, %66, %cst_39 {dimension_numbers = #tpu.dot_dimension_numbers<[2], [1], [1], [2], [0, 0, 0, 1, 1, 2], [0], [0]>} : vector<2x8x8xf32>, vector<2x8x16xf32>, vector<2x8x16xf32> -> vector<2x8x16xf32>
    "tpu.trace_stop"() : () -> ()
    %79 = arith.addf %63, %78 : vector<2x8x16xf32>
    %80 = vector.shape_cast %79 : vector<2x8x16xf32> to vector<16x16xf32>
    %81 = vector.broadcast %4 : vector<1x16xf32> to vector<16x16xf32>
    %82 = arith.addf %80, %81 : vector<16x16xf32>
    %83 = arith.addf %1, %82 : vector<16x16xf32>
    %cst_40 = arith.constant dense<0.000000e+00> : vector<16xf32>
    %84 = vector.multi_reduction <add>, %83, %cst_40 [1] : vector<16x16xf32> to vector<16xf32>
    %85 = vector.shape_cast %84 : vector<16xf32> to vector<16x1xf32>
    %cst_41 = arith.constant 1.600000e+01 : f32
    %86 = vector.broadcast %cst_41 : f32 to vector<16x1xf32>
    %87 = arith.divf %85, %86 : vector<16x1xf32>
    %88 = vector.broadcast %87 : vector<16x1xf32> to vector<16x16xf32>
    %89 = arith.subf %83, %88 : vector<16x16xf32>
    %90 = arith.mulf %89, %89 : vector<16x16xf32>
    %cst_42 = arith.constant dense<0.000000e+00> : vector<16xf32>
    %91 = vector.multi_reduction <add>, %90, %cst_42 [1] : vector<16x16xf32> to vector<16xf32>
    %92 = vector.shape_cast %91 : vector<16xf32> to vector<16x1xf32>
    %cst_43 = arith.constant 1.600000e+01 : f32
    %93 = vector.broadcast %cst_43 : f32 to vector<16x1xf32>
    %94 = arith.divf %92, %93 : vector<16x1xf32>
    %cst_44 = arith.constant 9.99999974E-6 : f32
    %95 = vector.broadcast %cst_44 : f32 to vector<16x1xf32>
    %96 = arith.addf %94, %95 : vector<16x1xf32>
    %97 = math.rsqrt %96 : vector<16x1xf32>
    %98 = vector.broadcast %97 : vector<16x1xf32> to vector<16x16xf32>
    %99 = arith.mulf %89, %98 : vector<16x16xf32>
    %100 = vector.broadcast %5 : vector<1x16xf32> to vector<16x16xf32>
    %101 = arith.mulf %99, %100 : vector<16x16xf32>
    %102 = vector.broadcast %6 : vector<1x16xf32> to vector<16x16xf32>
    %103 = arith.addf %101, %102 : vector<16x16xf32>
    %cst_45 = arith.constant dense<0.000000e+00> : vector<16x32xf32>
    %104 = tpu.matmul %103, %7, %cst_45 {dimension_numbers = #tpu.dot_dimension_numbers<[1], [0], [0], [1], [0, 0, 1, 1], [], []>} : vector<16x16xf32>, vector<16x32xf32>, vector<16x32xf32> -> vector<16x32xf32>
    %105 = vector.broadcast %8 : vector<1x32xf32> to vector<16x32xf32>
    %106 = arith.addf %104, %105 : vector<16x32xf32>
    %cst_46 = arith.constant 0.000000e+00 : f32
    %107 = vector.broadcast %cst_46 : f32 to vector<16x32xf32>
    %108 = arith.maximumf %106, %107 : vector<16x32xf32>
    %cst_47 = arith.constant dense<0.000000e+00> : vector<16x16xf32>
    %109 = tpu.matmul %108, %9, %cst_47 {dimension_numbers = #tpu.dot_dimension_numbers<[1], [0], [0], [1], [0, 0, 1, 1], [], []>} : vector<16x32xf32>, vector<32x16xf32>, vector<16x16xf32> -> vector<16x16xf32>
    %110 = vector.broadcast %10 : vector<1x16xf32> to vector<16x16xf32>
    %111 = arith.addf %109, %110 : vector<16x16xf32>
    %112 = arith.addf %103, %111 : vector<16x16xf32>
    %cst_48 = arith.constant dense<0.000000e+00> : vector<16xf32>
    %113 = vector.multi_reduction <add>, %112, %cst_48 [1] : vector<16x16xf32> to vector<16xf32>
    %114 = vector.shape_cast %113 : vector<16xf32> to vector<16x1xf32>
    %cst_49 = arith.constant 1.600000e+01 : f32
    %115 = vector.broadcast %cst_49 : f32 to vector<16x1xf32>
    %116 = arith.divf %114, %115 : vector<16x1xf32>
    %117 = vector.broadcast %116 : vector<16x1xf32> to vector<16x16xf32>
    %118 = arith.subf %112, %117 : vector<16x16xf32>
    %119 = arith.mulf %118, %118 : vector<16x16xf32>
    %cst_50 = arith.constant dense<0.000000e+00> : vector<16xf32>
    %120 = vector.multi_reduction <add>, %119, %cst_50 [1] : vector<16x16xf32> to vector<16xf32>
    %121 = vector.shape_cast %120 : vector<16xf32> to vector<16x1xf32>
    %cst_51 = arith.constant 1.600000e+01 : f32
    %122 = vector.broadcast %cst_51 : f32 to vector<16x1xf32>
    %123 = arith.divf %121, %122 : vector<16x1xf32>
    %cst_52 = arith.constant 9.99999974E-6 : f32
    %124 = vector.broadcast %cst_52 : f32 to vector<16x1xf32>
    %125 = arith.addf %123, %124 : vector<16x1xf32>
    %126 = math.rsqrt %125 : vector<16x1xf32>
    %127 = vector.broadcast %126 : vector<16x1xf32> to vector<16x16xf32>
    %128 = arith.mulf %118, %127 : vector<16x16xf32>
    %129 = vector.broadcast %11 : vector<1x16xf32> to vector<16x16xf32>
    %130 = arith.mulf %128, %129 : vector<16x16xf32>
    %131 = vector.broadcast %12 : vector<1x16xf32> to vector<16x16xf32>
    %132 = arith.addf %130, %131 : vector<16x16xf32>
    %c0_53 = arith.constant 0 : index
    %c0_54 = arith.constant 0 : index
    %133 = vector.load %arg12[%c0_53, %c0_54] : memref<16x96xf32, #tpu.memory_space<vmem>>, vector<16x96xf32>
    %c0_55 = arith.constant 0 : index
    %c0_56 = arith.constant 0 : index
    %134 = vector.load %arg13[%c0_55, %c0_56] : memref<1x96xf32, #tpu.memory_space<vmem>>, vector<1x96xf32>
    %c0_57 = arith.constant 0 : index
    %c0_58 = arith.constant 0 : index
    %135 = vector.load %arg14[%c0_57, %c0_58] : memref<1x16xf32, #tpu.memory_space<vmem>>, vector<1x16xf32>
    %c0_59 = arith.constant 0 : index
    %c0_60 = arith.constant 0 : index
    %136 = vector.load %arg15[%c0_59, %c0_60] : memref<1x16xf32, #tpu.memory_space<vmem>>, vector<1x16xf32>
    %c0_61 = arith.constant 0 : index
    %c0_62 = arith.constant 0 : index
    %137 = vector.load %arg16[%c0_61, %c0_62] : memref<1x16xf32, #tpu.memory_space<vmem>>, vector<1x16xf32>
    %c0_63 = arith.constant 0 : index
    %c0_64 = arith.constant 0 : index
    %138 = vector.load %arg17[%c0_63, %c0_64] : memref<16x32xf32, #tpu.memory_space<vmem>>, vector<16x32xf32>
    %c0_65 = arith.constant 0 : index
    %c0_66 = arith.constant 0 : index
    %139 = vector.load %arg18[%c0_65, %c0_66] : memref<1x32xf32, #tpu.memory_space<vmem>>, vector<1x32xf32>
    %c0_67 = arith.constant 0 : index
    %c0_68 = arith.constant 0 : index
    %140 = vector.load %arg19[%c0_67, %c0_68] : memref<32x16xf32, #tpu.memory_space<vmem>>, vector<32x16xf32>
    %c0_69 = arith.constant 0 : index
    %c0_70 = arith.constant 0 : index
    %141 = vector.load %arg20[%c0_69, %c0_70] : memref<1x16xf32, #tpu.memory_space<vmem>>, vector<1x16xf32>
    %c0_71 = arith.constant 0 : index
    %c0_72 = arith.constant 0 : index
    %142 = vector.load %arg21[%c0_71, %c0_72] : memref<1x16xf32, #tpu.memory_space<vmem>>, vector<1x16xf32>
    %c0_73 = arith.constant 0 : index
    %c0_74 = arith.constant 0 : index
    %143 = vector.load %arg22[%c0_73, %c0_74] : memref<1x16xf32, #tpu.memory_space<vmem>>, vector<1x16xf32>
    %cst_75 = arith.constant dense<0.000000e+00> : vector<16x96xf32>
    %144 = tpu.matmul %132, %133, %cst_75 {dimension_numbers = #tpu.dot_dimension_numbers<[1], [0], [0], [1], [0, 0, 1, 1], [], []>} : vector<16x16xf32>, vector<16x96xf32>, vector<16x96xf32> -> vector<16x96xf32>
    %145 = vector.broadcast %134 : vector<1x96xf32> to vector<16x96xf32>
    %146 = arith.addf %144, %145 : vector<16x96xf32>
    %147 = vector.shape_cast %146 : vector<16x96xf32> to vector<2x8x96xf32>
    %148 = vector.extract_strided_slice %147 {offsets = [0, 0, 0], sizes = [2, 8, 4], strides = [1, 1, 1]} : vector<2x8x96xf32> to vector<2x8x4xf32>
    %149 = vector.extract_strided_slice %147 {offsets = [0, 0, 16], sizes = [2, 8, 4], strides = [1, 1, 1]} : vector<2x8x96xf32> to vector<2x8x4xf32>
    %150 = vector.extract_strided_slice %147 {offsets = [0, 0, 32], sizes = [2, 8, 16], strides = [1, 1, 1]} : vector<2x8x96xf32> to vector<2x8x16xf32>
    "tpu.trace_start"() <{level = 10 : i32, message = "bqd,bkd->bqk"}> : () -> ()
    %cst_76 = arith.constant dense<0.000000e+00> : vector<2x8x8xf32>
    %151 = tpu.matmul %148, %149, %cst_76 {dimension_numbers = #tpu.dot_dimension_numbers<[2], [2], [1], [1], [0, 0, 0, 1, 1, 1], [0], [0]>} : vector<2x8x4xf32>, vector<2x8x4xf32>, vector<2x8x8xf32> -> vector<2x8x8xf32>
    "tpu.trace_stop"() : () -> ()
    %cst_77 = arith.constant dense<0xFF800000> : vector<2x8xf32>
    %152 = vector.multi_reduction <maximumf>, %151, %cst_77 [2] : vector<2x8x8xf32> to vector<2x8xf32>
    %153 = vector.shape_cast %152 : vector<2x8xf32> to vector<2x8x1xf32>
    %154 = vector.broadcast %153 : vector<2x8x1xf32> to vector<2x8x8xf32>
    %155 = arith.subf %151, %154 : vector<2x8x8xf32>
    %156 = math.exp %155 : vector<2x8x8xf32>
    %cst_78 = arith.constant dense<0.000000e+00> : vector<2x8xf32>
    %157 = vector.multi_reduction <add>, %156, %cst_78 [2] : vector<2x8x8xf32> to vector<2x8xf32>
    %158 = vector.shape_cast %157 : vector<2x8xf32> to vector<2x8x1xf32>
    %159 = tpu.reciprocal %158 {approx = true} : vector<2x8x1xf32> -> vector<2x8x1xf32>
    %160 = vector.broadcast %159 : vector<2x8x1xf32> to vector<2x8x8xf32>
    %161 = arith.mulf %156, %160 : vector<2x8x8xf32>
    "tpu.trace_start"() <{level = 10 : i32, message = "bqk,bkd->bqd"}> : () -> ()
    %cst_79 = arith.constant dense<0.000000e+00> : vector<2x8x16xf32>
    %162 = tpu.matmul %161, %150, %cst_79 {dimension_numbers = #tpu.dot_dimension_numbers<[2], [1], [1], [2], [0, 0, 0, 1, 1, 2], [0], [0]>} : vector<2x8x8xf32>, vector<2x8x16xf32>, vector<2x8x16xf32> -> vector<2x8x16xf32>
    "tpu.trace_stop"() : () -> ()
    %163 = vector.extract_strided_slice %147 {offsets = [0, 0, 4], sizes = [2, 8, 4], strides = [1, 1, 1]} : vector<2x8x96xf32> to vector<2x8x4xf32>
    %164 = vector.extract_strided_slice %147 {offsets = [0, 0, 20], sizes = [2, 8, 4], strides = [1, 1, 1]} : vector<2x8x96xf32> to vector<2x8x4xf32>
    %165 = vector.extract_strided_slice %147 {offsets = [0, 0, 48], sizes = [2, 8, 16], strides = [1, 1, 1]} : vector<2x8x96xf32> to vector<2x8x16xf32>
    "tpu.trace_start"() <{level = 10 : i32, message = "bqd,bkd->bqk"}> : () -> ()
    %cst_80 = arith.constant dense<0.000000e+00> : vector<2x8x8xf32>
    %166 = tpu.matmul %163, %164, %cst_80 {dimension_numbers = #tpu.dot_dimension_numbers<[2], [2], [1], [1], [0, 0, 0, 1, 1, 1], [0], [0]>} : vector<2x8x4xf32>, vector<2x8x4xf32>, vector<2x8x8xf32> -> vector<2x8x8xf32>
    "tpu.trace_stop"() : () -> ()
    %cst_81 = arith.constant dense<0xFF800000> : vector<2x8xf32>
    %167 = vector.multi_reduction <maximumf>, %166, %cst_81 [2] : vector<2x8x8xf32> to vector<2x8xf32>
    %168 = vector.shape_cast %167 : vector<2x8xf32> to vector<2x8x1xf32>
    %169 = vector.broadcast %168 : vector<2x8x1xf32> to vector<2x8x8xf32>
    %170 = arith.subf %166, %169 : vector<2x8x8xf32>
    %171 = math.exp %170 : vector<2x8x8xf32>
    %cst_82 = arith.constant dense<0.000000e+00> : vector<2x8xf32>
    %172 = vector.multi_reduction <add>, %171, %cst_82 [2] : vector<2x8x8xf32> to vector<2x8xf32>
    %173 = vector.shape_cast %172 : vector<2x8xf32> to vector<2x8x1xf32>
    %174 = tpu.reciprocal %173 {approx = true} : vector<2x8x1xf32> -> vector<2x8x1xf32>
    %175 = vector.broadcast %174 : vector<2x8x1xf32> to vector<2x8x8xf32>
    %176 = arith.mulf %171, %175 : vector<2x8x8xf32>
    "tpu.trace_start"() <{level = 10 : i32, message = "bqk,bkd->bqd"}> : () -> ()
    %cst_83 = arith.constant dense<0.000000e+00> : vector<2x8x16xf32>
    %177 = tpu.matmul %176, %165, %cst_83 {dimension_numbers = #tpu.dot_dimension_numbers<[2], [1], [1], [2], [0, 0, 0, 1, 1, 2], [0], [0]>} : vector<2x8x8xf32>, vector<2x8x16xf32>, vector<2x8x16xf32> -> vector<2x8x16xf32>
    "tpu.trace_stop"() : () -> ()
    %178 = arith.addf %162, %177 : vector<2x8x16xf32>
    %179 = vector.extract_strided_slice %147 {offsets = [0, 0, 8], sizes = [2, 8, 4], strides = [1, 1, 1]} : vector<2x8x96xf32> to vector<2x8x4xf32>
    %180 = vector.extract_strided_slice %147 {offsets = [0, 0, 24], sizes = [2, 8, 4], strides = [1, 1, 1]} : vector<2x8x96xf32> to vector<2x8x4xf32>
    %181 = vector.extract_strided_slice %147 {offsets = [0, 0, 64], sizes = [2, 8, 16], strides = [1, 1, 1]} : vector<2x8x96xf32> to vector<2x8x16xf32>
    "tpu.trace_start"() <{level = 10 : i32, message = "bqd,bkd->bqk"}> : () -> ()
    %cst_84 = arith.constant dense<0.000000e+00> : vector<2x8x8xf32>
    %182 = tpu.matmul %179, %180, %cst_84 {dimension_numbers = #tpu.dot_dimension_numbers<[2], [2], [1], [1], [0, 0, 0, 1, 1, 1], [0], [0]>} : vector<2x8x4xf32>, vector<2x8x4xf32>, vector<2x8x8xf32> -> vector<2x8x8xf32>
    "tpu.trace_stop"() : () -> ()
    %cst_85 = arith.constant dense<0xFF800000> : vector<2x8xf32>
    %183 = vector.multi_reduction <maximumf>, %182, %cst_85 [2] : vector<2x8x8xf32> to vector<2x8xf32>
    %184 = vector.shape_cast %183 : vector<2x8xf32> to vector<2x8x1xf32>
    %185 = vector.broadcast %184 : vector<2x8x1xf32> to vector<2x8x8xf32>
    %186 = arith.subf %182, %185 : vector<2x8x8xf32>
    %187 = math.exp %186 : vector<2x8x8xf32>
    %cst_86 = arith.constant dense<0.000000e+00> : vector<2x8xf32>
    %188 = vector.multi_reduction <add>, %187, %cst_86 [2] : vector<2x8x8xf32> to vector<2x8xf32>
    %189 = vector.shape_cast %188 : vector<2x8xf32> to vector<2x8x1xf32>
    %190 = tpu.reciprocal %189 {approx = true} : vector<2x8x1xf32> -> vector<2x8x1xf32>
    %191 = vector.broadcast %190 : vector<2x8x1xf32> to vector<2x8x8xf32>
    %192 = arith.mulf %187, %191 : vector<2x8x8xf32>
    "tpu.trace_start"() <{level = 10 : i32, message = "bqk,bkd->bqd"}> : () -> ()
    %cst_87 = arith.constant dense<0.000000e+00> : vector<2x8x16xf32>
    %193 = tpu.matmul %192, %181, %cst_87 {dimension_numbers = #tpu.dot_dimension_numbers<[2], [1], [1], [2], [0, 0, 0, 1, 1, 2], [0], [0]>} : vector<2x8x8xf32>, vector<2x8x16xf32>, vector<2x8x16xf32> -> vector<2x8x16xf32>
    "tpu.trace_stop"() : () -> ()
    %194 = arith.addf %178, %193 : vector<2x8x16xf32>
    %195 = vector.extract_strided_slice %147 {offsets = [0, 0, 12], sizes = [2, 8, 4], strides = [1, 1, 1]} : vector<2x8x96xf32> to vector<2x8x4xf32>
    %196 = vector.extract_strided_slice %147 {offsets = [0, 0, 28], sizes = [2, 8, 4], strides = [1, 1, 1]} : vector<2x8x96xf32> to vector<2x8x4xf32>
    %197 = vector.extract_strided_slice %147 {offsets = [0, 0, 80], sizes = [2, 8, 16], strides = [1, 1, 1]} : vector<2x8x96xf32> to vector<2x8x16xf32>
    "tpu.trace_start"() <{level = 10 : i32, message = "bqd,bkd->bqk"}> : () -> ()
    %cst_88 = arith.constant dense<0.000000e+00> : vector<2x8x8xf32>
    %198 = tpu.matmul %195, %196, %cst_88 {dimension_numbers = #tpu.dot_dimension_numbers<[2], [2], [1], [1], [0, 0, 0, 1, 1, 1], [0], [0]>} : vector<2x8x4xf32>, vector<2x8x4xf32>, vector<2x8x8xf32> -> vector<2x8x8xf32>
    "tpu.trace_stop"() : () -> ()
    %cst_89 = arith.constant dense<0xFF800000> : vector<2x8xf32>
    %199 = vector.multi_reduction <maximumf>, %198, %cst_89 [2] : vector<2x8x8xf32> to vector<2x8xf32>
    %200 = vector.shape_cast %199 : vector<2x8xf32> to vector<2x8x1xf32>
    %201 = vector.broadcast %200 : vector<2x8x1xf32> to vector<2x8x8xf32>
    %202 = arith.subf %198, %201 : vector<2x8x8xf32>
    %203 = math.exp %202 : vector<2x8x8xf32>
    %cst_90 = arith.constant dense<0.000000e+00> : vector<2x8xf32>
    %204 = vector.multi_reduction <add>, %203, %cst_90 [2] : vector<2x8x8xf32> to vector<2x8xf32>
    %205 = vector.shape_cast %204 : vector<2x8xf32> to vector<2x8x1xf32>
    %206 = tpu.reciprocal %205 {approx = true} : vector<2x8x1xf32> -> vector<2x8x1xf32>
    %207 = vector.broadcast %206 : vector<2x8x1xf32> to vector<2x8x8xf32>
    %208 = arith.mulf %203, %207 : vector<2x8x8xf32>
    "tpu.trace_start"() <{level = 10 : i32, message = "bqk,bkd->bqd"}> : () -> ()
    %cst_91 = arith.constant dense<0.000000e+00> : vector<2x8x16xf32>
    %209 = tpu.matmul %208, %197, %cst_91 {dimension_numbers = #tpu.dot_dimension_numbers<[2], [1], [1], [2], [0, 0, 0, 1, 1, 2], [0], [0]>} : vector<2x8x8xf32>, vector<2x8x16xf32>, vector<2x8x16xf32> -> vector<2x8x16xf32>
    "tpu.trace_stop"() : () -> ()
    %210 = arith.addf %194, %209 : vector<2x8x16xf32>
    %211 = vector.shape_cast %210 : vector<2x8x16xf32> to vector<16x16xf32>
    %212 = vector.broadcast %135 : vector<1x16xf32> to vector<16x16xf32>
    %213 = arith.addf %211, %212 : vector<16x16xf32>
    %214 = arith.addf %132, %213 : vector<16x16xf32>
    %cst_92 = arith.constant dense<0.000000e+00> : vector<16xf32>
    %215 = vector.multi_reduction <add>, %214, %cst_92 [1] : vector<16x16xf32> to vector<16xf32>
    %216 = vector.shape_cast %215 : vector<16xf32> to vector<16x1xf32>
    %cst_93 = arith.constant 1.600000e+01 : f32
    %217 = vector.broadcast %cst_93 : f32 to vector<16x1xf32>
    %218 = arith.divf %216, %217 : vector<16x1xf32>
    %219 = vector.broadcast %218 : vector<16x1xf32> to vector<16x16xf32>
    %220 = arith.subf %214, %219 : vector<16x16xf32>
    %221 = arith.mulf %220, %220 : vector<16x16xf32>
    %cst_94 = arith.constant dense<0.000000e+00> : vector<16xf32>
    %222 = vector.multi_reduction <add>, %221, %cst_94 [1] : vector<16x16xf32> to vector<16xf32>
    %223 = vector.shape_cast %222 : vector<16xf32> to vector<16x1xf32>
    %cst_95 = arith.constant 1.600000e+01 : f32
    %224 = vector.broadcast %cst_95 : f32 to vector<16x1xf32>
    %225 = arith.divf %223, %224 : vector<16x1xf32>
    %cst_96 = arith.constant 9.99999974E-6 : f32
    %226 = vector.broadcast %cst_96 : f32 to vector<16x1xf32>
    %227 = arith.addf %225, %226 : vector<16x1xf32>
    %228 = math.rsqrt %227 : vector<16x1xf32>
    %229 = vector.broadcast %228 : vector<16x1xf32> to vector<16x16xf32>
    %230 = arith.mulf %220, %229 : vector<16x16xf32>
    %231 = vector.broadcast %136 : vector<1x16xf32> to vector<16x16xf32>
    %232 = arith.mulf %230, %231 : vector<16x16xf32>
    %233 = vector.broadcast %137 : vector<1x16xf32> to vector<16x16xf32>
    %234 = arith.addf %232, %233 : vector<16x16xf32>
    %cst_97 = arith.constant dense<0.000000e+00> : vector<16x32xf32>
    %235 = tpu.matmul %234, %138, %cst_97 {dimension_numbers = #tpu.dot_dimension_numbers<[1], [0], [0], [1], [0, 0, 1, 1], [], []>} : vector<16x16xf32>, vector<16x32xf32>, vector<16x32xf32> -> vector<16x32xf32>
    %236 = vector.broadcast %139 : vector<1x32xf32> to vector<16x32xf32>
    %237 = arith.addf %235, %236 : vector<16x32xf32>
    %cst_98 = arith.constant 0.000000e+00 : f32
    %238 = vector.broadcast %cst_98 : f32 to vector<16x32xf32>
    %239 = arith.maximumf %237, %238 : vector<16x32xf32>
    %cst_99 = arith.constant dense<0.000000e+00> : vector<16x16xf32>
    %240 = tpu.matmul %239, %140, %cst_99 {dimension_numbers = #tpu.dot_dimension_numbers<[1], [0], [0], [1], [0, 0, 1, 1], [], []>} : vector<16x32xf32>, vector<32x16xf32>, vector<16x16xf32> -> vector<16x16xf32>
    %241 = vector.broadcast %141 : vector<1x16xf32> to vector<16x16xf32>
    %242 = arith.addf %240, %241 : vector<16x16xf32>
    %243 = arith.addf %234, %242 : vector<16x16xf32>
    %cst_100 = arith.constant dense<0.000000e+00> : vector<16xf32>
    %244 = vector.multi_reduction <add>, %243, %cst_100 [1] : vector<16x16xf32> to vector<16xf32>
    %245 = vector.shape_cast %244 : vector<16xf32> to vector<16x1xf32>
    %cst_101 = arith.constant 1.600000e+01 : f32
    %246 = vector.broadcast %cst_101 : f32 to vector<16x1xf32>
    %247 = arith.divf %245, %246 : vector<16x1xf32>
    %248 = vector.broadcast %247 : vector<16x1xf32> to vector<16x16xf32>
    %249 = arith.subf %243, %248 : vector<16x16xf32>
    %250 = arith.mulf %249, %249 : vector<16x16xf32>
    %cst_102 = arith.constant dense<0.000000e+00> : vector<16xf32>
    %251 = vector.multi_reduction <add>, %250, %cst_102 [1] : vector<16x16xf32> to vector<16xf32>
    %252 = vector.shape_cast %251 : vector<16xf32> to vector<16x1xf32>
    %cst_103 = arith.constant 1.600000e+01 : f32
    %253 = vector.broadcast %cst_103 : f32 to vector<16x1xf32>
    %254 = arith.divf %252, %253 : vector<16x1xf32>
    %cst_104 = arith.constant 9.99999974E-6 : f32
    %255 = vector.broadcast %cst_104 : f32 to vector<16x1xf32>
    %256 = arith.addf %254, %255 : vector<16x1xf32>
    %257 = math.rsqrt %256 : vector<16x1xf32>
    %258 = vector.broadcast %257 : vector<16x1xf32> to vector<16x16xf32>
    %259 = arith.mulf %249, %258 : vector<16x16xf32>
    %260 = vector.broadcast %142 : vector<1x16xf32> to vector<16x16xf32>
    %261 = arith.mulf %259, %260 : vector<16x16xf32>
    %262 = vector.broadcast %143 : vector<1x16xf32> to vector<16x16xf32>
    %263 = arith.addf %261, %262 : vector<16x16xf32>
    %c0_105 = arith.constant 0 : index
    %c0_106 = arith.constant 0 : index
    %264 = vector.load %arg23[%c0_105, %c0_106] : memref<16x256xf32, #tpu.memory_space<vmem>>, vector<16x256xf32>
    %c0_107 = arith.constant 0 : index
    %c0_108 = arith.constant 0 : index
    %265 = vector.load %arg24[%c0_107, %c0_108] : memref<1x256xf32, #tpu.memory_space<vmem>>, vector<1x256xf32>
    %c0_109 = arith.constant 0 : index
    %c0_110 = arith.constant 0 : index
    %266 = vector.load %arg25[%c0_109, %c0_110] : memref<64x256xf32, #tpu.memory_space<vmem>>, vector<64x256xf32>
    %cst_111 = arith.constant dense<0.000000e+00> : vector<16x256xf32>
    %267 = tpu.matmul %263, %264, %cst_111 {dimension_numbers = #tpu.dot_dimension_numbers<[1], [0], [0], [1], [0, 0, 1, 1], [], []>} : vector<16x16xf32>, vector<16x256xf32>, vector<16x256xf32> -> vector<16x256xf32>
    %268 = vector.broadcast %265 : vector<1x256xf32> to vector<16x256xf32>
    %269 = arith.addf %267, %268 : vector<16x256xf32>
    %270 = vector.shape_cast %269 : vector<16x256xf32> to vector<2x8x256xf32>
    %cst_112 = arith.constant 0.000000e+00 : f32
    %271 = vector.broadcast %cst_112 : f32 to vector<2x32xf32>
    %cst_113 = arith.constant 0.000000e+00 : f32
    %272 = vector.broadcast %cst_113 : f32 to vector<2x32xf32>
    %273 = vector.extract_strided_slice %270 {offsets = [0, 0, 0], sizes = [2, 1, 128], strides = [1, 1, 1]} : vector<2x8x256xf32> to vector<2x1x128xf32>
    %274 = vector.shape_cast %273 : vector<2x1x128xf32> to vector<2x128xf32>
    %275 = vector.extract_strided_slice %270 {offsets = [0, 7, 128], sizes = [2, 1, 128], strides = [1, 1, 1]} : vector<2x8x256xf32> to vector<2x1x128xf32>
    %276 = vector.shape_cast %275 : vector<2x1x128xf32> to vector<2x128xf32>
    %277 = vector.extract_strided_slice %274 {offsets = [0, 0], sizes = [2, 32], strides = [1, 1]} : vector<2x128xf32> to vector<2x32xf32>
    %278 = arith.negf %277 : vector<2x32xf32>
    %279 = math.exp %278 : vector<2x32xf32>
    %cst_114 = arith.constant 1.000000e+00 : f32
    %280 = vector.broadcast %cst_114 : f32 to vector<2x32xf32>
    %281 = arith.addf %280, %279 : vector<2x32xf32>
    %282 = arith.divf %280, %281 : vector<2x32xf32>
    %283 = vector.extract_strided_slice %274 {offsets = [0, 32], sizes = [2, 32], strides = [1, 1]} : vector<2x128xf32> to vector<2x32xf32>
    %284 = arith.negf %283 : vector<2x32xf32>
    %285 = math.exp %284 : vector<2x32xf32>
    %cst_115 = arith.constant 1.000000e+00 : f32
    %286 = vector.broadcast %cst_115 : f32 to vector<2x32xf32>
    %287 = arith.addf %286, %285 : vector<2x32xf32>
    %288 = arith.divf %286, %287 : vector<2x32xf32>
    %289 = vector.extract_strided_slice %274 {offsets = [0, 64], sizes = [2, 32], strides = [1, 1]} : vector<2x128xf32> to vector<2x32xf32>
    %290 = math.tanh %289 : vector<2x32xf32>
    %291 = vector.extract_strided_slice %274 {offsets = [0, 96], sizes = [2, 32], strides = [1, 1]} : vector<2x128xf32> to vector<2x32xf32>
    %292 = arith.negf %291 : vector<2x32xf32>
    %293 = math.exp %292 : vector<2x32xf32>
    %cst_116 = arith.constant 1.000000e+00 : f32
    %294 = vector.broadcast %cst_116 : f32 to vector<2x32xf32>
    %295 = arith.addf %294, %293 : vector<2x32xf32>
    %296 = arith.divf %294, %295 : vector<2x32xf32>
    %297 = arith.mulf %288, %271 : vector<2x32xf32>
    %298 = arith.mulf %282, %290 : vector<2x32xf32>
    %299 = arith.addf %297, %298 : vector<2x32xf32>
    %300 = math.tanh %299 : vector<2x32xf32>
    %301 = arith.mulf %296, %300 : vector<2x32xf32>
    %302 = vector.extract_strided_slice %276 {offsets = [0, 0], sizes = [2, 32], strides = [1, 1]} : vector<2x128xf32> to vector<2x32xf32>
    %303 = arith.negf %302 : vector<2x32xf32>
    %304 = math.exp %303 : vector<2x32xf32>
    %cst_117 = arith.constant 1.000000e+00 : f32
    %305 = vector.broadcast %cst_117 : f32 to vector<2x32xf32>
    %306 = arith.addf %305, %304 : vector<2x32xf32>
    %307 = arith.divf %305, %306 : vector<2x32xf32>
    %308 = vector.extract_strided_slice %276 {offsets = [0, 32], sizes = [2, 32], strides = [1, 1]} : vector<2x128xf32> to vector<2x32xf32>
    %309 = arith.negf %308 : vector<2x32xf32>
    %310 = math.exp %309 : vector<2x32xf32>
    %cst_118 = arith.constant 1.000000e+00 : f32
    %311 = vector.broadcast %cst_118 : f32 to vector<2x32xf32>
    %312 = arith.addf %311, %310 : vector<2x32xf32>
    %313 = arith.divf %311, %312 : vector<2x32xf32>
    %314 = vector.extract_strided_slice %276 {offsets = [0, 64], sizes = [2, 32], strides = [1, 1]} : vector<2x128xf32> to vector<2x32xf32>
    %315 = math.tanh %314 : vector<2x32xf32>
    %316 = vector.extract_strided_slice %276 {offsets = [0, 96], sizes = [2, 32], strides = [1, 1]} : vector<2x128xf32> to vector<2x32xf32>
    %317 = arith.negf %316 : vector<2x32xf32>
    %318 = math.exp %317 : vector<2x32xf32>
    %cst_119 = arith.constant 1.000000e+00 : f32
    %319 = vector.broadcast %cst_119 : f32 to vector<2x32xf32>
    %320 = arith.addf %319, %318 : vector<2x32xf32>
    %321 = arith.divf %319, %320 : vector<2x32xf32>
    %322 = arith.mulf %313, %272 : vector<2x32xf32>
    %323 = arith.mulf %307, %315 : vector<2x32xf32>
    %324 = arith.addf %322, %323 : vector<2x32xf32>
    %325 = math.tanh %324 : vector<2x32xf32>
    %326 = arith.mulf %321, %325 : vector<2x32xf32>
    %327 = tpu.concatenate %301, %326 in 1 : vector<2x32xf32>, vector<2x32xf32> -> vector<2x64xf32>
    %c0_120 = arith.constant 0 : index
    %c0_121 = arith.constant 0 : index
    %c0_122 = arith.constant 0 : index
    %328 = vector.load %arg32[%c0_120, %c0_121, %c0_122] : memref<2x8x64xf32, #tpu.memory_space<vmem>>, vector<2x1x32xf32>
    %329 = vector.shape_cast %328 : vector<2x1x32xf32> to vector<2x32xf32>
    %330 = vector.shape_cast %301 : vector<2x32xf32> to vector<2x1x32xf32>
    tpu.vector_store %arg32[%c0_120, %c0_121, %c0_122], %330 {strides = array<i32>} : memref<2x8x64xf32, #tpu.memory_space<vmem>>, vector<2x1x32xf32>,
    %c0_123 = arith.constant 0 : index
    %c7 = arith.constant 7 : index
    %c32 = arith.constant 32 : index
    %331 = vector.load %arg32[%c0_123, %c7, %c32] : memref<2x8x64xf32, #tpu.memory_space<vmem>>, vector<2x1x32xf32>
    %332 = vector.shape_cast %331 : vector<2x1x32xf32> to vector<2x32xf32>
    %333 = vector.shape_cast %326 : vector<2x32xf32> to vector<2x1x32xf32>
    tpu.vector_store %arg32[%c0_123, %c7, %c32], %333 {strides = array<i32>} : memref<2x8x64xf32, #tpu.memory_space<vmem>>, vector<2x1x32xf32>,
    %cst_124 = arith.constant dense<0.000000e+00> : vector<2x256xf32>
    %334 = tpu.matmul %327, %266, %cst_124 {dimension_numbers = #tpu.dot_dimension_numbers<[1], [0], [0], [1], [0, 0, 1, 1], [], []>} : vector<2x64xf32>, vector<64x256xf32>, vector<2x256xf32> -> vector<2x256xf32>
    %335 = vector.extract_strided_slice %270 {offsets = [0, 1, 0], sizes = [2, 1, 128], strides = [1, 1, 1]} : vector<2x8x256xf32> to vector<2x1x128xf32>
    %336 = vector.shape_cast %335 : vector<2x1x128xf32> to vector<2x128xf32>
    %337 = vector.extract_strided_slice %334 {offsets = [0, 0], sizes = [2, 128], strides = [1, 1]} : vector<2x256xf32> to vector<2x128xf32>
    %338 = arith.addf %336, %337 : vector<2x128xf32>
    %339 = vector.extract_strided_slice %270 {offsets = [0, 6, 128], sizes = [2, 1, 128], strides = [1, 1, 1]} : vector<2x8x256xf32> to vector<2x1x128xf32>
    %340 = vector.shape_cast %339 : vector<2x1x128xf32> to vector<2x128xf32>
    %341 = vector.extract_strided_slice %334 {offsets = [0, 128], sizes = [2, 128], strides = [1, 1]} : vector<2x256xf32> to vector<2x128xf32>
    %342 = arith.addf %340, %341 : vector<2x128xf32>
    %343 = vector.extract_strided_slice %338 {offsets = [0, 0], sizes = [2, 32], strides = [1, 1]} : vector<2x128xf32> to vector<2x32xf32>
    %344 = arith.negf %343 : vector<2x32xf32>
    %345 = math.exp %344 : vector<2x32xf32>
    %cst_125 = arith.constant 1.000000e+00 : f32
    %346 = vector.broadcast %cst_125 : f32 to vector<2x32xf32>
    %347 = arith.addf %346, %345 : vector<2x32xf32>
    %348 = arith.divf %346, %347 : vector<2x32xf32>
    %349 = vector.extract_strided_slice %338 {offsets = [0, 32], sizes = [2, 32], strides = [1, 1]} : vector<2x128xf32> to vector<2x32xf32>
    %350 = arith.negf %349 : vector<2x32xf32>
    %351 = math.exp %350 : vector<2x32xf32>
    %cst_126 = arith.constant 1.000000e+00 : f32
    %352 = vector.broadcast %cst_126 : f32 to vector<2x32xf32>
    %353 = arith.addf %352, %351 : vector<2x32xf32>
    %354 = arith.divf %352, %353 : vector<2x32xf32>
    %355 = vector.extract_strided_slice %338 {offsets = [0, 64], sizes = [2, 32], strides = [1, 1]} : vector<2x128xf32> to vector<2x32xf32>
    %356 = math.tanh %355 : vector<2x32xf32>
    %357 = vector.extract_strided_slice %338 {offsets = [0, 96], sizes = [2, 32], strides = [1, 1]} : vector<2x128xf32> to vector<2x32xf32>
    %358 = arith.negf %357 : vector<2x32xf32>
    %359 = math.exp %358 : vector<2x32xf32>
    %cst_127 = arith.constant 1.000000e+00 : f32
    %360 = vector.broadcast %cst_127 : f32 to vector<2x32xf32>
    %361 = arith.addf %360, %359 : vector<2x32xf32>
    %362 = arith.divf %360, %361 : vector<2x32xf32>
    %363 = arith.mulf %354, %299 : vector<2x32xf32>
    %364 = arith.mulf %348, %356 : vector<2x32xf32>
    %365 = arith.addf %363, %364 : vector<2x32xf32>
    %366 = math.tanh %365 : vector<2x32xf32>
    %367 = arith.mulf %362, %366 : vector<2x32xf32>
    %368 = vector.extract_strided_slice %342 {offsets = [0, 0], sizes = [2, 32], strides = [1, 1]} : vector<2x128xf32> to vector<2x32xf32>
    %369 = arith.negf %368 : vector<2x32xf32>
    %370 = math.exp %369 : vector<2x32xf32>
    %cst_128 = arith.constant 1.000000e+00 : f32
    %371 = vector.broadcast %cst_128 : f32 to vector<2x32xf32>
    %372 = arith.addf %371, %370 : vector<2x32xf32>
    %373 = arith.divf %371, %372 : vector<2x32xf32>
    %374 = vector.extract_strided_slice %342 {offsets = [0, 32], sizes = [2, 32], strides = [1, 1]} : vector<2x128xf32> to vector<2x32xf32>
    %375 = arith.negf %374 : vector<2x32xf32>
    %376 = math.exp %375 : vector<2x32xf32>
    %cst_129 = arith.constant 1.000000e+00 : f32
    %377 = vector.broadcast %cst_129 : f32 to vector<2x32xf32>
    %378 = arith.addf %377, %376 : vector<2x32xf32>
    %379 = arith.divf %377, %378 : vector<2x32xf32>
    %380 = vector.extract_strided_slice %342 {offsets = [0, 64], sizes = [2, 32], strides = [1, 1]} : vector<2x128xf32> to vector<2x32xf32>
    %381 = math.tanh %380 : vector<2x32xf32>
    %382 = vector.extract_strided_slice %342 {offsets = [0, 96], sizes = [2, 32], strides = [1, 1]} : vector<2x128xf32> to vector<2x32xf32>
    %383 = arith.negf %382 : vector<2x32xf32>
    %384 = math.exp %383 : vector<2x32xf32>
    %cst_130 = arith.constant 1.000000e+00 : f32
    %385 = vector.broadcast %cst_130 : f32 to vector<2x32xf32>
    %386 = arith.addf %385, %384 : vector<2x32xf32>
    %387 = arith.divf %385, %386 : vector<2x32xf32>
    %388 = arith.mulf %379, %324 : vector<2x32xf32>
    %389 = arith.mulf %373, %381 : vector<2x32xf32>
    %390 = arith.addf %388, %389 : vector<2x32xf32>
    %391 = math.tanh %390 : vector<2x32xf32>
    %392 = arith.mulf %387, %391 : vector<2x32xf32>
    %393 = tpu.concatenate %367, %392 in 1 : vector<2x32xf32>, vector<2x32xf32> -> vector<2x64xf32>
    %c0_131 = arith.constant 0 : index
    %c1 = arith.constant 1 : index
    %c0_132 = arith.constant 0 : index
    %394 = vector.load %arg32[%c0_131, %c1, %c0_132] : memref<2x8x64xf32, #tpu.memory_space<vmem>>, vector<2x1x32xf32>
    %395 = vector.shape_cast %394 : vector<2x1x32xf32> to vector<2x32xf32>
    %396 = vector.shape_cast %367 : vector<2x32xf32> to vector<2x1x32xf32>
    tpu.vector_store %arg32[%c0_131, %c1, %c0_132], %396 {strides = array<i32>} : memref<2x8x64xf32, #tpu.memory_space<vmem>>, vector<2x1x32xf32>,
    %c0_133 = arith.constant 0 : index
    %c6 = arith.constant 6 : index
    %c32_134 = arith.constant 32 : index
    %397 = vector.load %arg32[%c0_133, %c6, %c32_134] : memref<2x8x64xf32, #tpu.memory_space<vmem>>, vector<2x1x32xf32>
    %398 = vector.shape_cast %397 : vector<2x1x32xf32> to vector<2x32xf32>
    %399 = vector.shape_cast %392 : vector<2x32xf32> to vector<2x1x32xf32>
    tpu.vector_store %arg32[%c0_133, %c6, %c32_134], %399 {strides = array<i32>} : memref<2x8x64xf32, #tpu.memory_space<vmem>>, vector<2x1x32xf32>,
    %cst_135 = arith.constant dense<0.000000e+00> : vector<2x256xf32>
    %400 = tpu.matmul %393, %266, %cst_135 {dimension_numbers = #tpu.dot_dimension_numbers<[1], [0], [0], [1], [0, 0, 1, 1], [], []>} : vector<2x64xf32>, vector<64x256xf32>, vector<2x256xf32> -> vector<2x256xf32>
    %401 = vector.extract_strided_slice %270 {offsets = [0, 2, 0], sizes = [2, 1, 128], strides = [1, 1, 1]} : vector<2x8x256xf32> to vector<2x1x128xf32>
    %402 = vector.shape_cast %401 : vector<2x1x128xf32> to vector<2x128xf32>
    %403 = vector.extract_strided_slice %400 {offsets = [0, 0], sizes = [2, 128], strides = [1, 1]} : vector<2x256xf32> to vector<2x128xf32>
    %404 = arith.addf %402, %403 : vector<2x128xf32>
    %405 = vector.extract_strided_slice %270 {offsets = [0, 5, 128], sizes = [2, 1, 128], strides = [1, 1, 1]} : vector<2x8x256xf32> to vector<2x1x128xf32>
    %406 = vector.shape_cast %405 : vector<2x1x128xf32> to vector<2x128xf32>
    %407 = vector.extract_strided_slice %400 {offsets = [0, 128], sizes = [2, 128], strides = [1, 1]} : vector<2x256xf32> to vector<2x128xf32>
    %408 = arith.addf %406, %407 : vector<2x128xf32>
    %409 = vector.extract_strided_slice %404 {offsets = [0, 0], sizes = [2, 32], strides = [1, 1]} : vector<2x128xf32> to vector<2x32xf32>
    %410 = arith.negf %409 : vector<2x32xf32>
    %411 = math.exp %410 : vector<2x32xf32>
    %cst_136 = arith.constant 1.000000e+00 : f32
    %412 = vector.broadcast %cst_136 : f32 to vector<2x32xf32>
    %413 = arith.addf %412, %411 : vector<2x32xf32>
    %414 = arith.divf %412, %413 : vector<2x32xf32>
    %415 = vector.extract_strided_slice %404 {offsets = [0, 32], sizes = [2, 32], strides = [1, 1]} : vector<2x128xf32> to vector<2x32xf32>
    %416 = arith.negf %415 : vector<2x32xf32>
    %417 = math.exp %416 : vector<2x32xf32>
    %cst_137 = arith.constant 1.000000e+00 : f32
    %418 = vector.broadcast %cst_137 : f32 to vector<2x32xf32>
    %419 = arith.addf %418, %417 : vector<2x32xf32>
    %420 = arith.divf %418, %419 : vector<2x32xf32>
    %421 = vector.extract_strided_slice %404 {offsets = [0, 64], sizes = [2, 32], strides = [1, 1]} : vector<2x128xf32> to vector<2x32xf32>
    %422 = math.tanh %421 : vector<2x32xf32>
    %423 = vector.extract_strided_slice %404 {offsets = [0, 96], sizes = [2, 32], strides = [1, 1]} : vector<2x128xf32> to vector<2x32xf32>
    %424 = arith.negf %423 : vector<2x32xf32>
    %425 = math.exp %424 : vector<2x32xf32>
    %cst_138 = arith.constant 1.000000e+00 : f32
    %426 = vector.broadcast %cst_138 : f32 to vector<2x32xf32>
    %427 = arith.addf %426, %425 : vector<2x32xf32>
    %428 = arith.divf %426, %427 : vector<2x32xf32>
    %429 = arith.mulf %420, %365 : vector<2x32xf32>
    %430 = arith.mulf %414, %422 : vector<2x32xf32>
    %431 = arith.addf %429, %430 : vector<2x32xf32>
    %432 = math.tanh %431 : vector<2x32xf32>
    %433 = arith.mulf %428, %432 : vector<2x32xf32>
    %434 = vector.extract_strided_slice %408 {offsets = [0, 0], sizes = [2, 32], strides = [1, 1]} : vector<2x128xf32> to vector<2x32xf32>
    %435 = arith.negf %434 : vector<2x32xf32>
    %436 = math.exp %435 : vector<2x32xf32>
    %cst_139 = arith.constant 1.000000e+00 : f32
    %437 = vector.broadcast %cst_139 : f32 to vector<2x32xf32>
    %438 = arith.addf %437, %436 : vector<2x32xf32>
    %439 = arith.divf %437, %438 : vector<2x32xf32>
    %440 = vector.extract_strided_slice %408 {offsets = [0, 32], sizes = [2, 32], strides = [1, 1]} : vector<2x128xf32> to vector<2x32xf32>
    %441 = arith.negf %440 : vector<2x32xf32>
    %442 = math.exp %441 : vector<2x32xf32>
    %cst_140 = arith.constant 1.000000e+00 : f32
    %443 = vector.broadcast %cst_140 : f32 to vector<2x32xf32>
    %444 = arith.addf %443, %442 : vector<2x32xf32>
    %445 = arith.divf %443, %444 : vector<2x32xf32>
    %446 = vector.extract_strided_slice %408 {offsets = [0, 64], sizes = [2, 32], strides = [1, 1]} : vector<2x128xf32> to vector<2x32xf32>
    %447 = math.tanh %446 : vector<2x32xf32>
    %448 = vector.extract_strided_slice %408 {offsets = [0, 96], sizes = [2, 32], strides = [1, 1]} : vector<2x128xf32> to vector<2x32xf32>
    %449 = arith.negf %448 : vector<2x32xf32>
    %450 = math.exp %449 : vector<2x32xf32>
    %cst_141 = arith.constant 1.000000e+00 : f32
    %451 = vector.broadcast %cst_141 : f32 to vector<2x32xf32>
    %452 = arith.addf %451, %450 : vector<2x32xf32>
    %453 = arith.divf %451, %452 : vector<2x32xf32>
    %454 = arith.mulf %445, %390 : vector<2x32xf32>
    %455 = arith.mulf %439, %447 : vector<2x32xf32>
    %456 = arith.addf %454, %455 : vector<2x32xf32>
    %457 = math.tanh %456 : vector<2x32xf32>
    %458 = arith.mulf %453, %457 : vector<2x32xf32>
    %459 = tpu.concatenate %433, %458 in 1 : vector<2x32xf32>, vector<2x32xf32> -> vector<2x64xf32>
    %c0_142 = arith.constant 0 : index
    %c2 = arith.constant 2 : index
    %c0_143 = arith.constant 0 : index
    %460 = vector.load %arg32[%c0_142, %c2, %c0_143] : memref<2x8x64xf32, #tpu.memory_space<vmem>>, vector<2x1x32xf32>
    %461 = vector.shape_cast %460 : vector<2x1x32xf32> to vector<2x32xf32>
    %462 = vector.shape_cast %433 : vector<2x32xf32> to vector<2x1x32xf32>
    tpu.vector_store %arg32[%c0_142, %c2, %c0_143], %462 {strides = array<i32>} : memref<2x8x64xf32, #tpu.memory_space<vmem>>, vector<2x1x32xf32>,
    %c0_144 = arith.constant 0 : index
    %c5 = arith.constant 5 : index
    %c32_145 = arith.constant 32 : index
    %463 = vector.load %arg32[%c0_144, %c5, %c32_145] : memref<2x8x64xf32, #tpu.memory_space<vmem>>, vector<2x1x32xf32>
    %464 = vector.shape_cast %463 : vector<2x1x32xf32> to vector<2x32xf32>
    %465 = vector.shape_cast %458 : vector<2x32xf32> to vector<2x1x32xf32>
    tpu.vector_store %arg32[%c0_144, %c5, %c32_145], %465 {strides = array<i32>} : memref<2x8x64xf32, #tpu.memory_space<vmem>>, vector<2x1x32xf32>,
    %cst_146 = arith.constant dense<0.000000e+00> : vector<2x256xf32>
    %466 = tpu.matmul %459, %266, %cst_146 {dimension_numbers = #tpu.dot_dimension_numbers<[1], [0], [0], [1], [0, 0, 1, 1], [], []>} : vector<2x64xf32>, vector<64x256xf32>, vector<2x256xf32> -> vector<2x256xf32>
    %467 = vector.extract_strided_slice %270 {offsets = [0, 3, 0], sizes = [2, 1, 128], strides = [1, 1, 1]} : vector<2x8x256xf32> to vector<2x1x128xf32>
    %468 = vector.shape_cast %467 : vector<2x1x128xf32> to vector<2x128xf32>
    %469 = vector.extract_strided_slice %466 {offsets = [0, 0], sizes = [2, 128], strides = [1, 1]} : vector<2x256xf32> to vector<2x128xf32>
    %470 = arith.addf %468, %469 : vector<2x128xf32>
    %471 = vector.extract_strided_slice %270 {offsets = [0, 4, 128], sizes = [2, 1, 128], strides = [1, 1, 1]} : vector<2x8x256xf32> to vector<2x1x128xf32>
    %472 = vector.shape_cast %471 : vector<2x1x128xf32> to vector<2x128xf32>
    %473 = vector.extract_strided_slice %466 {offsets = [0, 128], sizes = [2, 128], strides = [1, 1]} : vector<2x256xf32> to vector<2x128xf32>
    %474 = arith.addf %472, %473 : vector<2x128xf32>
    %475 = vector.extract_strided_slice %470 {offsets = [0, 0], sizes = [2, 32], strides = [1, 1]} : vector<2x128xf32> to vector<2x32xf32>
    %476 = arith.negf %475 : vector<2x32xf32>
    %477 = math.exp %476 : vector<2x32xf32>
    %cst_147 = arith.constant 1.000000e+00 : f32
    %478 = vector.broadcast %cst_147 : f32 to vector<2x32xf32>
    %479 = arith.addf %478, %477 : vector<2x32xf32>
    %480 = arith.divf %478, %479 : vector<2x32xf32>
    %481 = vector.extract_strided_slice %470 {offsets = [0, 32], sizes = [2, 32], strides = [1, 1]} : vector<2x128xf32> to vector<2x32xf32>
    %482 = arith.negf %481 : vector<2x32xf32>
    %483 = math.exp %482 : vector<2x32xf32>
    %cst_148 = arith.constant 1.000000e+00 : f32
    %484 = vector.broadcast %cst_148 : f32 to vector<2x32xf32>
    %485 = arith.addf %484, %483 : vector<2x32xf32>
    %486 = arith.divf %484, %485 : vector<2x32xf32>
    %487 = vector.extract_strided_slice %470 {offsets = [0, 64], sizes = [2, 32], strides = [1, 1]} : vector<2x128xf32> to vector<2x32xf32>
    %488 = math.tanh %487 : vector<2x32xf32>
    %489 = vector.extract_strided_slice %470 {offsets = [0, 96], sizes = [2, 32], strides = [1, 1]} : vector<2x128xf32> to vector<2x32xf32>
    %490 = arith.negf %489 : vector<2x32xf32>
    %491 = math.exp %490 : vector<2x32xf32>
    %cst_149 = arith.constant 1.000000e+00 : f32
    %492 = vector.broadcast %cst_149 : f32 to vector<2x32xf32>
    %493 = arith.addf %492, %491 : vector<2x32xf32>
    %494 = arith.divf %492, %493 : vector<2x32xf32>
    %495 = arith.mulf %486, %431 : vector<2x32xf32>
    %496 = arith.mulf %480, %488 : vector<2x32xf32>
    %497 = arith.addf %495, %496 : vector<2x32xf32>
    %498 = math.tanh %497 : vector<2x32xf32>
    %499 = arith.mulf %494, %498 : vector<2x32xf32>
    %500 = vector.extract_strided_slice %474 {offsets = [0, 0], sizes = [2, 32], strides = [1, 1]} : vector<2x128xf32> to vector<2x32xf32>
    %501 = arith.negf %500 : vector<2x32xf32>
    %502 = math.exp %501 : vector<2x32xf32>
    %cst_150 = arith.constant 1.000000e+00 : f32
    %503 = vector.broadcast %cst_150 : f32 to vector<2x32xf32>
    %504 = arith.addf %503, %502 : vector<2x32xf32>
    %505 = arith.divf %503, %504 : vector<2x32xf32>
    %506 = vector.extract_strided_slice %474 {offsets = [0, 32], sizes = [2, 32], strides = [1, 1]} : vector<2x128xf32> to vector<2x32xf32>
    %507 = arith.negf %506 : vector<2x32xf32>
    %508 = math.exp %507 : vector<2x32xf32>
    %cst_151 = arith.constant 1.000000e+00 : f32
    %509 = vector.broadcast %cst_151 : f32 to vector<2x32xf32>
    %510 = arith.addf %509, %508 : vector<2x32xf32>
    %511 = arith.divf %509, %510 : vector<2x32xf32>
    %512 = vector.extract_strided_slice %474 {offsets = [0, 64], sizes = [2, 32], strides = [1, 1]} : vector<2x128xf32> to vector<2x32xf32>
    %513 = math.tanh %512 : vector<2x32xf32>
    %514 = vector.extract_strided_slice %474 {offsets = [0, 96], sizes = [2, 32], strides = [1, 1]} : vector<2x128xf32> to vector<2x32xf32>
    %515 = arith.negf %514 : vector<2x32xf32>
    %516 = math.exp %515 : vector<2x32xf32>
    %cst_152 = arith.constant 1.000000e+00 : f32
    %517 = vector.broadcast %cst_152 : f32 to vector<2x32xf32>
    %518 = arith.addf %517, %516 : vector<2x32xf32>
    %519 = arith.divf %517, %518 : vector<2x32xf32>
    %520 = arith.mulf %511, %456 : vector<2x32xf32>
    %521 = arith.mulf %505, %513 : vector<2x32xf32>
    %522 = arith.addf %520, %521 : vector<2x32xf32>
    %523 = math.tanh %522 : vector<2x32xf32>
    %524 = arith.mulf %519, %523 : vector<2x32xf32>
    %525 = tpu.concatenate %499, %524 in 1 : vector<2x32xf32>, vector<2x32xf32> -> vector<2x64xf32>
    %c0_153 = arith.constant 0 : index
    %c3 = arith.constant 3 : index
    %c0_154 = arith.constant 0 : index
    %526 = vector.load %arg32[%c0_153, %c3, %c0_154] : memref<2x8x64xf32, #tpu.memory_space<vmem>>, vector<2x1x32xf32>
    %527 = vector.shape_cast %526 : vector<2x1x32xf32> to vector<2x32xf32>
    %528 = vector.shape_cast %499 : vector<2x32xf32> to vector<2x1x32xf32>
    tpu.vector_store %arg32[%c0_153, %c3, %c0_154], %528 {strides = array<i32>} : memref<2x8x64xf32, #tpu.memory_space<vmem>>, vector<2x1x32xf32>,
    %c0_155 = arith.constant 0 : index
    %c4 = arith.constant 4 : index
    %c32_156 = arith.constant 32 : index
    %529 = vector.load %arg32[%c0_155, %c4, %c32_156] : memref<2x8x64xf32, #tpu.memory_space<vmem>>, vector<2x1x32xf32>
    %530 = vector.shape_cast %529 : vector<2x1x32xf32> to vector<2x32xf32>
    %531 = vector.shape_cast %524 : vector<2x32xf32> to vector<2x1x32xf32>
    tpu.vector_store %arg32[%c0_155, %c4, %c32_156], %531 {strides = array<i32>} : memref<2x8x64xf32, #tpu.memory_space<vmem>>, vector<2x1x32xf32>,
    %cst_157 = arith.constant dense<0.000000e+00> : vector<2x256xf32>
    %532 = tpu.matmul %525, %266, %cst_157 {dimension_numbers = #tpu.dot_dimension_numbers<[1], [0], [0], [1], [0, 0, 1, 1], [], []>} : vector<2x64xf32>, vector<64x256xf32>, vector<2x256xf32> -> vector<2x256xf32>
    %533 = vector.extract_strided_slice %270 {offsets = [0, 4, 0], sizes = [2, 1, 128], strides = [1, 1, 1]} : vector<2x8x256xf32> to vector<2x1x128xf32>
    %534 = vector.shape_cast %533 : vector<2x1x128xf32> to vector<2x128xf32>
    %535 = vector.extract_strided_slice %532 {offsets = [0, 0], sizes = [2, 128], strides = [1, 1]} : vector<2x256xf32> to vector<2x128xf32>
    %536 = arith.addf %534, %535 : vector<2x128xf32>
    %537 = vector.extract_strided_slice %270 {offsets = [0, 3, 128], sizes = [2, 1, 128], strides = [1, 1, 1]} : vector<2x8x256xf32> to vector<2x1x128xf32>
    %538 = vector.shape_cast %537 : vector<2x1x128xf32> to vector<2x128xf32>
    %539 = vector.extract_strided_slice %532 {offsets = [0, 128], sizes = [2, 128], strides = [1, 1]} : vector<2x256xf32> to vector<2x128xf32>
    %540 = arith.addf %538, %539 : vector<2x128xf32>
    %541 = vector.extract_strided_slice %536 {offsets = [0, 0], sizes = [2, 32], strides = [1, 1]} : vector<2x128xf32> to vector<2x32xf32>
    %542 = arith.negf %541 : vector<2x32xf32>
    %543 = math.exp %542 : vector<2x32xf32>
    %cst_158 = arith.constant 1.000000e+00 : f32
    %544 = vector.broadcast %cst_158 : f32 to vector<2x32xf32>
    %545 = arith.addf %544, %543 : vector<2x32xf32>
    %546 = arith.divf %544, %545 : vector<2x32xf32>
    %547 = vector.extract_strided_slice %536 {offsets = [0, 32], sizes = [2, 32], strides = [1, 1]} : vector<2x128xf32> to vector<2x32xf32>
    %548 = arith.negf %547 : vector<2x32xf32>
    %549 = math.exp %548 : vector<2x32xf32>
    %cst_159 = arith.constant 1.000000e+00 : f32
    %550 = vector.broadcast %cst_159 : f32 to vector<2x32xf32>
    %551 = arith.addf %550, %549 : vector<2x32xf32>
    %552 = arith.divf %550, %551 : vector<2x32xf32>
    %553 = vector.extract_strided_slice %536 {offsets = [0, 64], sizes = [2, 32], strides = [1, 1]} : vector<2x128xf32> to vector<2x32xf32>
    %554 = math.tanh %553 : vector<2x32xf32>
    %555 = vector.extract_strided_slice %536 {offsets = [0, 96], sizes = [2, 32], strides = [1, 1]} : vector<2x128xf32> to vector<2x32xf32>
    %556 = arith.negf %555 : vector<2x32xf32>
    %557 = math.exp %556 : vector<2x32xf32>
    %cst_160 = arith.constant 1.000000e+00 : f32
    %558 = vector.broadcast %cst_160 : f32 to vector<2x32xf32>
    %559 = arith.addf %558, %557 : vector<2x32xf32>
    %560 = arith.divf %558, %559 : vector<2x32xf32>
    %561 = arith.mulf %552, %497 : vector<2x32xf32>
    %562 = arith.mulf %546, %554 : vector<2x32xf32>
    %563 = arith.addf %561, %562 : vector<2x32xf32>
    %564 = math.tanh %563 : vector<2x32xf32>
    %565 = arith.mulf %560, %564 : vector<2x32xf32>
    %566 = vector.extract_strided_slice %540 {offsets = [0, 0], sizes = [2, 32], strides = [1, 1]} : vector<2x128xf32> to vector<2x32xf32>
    %567 = arith.negf %566 : vector<2x32xf32>
    %568 = math.exp %567 : vector<2x32xf32>
    %cst_161 = arith.constant 1.000000e+00 : f32
    %569 = vector.broadcast %cst_161 : f32 to vector<2x32xf32>
    %570 = arith.addf %569, %568 : vector<2x32xf32>
    %571 = arith.divf %569, %570 : vector<2x32xf32>
    %572 = vector.extract_strided_slice %540 {offsets = [0, 32], sizes = [2, 32], strides = [1, 1]} : vector<2x128xf32> to vector<2x32xf32>
    %573 = arith.negf %572 : vector<2x32xf32>
    %574 = math.exp %573 : vector<2x32xf32>
    %cst_162 = arith.constant 1.000000e+00 : f32
    %575 = vector.broadcast %cst_162 : f32 to vector<2x32xf32>
    %576 = arith.addf %575, %574 : vector<2x32xf32>
    %577 = arith.divf %575, %576 : vector<2x32xf32>
    %578 = vector.extract_strided_slice %540 {offsets = [0, 64], sizes = [2, 32], strides = [1, 1]} : vector<2x128xf32> to vector<2x32xf32>
    %579 = math.tanh %578 : vector<2x32xf32>
    %580 = vector.extract_strided_slice %540 {offsets = [0, 96], sizes = [2, 32], strides = [1, 1]} : vector<2x128xf32> to vector<2x32xf32>
    %581 = arith.negf %580 : vector<2x32xf32>
    %582 = math.exp %581 : vector<2x32xf32>
    %cst_163 = arith.constant 1.000000e+00 : f32
    %583 = vector.broadcast %cst_163 : f32 to vector<2x32xf32>
    %584 = arith.addf %583, %582 : vector<2x32xf32>
    %585 = arith.divf %583, %584 : vector<2x32xf32>
    %586 = arith.mulf %577, %522 : vector<2x32xf32>
    %587 = arith.mulf %571, %579 : vector<2x32xf32>
    %588 = arith.addf %586, %587 : vector<2x32xf32>
    %589 = math.tanh %588 : vector<2x32xf32>
    %590 = arith.mulf %585, %589 : vector<2x32xf32>
    %591 = tpu.concatenate %565, %590 in 1 : vector<2x32xf32>, vector<2x32xf32> -> vector<2x64xf32>
    %c0_164 = arith.constant 0 : index
    %c4_165 = arith.constant 4 : index
    %c0_166 = arith.constant 0 : index
    %592 = vector.load %arg32[%c0_164, %c4_165, %c0_166] : memref<2x8x64xf32, #tpu.memory_space<vmem>>, vector<2x1x32xf32>
    %593 = vector.shape_cast %592 : vector<2x1x32xf32> to vector<2x32xf32>
    %594 = vector.shape_cast %565 : vector<2x32xf32> to vector<2x1x32xf32>
    tpu.vector_store %arg32[%c0_164, %c4_165, %c0_166], %594 {strides = array<i32>} : memref<2x8x64xf32, #tpu.memory_space<vmem>>, vector<2x1x32xf32>,
    %c0_167 = arith.constant 0 : index
    %c3_168 = arith.constant 3 : index
    %c32_169 = arith.constant 32 : index
    %595 = vector.load %arg32[%c0_167, %c3_168, %c32_169] : memref<2x8x64xf32, #tpu.memory_space<vmem>>, vector<2x1x32xf32>
    %596 = vector.shape_cast %595 : vector<2x1x32xf32> to vector<2x32xf32>
    %597 = vector.shape_cast %590 : vector<2x32xf32> to vector<2x1x32xf32>
    tpu.vector_store %arg32[%c0_167, %c3_168, %c32_169], %597 {strides = array<i32>} : memref<2x8x64xf32, #tpu.memory_space<vmem>>, vector<2x1x32xf32>,
    %cst_170 = arith.constant dense<0.000000e+00> : vector<2x256xf32>
    %598 = tpu.matmul %591, %266, %cst_170 {dimension_numbers = #tpu.dot_dimension_numbers<[1], [0], [0], [1], [0, 0, 1, 1], [], []>} : vector<2x64xf32>, vector<64x256xf32>, vector<2x256xf32> -> vector<2x256xf32>
    %599 = vector.extract_strided_slice %270 {offsets = [0, 5, 0], sizes = [2, 1, 128], strides = [1, 1, 1]} : vector<2x8x256xf32> to vector<2x1x128xf32>
    %600 = vector.shape_cast %599 : vector<2x1x128xf32> to vector<2x128xf32>
    %601 = vector.extract_strided_slice %598 {offsets = [0, 0], sizes = [2, 128], strides = [1, 1]} : vector<2x256xf32> to vector<2x128xf32>
    %602 = arith.addf %600, %601 : vector<2x128xf32>
    %603 = vector.extract_strided_slice %270 {offsets = [0, 2, 128], sizes = [2, 1, 128], strides = [1, 1, 1]} : vector<2x8x256xf32> to vector<2x1x128xf32>
    %604 = vector.shape_cast %603 : vector<2x1x128xf32> to vector<2x128xf32>
    %605 = vector.extract_strided_slice %598 {offsets = [0, 128], sizes = [2, 128], strides = [1, 1]} : vector<2x256xf32> to vector<2x128xf32>
    %606 = arith.addf %604, %605 : vector<2x128xf32>
    %607 = vector.extract_strided_slice %602 {offsets = [0, 0], sizes = [2, 32], strides = [1, 1]} : vector<2x128xf32> to vector<2x32xf32>
    %608 = arith.negf %607 : vector<2x32xf32>
    %609 = math.exp %608 : vector<2x32xf32>
    %cst_171 = arith.constant 1.000000e+00 : f32
    %610 = vector.broadcast %cst_171 : f32 to vector<2x32xf32>
    %611 = arith.addf %610, %609 : vector<2x32xf32>
    %612 = arith.divf %610, %611 : vector<2x32xf32>
    %613 = vector.extract_strided_slice %602 {offsets = [0, 32], sizes = [2, 32], strides = [1, 1]} : vector<2x128xf32> to vector<2x32xf32>
    %614 = arith.negf %613 : vector<2x32xf32>
    %615 = math.exp %614 : vector<2x32xf32>
    %cst_172 = arith.constant 1.000000e+00 : f32
    %616 = vector.broadcast %cst_172 : f32 to vector<2x32xf32>
    %617 = arith.addf %616, %615 : vector<2x32xf32>
    %618 = arith.divf %616, %617 : vector<2x32xf32>
    %619 = vector.extract_strided_slice %602 {offsets = [0, 64], sizes = [2, 32], strides = [1, 1]} : vector<2x128xf32> to vector<2x32xf32>
    %620 = math.tanh %619 : vector<2x32xf32>
    %621 = vector.extract_strided_slice %602 {offsets = [0, 96], sizes = [2, 32], strides = [1, 1]} : vector<2x128xf32> to vector<2x32xf32>
    %622 = arith.negf %621 : vector<2x32xf32>
    %623 = math.exp %622 : vector<2x32xf32>
    %cst_173 = arith.constant 1.000000e+00 : f32
    %624 = vector.broadcast %cst_173 : f32 to vector<2x32xf32>
    %625 = arith.addf %624, %623 : vector<2x32xf32>
    %626 = arith.divf %624, %625 : vector<2x32xf32>
    %627 = arith.mulf %618, %563 : vector<2x32xf32>
    %628 = arith.mulf %612, %620 : vector<2x32xf32>
    %629 = arith.addf %627, %628 : vector<2x32xf32>
    %630 = math.tanh %629 : vector<2x32xf32>
    %631 = arith.mulf %626, %630 : vector<2x32xf32>
    %632 = vector.extract_strided_slice %606 {offsets = [0, 0], sizes = [2, 32], strides = [1, 1]} : vector<2x128xf32> to vector<2x32xf32>
    %633 = arith.negf %632 : vector<2x32xf32>
    %634 = math.exp %633 : vector<2x32xf32>
    %cst_174 = arith.constant 1.000000e+00 : f32
    %635 = vector.broadcast %cst_174 : f32 to vector<2x32xf32>
    %636 = arith.addf %635, %634 : vector<2x32xf32>
    %637 = arith.divf %635, %636 : vector<2x32xf32>
    %638 = vector.extract_strided_slice %606 {offsets = [0, 32], sizes = [2, 32], strides = [1, 1]} : vector<2x128xf32> to vector<2x32xf32>
    %639 = arith.negf %638 : vector<2x32xf32>
    %640 = math.exp %639 : vector<2x32xf32>
    %cst_175 = arith.constant 1.000000e+00 : f32
    %641 = vector.broadcast %cst_175 : f32 to vector<2x32xf32>
    %642 = arith.addf %641, %640 : vector<2x32xf32>
    %643 = arith.divf %641, %642 : vector<2x32xf32>
    %644 = vector.extract_strided_slice %606 {offsets = [0, 64], sizes = [2, 32], strides = [1, 1]} : vector<2x128xf32> to vector<2x32xf32>
    %645 = math.tanh %644 : vector<2x32xf32>
    %646 = vector.extract_strided_slice %606 {offsets = [0, 96], sizes = [2, 32], strides = [1, 1]} : vector<2x128xf32> to vector<2x32xf32>
    %647 = arith.negf %646 : vector<2x32xf32>
    %648 = math.exp %647 : vector<2x32xf32>
    %cst_176 = arith.constant 1.000000e+00 : f32
    %649 = vector.broadcast %cst_176 : f32 to vector<2x32xf32>
    %650 = arith.addf %649, %648 : vector<2x32xf32>
    %651 = arith.divf %649, %650 : vector<2x32xf32>
    %652 = arith.mulf %643, %588 : vector<2x32xf32>
    %653 = arith.mulf %637, %645 : vector<2x32xf32>
    %654 = arith.addf %652, %653 : vector<2x32xf32>
    %655 = math.tanh %654 : vector<2x32xf32>
    %656 = arith.mulf %651, %655 : vector<2x32xf32>
    %657 = tpu.concatenate %631, %656 in 1 : vector<2x32xf32>, vector<2x32xf32> -> vector<2x64xf32>
    %c0_177 = arith.constant 0 : index
    %c5_178 = arith.constant 5 : index
    %c0_179 = arith.constant 0 : index
    %658 = vector.load %arg32[%c0_177, %c5_178, %c0_179] : memref<2x8x64xf32, #tpu.memory_space<vmem>>, vector<2x1x32xf32>
    %659 = vector.shape_cast %658 : vector<2x1x32xf32> to vector<2x32xf32>
    %660 = vector.shape_cast %631 : vector<2x32xf32> to vector<2x1x32xf32>
    tpu.vector_store %arg32[%c0_177, %c5_178, %c0_179], %660 {strides = array<i32>} : memref<2x8x64xf32, #tpu.memory_space<vmem>>, vector<2x1x32xf32>,
    %c0_180 = arith.constant 0 : index
    %c2_181 = arith.constant 2 : index
    %c32_182 = arith.constant 32 : index
    %661 = vector.load %arg32[%c0_180, %c2_181, %c32_182] : memref<2x8x64xf32, #tpu.memory_space<vmem>>, vector<2x1x32xf32>
    %662 = vector.shape_cast %661 : vector<2x1x32xf32> to vector<2x32xf32>
    %663 = vector.shape_cast %656 : vector<2x32xf32> to vector<2x1x32xf32>
    tpu.vector_store %arg32[%c0_180, %c2_181, %c32_182], %663 {strides = array<i32>} : memref<2x8x64xf32, #tpu.memory_space<vmem>>, vector<2x1x32xf32>,
    %cst_183 = arith.constant dense<0.000000e+00> : vector<2x256xf32>
    %664 = tpu.matmul %657, %266, %cst_183 {dimension_numbers = #tpu.dot_dimension_numbers<[1], [0], [0], [1], [0, 0, 1, 1], [], []>} : vector<2x64xf32>, vector<64x256xf32>, vector<2x256xf32> -> vector<2x256xf32>
    %665 = vector.extract_strided_slice %270 {offsets = [0, 6, 0], sizes = [2, 1, 128], strides = [1, 1, 1]} : vector<2x8x256xf32> to vector<2x1x128xf32>
    %666 = vector.shape_cast %665 : vector<2x1x128xf32> to vector<2x128xf32>
    %667 = vector.extract_strided_slice %664 {offsets = [0, 0], sizes = [2, 128], strides = [1, 1]} : vector<2x256xf32> to vector<2x128xf32>
    %668 = arith.addf %666, %667 : vector<2x128xf32>
    %669 = vector.extract_strided_slice %270 {offsets = [0, 1, 128], sizes = [2, 1, 128], strides = [1, 1, 1]} : vector<2x8x256xf32> to vector<2x1x128xf32>
    %670 = vector.shape_cast %669 : vector<2x1x128xf32> to vector<2x128xf32>
    %671 = vector.extract_strided_slice %664 {offsets = [0, 128], sizes = [2, 128], strides = [1, 1]} : vector<2x256xf32> to vector<2x128xf32>
    %672 = arith.addf %670, %671 : vector<2x128xf32>
    %673 = vector.extract_strided_slice %668 {offsets = [0, 0], sizes = [2, 32], strides = [1, 1]} : vector<2x128xf32> to vector<2x32xf32>
    %674 = arith.negf %673 : vector<2x32xf32>
    %675 = math.exp %674 : vector<2x32xf32>
    %cst_184 = arith.constant 1.000000e+00 : f32
    %676 = vector.broadcast %cst_184 : f32 to vector<2x32xf32>
    %677 = arith.addf %676, %675 : vector<2x32xf32>
    %678 = arith.divf %676, %677 : vector<2x32xf32>
    %679 = vector.extract_strided_slice %668 {offsets = [0, 32], sizes = [2, 32], strides = [1, 1]} : vector<2x128xf32> to vector<2x32xf32>
    %680 = arith.negf %679 : vector<2x32xf32>
    %681 = math.exp %680 : vector<2x32xf32>
    %cst_185 = arith.constant 1.000000e+00 : f32
    %682 = vector.broadcast %cst_185 : f32 to vector<2x32xf32>
    %683 = arith.addf %682, %681 : vector<2x32xf32>
    %684 = arith.divf %682, %683 : vector<2x32xf32>
    %685 = vector.extract_strided_slice %668 {offsets = [0, 64], sizes = [2, 32], strides = [1, 1]} : vector<2x128xf32> to vector<2x32xf32>
    %686 = math.tanh %685 : vector<2x32xf32>
    %687 = vector.extract_strided_slice %668 {offsets = [0, 96], sizes = [2, 32], strides = [1, 1]} : vector<2x128xf32> to vector<2x32xf32>
    %688 = arith.negf %687 : vector<2x32xf32>
    %689 = math.exp %688 : vector<2x32xf32>
    %cst_186 = arith.constant 1.000000e+00 : f32
    %690 = vector.broadcast %cst_186 : f32 to vector<2x32xf32>
    %691 = arith.addf %690, %689 : vector<2x32xf32>
    %692 = arith.divf %690, %691 : vector<2x32xf32>
    %693 = arith.mulf %684, %629 : vector<2x32xf32>
    %694 = arith.mulf %678, %686 : vector<2x32xf32>
    %695 = arith.addf %693, %694 : vector<2x32xf32>
    %696 = math.tanh %695 : vector<2x32xf32>
    %697 = arith.mulf %692, %696 : vector<2x32xf32>
    %698 = vector.extract_strided_slice %672 {offsets = [0, 0], sizes = [2, 32], strides = [1, 1]} : vector<2x128xf32> to vector<2x32xf32>
    %699 = arith.negf %698 : vector<2x32xf32>
    %700 = math.exp %699 : vector<2x32xf32>
    %cst_187 = arith.constant 1.000000e+00 : f32
    %701 = vector.broadcast %cst_187 : f32 to vector<2x32xf32>
    %702 = arith.addf %701, %700 : vector<2x32xf32>
    %703 = arith.divf %701, %702 : vector<2x32xf32>
    %704 = vector.extract_strided_slice %672 {offsets = [0, 32], sizes = [2, 32], strides = [1, 1]} : vector<2x128xf32> to vector<2x32xf32>
    %705 = arith.negf %704 : vector<2x32xf32>
    %706 = math.exp %705 : vector<2x32xf32>
    %cst_188 = arith.constant 1.000000e+00 : f32
    %707 = vector.broadcast %cst_188 : f32 to vector<2x32xf32>
    %708 = arith.addf %707, %706 : vector<2x32xf32>
    %709 = arith.divf %707, %708 : vector<2x32xf32>
    %710 = vector.extract_strided_slice %672 {offsets = [0, 64], sizes = [2, 32], strides = [1, 1]} : vector<2x128xf32> to vector<2x32xf32>
    %711 = math.tanh %710 : vector<2x32xf32>
    %712 = vector.extract_strided_slice %672 {offsets = [0, 96], sizes = [2, 32], strides = [1, 1]} : vector<2x128xf32> to vector<2x32xf32>
    %713 = arith.negf %712 : vector<2x32xf32>
    %714 = math.exp %713 : vector<2x32xf32>
    %cst_189 = arith.constant 1.000000e+00 : f32
    %715 = vector.broadcast %cst_189 : f32 to vector<2x32xf32>
    %716 = arith.addf %715, %714 : vector<2x32xf32>
    %717 = arith.divf %715, %716 : vector<2x32xf32>
    %718 = arith.mulf %709, %654 : vector<2x32xf32>
    %719 = arith.mulf %703, %711 : vector<2x32xf32>
    %720 = arith.addf %718, %719 : vector<2x32xf32>
    %721 = math.tanh %720 : vector<2x32xf32>
    %722 = arith.mulf %717, %721 : vector<2x32xf32>
    %723 = tpu.concatenate %697, %722 in 1 : vector<2x32xf32>, vector<2x32xf32> -> vector<2x64xf32>
    %c0_190 = arith.constant 0 : index
    %c6_191 = arith.constant 6 : index
    %c0_192 = arith.constant 0 : index
    %724 = vector.load %arg32[%c0_190, %c6_191, %c0_192] : memref<2x8x64xf32, #tpu.memory_space<vmem>>, vector<2x1x32xf32>
    %725 = vector.shape_cast %724 : vector<2x1x32xf32> to vector<2x32xf32>
    %726 = vector.shape_cast %697 : vector<2x32xf32> to vector<2x1x32xf32>
    tpu.vector_store %arg32[%c0_190, %c6_191, %c0_192], %726 {strides = array<i32>} : memref<2x8x64xf32, #tpu.memory_space<vmem>>, vector<2x1x32xf32>,
    %c0_193 = arith.constant 0 : index
    %c1_194 = arith.constant 1 : index
    %c32_195 = arith.constant 32 : index
    %727 = vector.load %arg32[%c0_193, %c1_194, %c32_195] : memref<2x8x64xf32, #tpu.memory_space<vmem>>, vector<2x1x32xf32>
    %728 = vector.shape_cast %727 : vector<2x1x32xf32> to vector<2x32xf32>
    %729 = vector.shape_cast %722 : vector<2x32xf32> to vector<2x1x32xf32>
    tpu.vector_store %arg32[%c0_193, %c1_194, %c32_195], %729 {strides = array<i32>} : memref<2x8x64xf32, #tpu.memory_space<vmem>>, vector<2x1x32xf32>,
    %cst_196 = arith.constant dense<0.000000e+00> : vector<2x256xf32>
    %730 = tpu.matmul %723, %266, %cst_196 {dimension_numbers = #tpu.dot_dimension_numbers<[1], [0], [0], [1], [0, 0, 1, 1], [], []>} : vector<2x64xf32>, vector<64x256xf32>, vector<2x256xf32> -> vector<2x256xf32>
    %731 = vector.extract_strided_slice %270 {offsets = [0, 7, 0], sizes = [2, 1, 128], strides = [1, 1, 1]} : vector<2x8x256xf32> to vector<2x1x128xf32>
    %732 = vector.shape_cast %731 : vector<2x1x128xf32> to vector<2x128xf32>
    %733 = vector.extract_strided_slice %730 {offsets = [0, 0], sizes = [2, 128], strides = [1, 1]} : vector<2x256xf32> to vector<2x128xf32>
    %734 = arith.addf %732, %733 : vector<2x128xf32>
    %735 = vector.extract_strided_slice %270 {offsets = [0, 0, 128], sizes = [2, 1, 128], strides = [1, 1, 1]} : vector<2x8x256xf32> to vector<2x1x128xf32>
    %736 = vector.shape_cast %735 : vector<2x1x128xf32> to vector<2x128xf32>
    %737 = vector.extract_strided_slice %730 {offsets = [0, 128], sizes = [2, 128], strides = [1, 1]} : vector<2x256xf32> to vector<2x128xf32>
    %738 = arith.addf %736, %737 : vector<2x128xf32>
    %739 = vector.extract_strided_slice %734 {offsets = [0, 0], sizes = [2, 32], strides = [1, 1]} : vector<2x128xf32> to vector<2x32xf32>
    %740 = arith.negf %739 : vector<2x32xf32>
    %741 = math.exp %740 : vector<2x32xf32>
    %cst_197 = arith.constant 1.000000e+00 : f32
    %742 = vector.broadcast %cst_197 : f32 to vector<2x32xf32>
    %743 = arith.addf %742, %741 : vector<2x32xf32>
    %744 = arith.divf %742, %743 : vector<2x32xf32>
    %745 = vector.extract_strided_slice %734 {offsets = [0, 32], sizes = [2, 32], strides = [1, 1]} : vector<2x128xf32> to vector<2x32xf32>
    %746 = arith.negf %745 : vector<2x32xf32>
    %747 = math.exp %746 : vector<2x32xf32>
    %cst_198 = arith.constant 1.000000e+00 : f32
    %748 = vector.broadcast %cst_198 : f32 to vector<2x32xf32>
    %749 = arith.addf %748, %747 : vector<2x32xf32>
    %750 = arith.divf %748, %749 : vector<2x32xf32>
    %751 = vector.extract_strided_slice %734 {offsets = [0, 64], sizes = [2, 32], strides = [1, 1]} : vector<2x128xf32> to vector<2x32xf32>
    %752 = math.tanh %751 : vector<2x32xf32>
    %753 = vector.extract_strided_slice %734 {offsets = [0, 96], sizes = [2, 32], strides = [1, 1]} : vector<2x128xf32> to vector<2x32xf32>
    %754 = arith.negf %753 : vector<2x32xf32>
    %755 = math.exp %754 : vector<2x32xf32>
    %cst_199 = arith.constant 1.000000e+00 : f32
    %756 = vector.broadcast %cst_199 : f32 to vector<2x32xf32>
    %757 = arith.addf %756, %755 : vector<2x32xf32>
    %758 = arith.divf %756, %757 : vector<2x32xf32>
    %759 = arith.mulf %750, %695 : vector<2x32xf32>
    %760 = arith.mulf %744, %752 : vector<2x32xf32>
    %761 = arith.addf %759, %760 : vector<2x32xf32>
    %762 = math.tanh %761 : vector<2x32xf32>
    %763 = arith.mulf %758, %762 : vector<2x32xf32>
    %764 = vector.extract_strided_slice %738 {offsets = [0, 0], sizes = [2, 32], strides = [1, 1]} : vector<2x128xf32> to vector<2x32xf32>
    %765 = arith.negf %764 : vector<2x32xf32>
    %766 = math.exp %765 : vector<2x32xf32>
    %cst_200 = arith.constant 1.000000e+00 : f32
    %767 = vector.broadcast %cst_200 : f32 to vector<2x32xf32>
    %768 = arith.addf %767, %766 : vector<2x32xf32>
    %769 = arith.divf %767, %768 : vector<2x32xf32>
    %770 = vector.extract_strided_slice %738 {offsets = [0, 32], sizes = [2, 32], strides = [1, 1]} : vector<2x128xf32> to vector<2x32xf32>
    %771 = arith.negf %770 : vector<2x32xf32>
    %772 = math.exp %771 : vector<2x32xf32>
    %cst_201 = arith.constant 1.000000e+00 : f32
    %773 = vector.broadcast %cst_201 : f32 to vector<2x32xf32>
    %774 = arith.addf %773, %772 : vector<2x32xf32>
    %775 = arith.divf %773, %774 : vector<2x32xf32>
    %776 = vector.extract_strided_slice %738 {offsets = [0, 64], sizes = [2, 32], strides = [1, 1]} : vector<2x128xf32> to vector<2x32xf32>
    %777 = math.tanh %776 : vector<2x32xf32>
    %778 = vector.extract_strided_slice %738 {offsets = [0, 96], sizes = [2, 32], strides = [1, 1]} : vector<2x128xf32> to vector<2x32xf32>
    %779 = arith.negf %778 : vector<2x32xf32>
    %780 = math.exp %779 : vector<2x32xf32>
    %cst_202 = arith.constant 1.000000e+00 : f32
    %781 = vector.broadcast %cst_202 : f32 to vector<2x32xf32>
    %782 = arith.addf %781, %780 : vector<2x32xf32>
    %783 = arith.divf %781, %782 : vector<2x32xf32>
    %784 = arith.mulf %775, %720 : vector<2x32xf32>
    %785 = arith.mulf %769, %777 : vector<2x32xf32>
    %786 = arith.addf %784, %785 : vector<2x32xf32>
    %787 = math.tanh %786 : vector<2x32xf32>
    %788 = arith.mulf %783, %787 : vector<2x32xf32>
    %c0_203 = arith.constant 0 : index
    %c7_204 = arith.constant 7 : index
    %c0_205 = arith.constant 0 : index
    %789 = vector.load %arg32[%c0_203, %c7_204, %c0_205] : memref<2x8x64xf32, #tpu.memory_space<vmem>>, vector<2x1x32xf32>
    %790 = vector.shape_cast %789 : vector<2x1x32xf32> to vector<2x32xf32>
    %791 = vector.shape_cast %763 : vector<2x32xf32> to vector<2x1x32xf32>
    tpu.vector_store %arg32[%c0_203, %c7_204, %c0_205], %791 {strides = array<i32>} : memref<2x8x64xf32, #tpu.memory_space<vmem>>, vector<2x1x32xf32>,
    %c0_206 = arith.constant 0 : index
    %c0_207 = arith.constant 0 : index
    %c32_208 = arith.constant 32 : index
    %792 = vector.load %arg32[%c0_206, %c0_207, %c32_208] : memref<2x8x64xf32, #tpu.memory_space<vmem>>, vector<2x1x32xf32>
    %793 = vector.shape_cast %792 : vector<2x1x32xf32> to vector<2x32xf32>
    %794 = vector.shape_cast %788 : vector<2x32xf32> to vector<2x1x32xf32>
    tpu.vector_store %arg32[%c0_206, %c0_207, %c32_208], %794 {strides = array<i32>} : memref<2x8x64xf32, #tpu.memory_space<vmem>>, vector<2x1x32xf32>,
    %c0_209 = arith.constant 0 : index
    %c0_210 = arith.constant 0 : index
    %c0_211 = arith.constant 0 : index
    %795 = vector.load %arg32[%c0_209, %c0_210, %c0_211] : memref<2x8x64xf32, #tpu.memory_space<vmem>>, vector<2x8x64xf32>
    %796 = vector.shape_cast %795 : vector<2x8x64xf32> to vector<16x64xf32>
    %c0_212 = arith.constant 0 : index
    %c0_213 = arith.constant 0 : index
    %797 = vector.load %arg26[%c0_212, %c0_213] : memref<64x256xf32, #tpu.memory_space<vmem>>, vector<64x256xf32>
    %c0_214 = arith.constant 0 : index
    %c0_215 = arith.constant 0 : index
    %798 = vector.load %arg27[%c0_214, %c0_215] : memref<1x256xf32, #tpu.memory_space<vmem>>, vector<1x256xf32>
    %c0_216 = arith.constant 0 : index
    %c0_217 = arith.constant 0 : index
    %799 = vector.load %arg28[%c0_216, %c0_217] : memref<64x256xf32, #tpu.memory_space<vmem>>, vector<64x256xf32>
    %cst_218 = arith.constant dense<0.000000e+00> : vector<16x256xf32>
    %800 = tpu.matmul %796, %797, %cst_218 {dimension_numbers = #tpu.dot_dimension_numbers<[1], [0], [0], [1], [0, 0, 1, 1], [], []>} : vector<16x64xf32>, vector<64x256xf32>, vector<16x256xf32> -> vector<16x256xf32>
    %801 = vector.broadcast %798 : vector<1x256xf32> to vector<16x256xf32>
    %802 = arith.addf %800, %801 : vector<16x256xf32>
    %803 = vector.shape_cast %802 : vector<16x256xf32> to vector<2x8x256xf32>
    %804 = vector.extract_strided_slice %799 {offsets = [0, 0], sizes = [32, 128], strides = [1, 1]} : vector<64x256xf32> to vector<32x128xf32>
    %cst_219 = arith.constant 0.000000e+00 : f32
    %805 = vector.broadcast %cst_219 : f32 to vector<2x32xf32>
    %806 = vector.extract_strided_slice %803 {offsets = [0, 0, 0], sizes = [2, 1, 128], strides = [1, 1, 1]} : vector<2x8x256xf32> to vector<2x1x128xf32>
    %807 = vector.shape_cast %806 : vector<2x1x128xf32> to vector<2x128xf32>
    %808 = vector.extract_strided_slice %807 {offsets = [0, 0], sizes = [2, 32], strides = [1, 1]} : vector<2x128xf32> to vector<2x32xf32>
    %809 = arith.negf %808 : vector<2x32xf32>
    %810 = math.exp %809 : vector<2x32xf32>
    %cst_220 = arith.constant 1.000000e+00 : f32
    %811 = vector.broadcast %cst_220 : f32 to vector<2x32xf32>
    %812 = arith.addf %811, %810 : vector<2x32xf32>
    %813 = arith.divf %811, %812 : vector<2x32xf32>
    %814 = vector.extract_strided_slice %807 {offsets = [0, 32], sizes = [2, 32], strides = [1, 1]} : vector<2x128xf32> to vector<2x32xf32>
    %815 = arith.negf %814 : vector<2x32xf32>
    %816 = math.exp %815 : vector<2x32xf32>
    %cst_221 = arith.constant 1.000000e+00 : f32
    %817 = vector.broadcast %cst_221 : f32 to vector<2x32xf32>
    %818 = arith.addf %817, %816 : vector<2x32xf32>
    %819 = arith.divf %817, %818 : vector<2x32xf32>
    %820 = vector.extract_strided_slice %807 {offsets = [0, 64], sizes = [2, 32], strides = [1, 1]} : vector<2x128xf32> to vector<2x32xf32>
    %821 = math.tanh %820 : vector<2x32xf32>
    %822 = vector.extract_strided_slice %807 {offsets = [0, 96], sizes = [2, 32], strides = [1, 1]} : vector<2x128xf32> to vector<2x32xf32>
    %823 = arith.negf %822 : vector<2x32xf32>
    %824 = math.exp %823 : vector<2x32xf32>
    %cst_222 = arith.constant 1.000000e+00 : f32
    %825 = vector.broadcast %cst_222 : f32 to vector<2x32xf32>
    %826 = arith.addf %825, %824 : vector<2x32xf32>
    %827 = arith.divf %825, %826 : vector<2x32xf32>
    %828 = arith.mulf %819, %805 : vector<2x32xf32>
    %829 = arith.mulf %813, %821 : vector<2x32xf32>
    %830 = arith.addf %828, %829 : vector<2x32xf32>
    %831 = math.tanh %830 : vector<2x32xf32>
    %832 = arith.mulf %827, %831 : vector<2x32xf32>
    %833 = vector.extract_strided_slice %803 {offsets = [0, 1, 0], sizes = [2, 1, 128], strides = [1, 1, 1]} : vector<2x8x256xf32> to vector<2x1x128xf32>
    %834 = vector.shape_cast %833 : vector<2x1x128xf32> to vector<2x128xf32>
    %cst_223 = arith.constant dense<0.000000e+00> : vector<2x128xf32>
    %835 = tpu.matmul %832, %804, %cst_223 {dimension_numbers = #tpu.dot_dimension_numbers<[1], [0], [0], [1], [0, 0, 1, 1], [], []>} : vector<2x32xf32>, vector<32x128xf32>, vector<2x128xf32> -> vector<2x128xf32>
    %836 = arith.addf %834, %835 : vector<2x128xf32>
    %837 = vector.extract_strided_slice %836 {offsets = [0, 0], sizes = [2, 32], strides = [1, 1]} : vector<2x128xf32> to vector<2x32xf32>
    %838 = arith.negf %837 : vector<2x32xf32>
    %839 = math.exp %838 : vector<2x32xf32>
    %cst_224 = arith.constant 1.000000e+00 : f32
    %840 = vector.broadcast %cst_224 : f32 to vector<2x32xf32>
    %841 = arith.addf %840, %839 : vector<2x32xf32>
    %842 = arith.divf %840, %841 : vector<2x32xf32>
    %843 = vector.extract_strided_slice %836 {offsets = [0, 32], sizes = [2, 32], strides = [1, 1]} : vector<2x128xf32> to vector<2x32xf32>
    %844 = arith.negf %843 : vector<2x32xf32>
    %845 = math.exp %844 : vector<2x32xf32>
    %cst_225 = arith.constant 1.000000e+00 : f32
    %846 = vector.broadcast %cst_225 : f32 to vector<2x32xf32>
    %847 = arith.addf %846, %845 : vector<2x32xf32>
    %848 = arith.divf %846, %847 : vector<2x32xf32>
    %849 = vector.extract_strided_slice %836 {offsets = [0, 64], sizes = [2, 32], strides = [1, 1]} : vector<2x128xf32> to vector<2x32xf32>
    %850 = math.tanh %849 : vector<2x32xf32>
    %851 = vector.extract_strided_slice %836 {offsets = [0, 96], sizes = [2, 32], strides = [1, 1]} : vector<2x128xf32> to vector<2x32xf32>
    %852 = arith.negf %851 : vector<2x32xf32>
    %853 = math.exp %852 : vector<2x32xf32>
    %cst_226 = arith.constant 1.000000e+00 : f32
    %854 = vector.broadcast %cst_226 : f32 to vector<2x32xf32>
    %855 = arith.addf %854, %853 : vector<2x32xf32>
    %856 = arith.divf %854, %855 : vector<2x32xf32>
    %857 = arith.mulf %848, %830 : vector<2x32xf32>
    %858 = arith.mulf %842, %850 : vector<2x32xf32>
    %859 = arith.addf %857, %858 : vector<2x32xf32>
    %860 = math.tanh %859 : vector<2x32xf32>
    %861 = arith.mulf %856, %860 : vector<2x32xf32>
    %862 = vector.extract_strided_slice %803 {offsets = [0, 2, 0], sizes = [2, 1, 128], strides = [1, 1, 1]} : vector<2x8x256xf32> to vector<2x1x128xf32>
    %863 = vector.shape_cast %862 : vector<2x1x128xf32> to vector<2x128xf32>
    %cst_227 = arith.constant dense<0.000000e+00> : vector<2x128xf32>
    %864 = tpu.matmul %861, %804, %cst_227 {dimension_numbers = #tpu.dot_dimension_numbers<[1], [0], [0], [1], [0, 0, 1, 1], [], []>} : vector<2x32xf32>, vector<32x128xf32>, vector<2x128xf32> -> vector<2x128xf32>
    %865 = arith.addf %863, %864 : vector<2x128xf32>
    %866 = vector.extract_strided_slice %865 {offsets = [0, 0], sizes = [2, 32], strides = [1, 1]} : vector<2x128xf32> to vector<2x32xf32>
    %867 = arith.negf %866 : vector<2x32xf32>
    %868 = math.exp %867 : vector<2x32xf32>
    %cst_228 = arith.constant 1.000000e+00 : f32
    %869 = vector.broadcast %cst_228 : f32 to vector<2x32xf32>
    %870 = arith.addf %869, %868 : vector<2x32xf32>
    %871 = arith.divf %869, %870 : vector<2x32xf32>
    %872 = vector.extract_strided_slice %865 {offsets = [0, 32], sizes = [2, 32], strides = [1, 1]} : vector<2x128xf32> to vector<2x32xf32>
    %873 = arith.negf %872 : vector<2x32xf32>
    %874 = math.exp %873 : vector<2x32xf32>
    %cst_229 = arith.constant 1.000000e+00 : f32
    %875 = vector.broadcast %cst_229 : f32 to vector<2x32xf32>
    %876 = arith.addf %875, %874 : vector<2x32xf32>
    %877 = arith.divf %875, %876 : vector<2x32xf32>
    %878 = vector.extract_strided_slice %865 {offsets = [0, 64], sizes = [2, 32], strides = [1, 1]} : vector<2x128xf32> to vector<2x32xf32>
    %879 = math.tanh %878 : vector<2x32xf32>
    %880 = vector.extract_strided_slice %865 {offsets = [0, 96], sizes = [2, 32], strides = [1, 1]} : vector<2x128xf32> to vector<2x32xf32>
    %881 = arith.negf %880 : vector<2x32xf32>
    %882 = math.exp %881 : vector<2x32xf32>
    %cst_230 = arith.constant 1.000000e+00 : f32
    %883 = vector.broadcast %cst_230 : f32 to vector<2x32xf32>
    %884 = arith.addf %883, %882 : vector<2x32xf32>
    %885 = arith.divf %883, %884 : vector<2x32xf32>
    %886 = arith.mulf %877, %859 : vector<2x32xf32>
    %887 = arith.mulf %871, %879 : vector<2x32xf32>
    %888 = arith.addf %886, %887 : vector<2x32xf32>
    %889 = math.tanh %888 : vector<2x32xf32>
    %890 = arith.mulf %885, %889 : vector<2x32xf32>
    %891 = vector.extract_strided_slice %803 {offsets = [0, 3, 0], sizes = [2, 1, 128], strides = [1, 1, 1]} : vector<2x8x256xf32> to vector<2x1x128xf32>
    %892 = vector.shape_cast %891 : vector<2x1x128xf32> to vector<2x128xf32>
    %cst_231 = arith.constant dense<0.000000e+00> : vector<2x128xf32>
    %893 = tpu.matmul %890, %804, %cst_231 {dimension_numbers = #tpu.dot_dimension_numbers<[1], [0], [0], [1], [0, 0, 1, 1], [], []>} : vector<2x32xf32>, vector<32x128xf32>, vector<2x128xf32> -> vector<2x128xf32>
    %894 = arith.addf %892, %893 : vector<2x128xf32>
    %895 = vector.extract_strided_slice %894 {offsets = [0, 0], sizes = [2, 32], strides = [1, 1]} : vector<2x128xf32> to vector<2x32xf32>
    %896 = arith.negf %895 : vector<2x32xf32>
    %897 = math.exp %896 : vector<2x32xf32>
    %cst_232 = arith.constant 1.000000e+00 : f32
    %898 = vector.broadcast %cst_232 : f32 to vector<2x32xf32>
    %899 = arith.addf %898, %897 : vector<2x32xf32>
    %900 = arith.divf %898, %899 : vector<2x32xf32>
    %901 = vector.extract_strided_slice %894 {offsets = [0, 32], sizes = [2, 32], strides = [1, 1]} : vector<2x128xf32> to vector<2x32xf32>
    %902 = arith.negf %901 : vector<2x32xf32>
    %903 = math.exp %902 : vector<2x32xf32>
    %cst_233 = arith.constant 1.000000e+00 : f32
    %904 = vector.broadcast %cst_233 : f32 to vector<2x32xf32>
    %905 = arith.addf %904, %903 : vector<2x32xf32>
    %906 = arith.divf %904, %905 : vector<2x32xf32>
    %907 = vector.extract_strided_slice %894 {offsets = [0, 64], sizes = [2, 32], strides = [1, 1]} : vector<2x128xf32> to vector<2x32xf32>
    %908 = math.tanh %907 : vector<2x32xf32>
    %909 = vector.extract_strided_slice %894 {offsets = [0, 96], sizes = [2, 32], strides = [1, 1]} : vector<2x128xf32> to vector<2x32xf32>
    %910 = arith.negf %909 : vector<2x32xf32>
    %911 = math.exp %910 : vector<2x32xf32>
    %cst_234 = arith.constant 1.000000e+00 : f32
    %912 = vector.broadcast %cst_234 : f32 to vector<2x32xf32>
    %913 = arith.addf %912, %911 : vector<2x32xf32>
    %914 = arith.divf %912, %913 : vector<2x32xf32>
    %915 = arith.mulf %906, %888 : vector<2x32xf32>
    %916 = arith.mulf %900, %908 : vector<2x32xf32>
    %917 = arith.addf %915, %916 : vector<2x32xf32>
    %918 = math.tanh %917 : vector<2x32xf32>
    %919 = arith.mulf %914, %918 : vector<2x32xf32>
    %920 = vector.extract_strided_slice %803 {offsets = [0, 4, 0], sizes = [2, 1, 128], strides = [1, 1, 1]} : vector<2x8x256xf32> to vector<2x1x128xf32>
    %921 = vector.shape_cast %920 : vector<2x1x128xf32> to vector<2x128xf32>
    %cst_235 = arith.constant dense<0.000000e+00> : vector<2x128xf32>
    %922 = tpu.matmul %919, %804, %cst_235 {dimension_numbers = #tpu.dot_dimension_numbers<[1], [0], [0], [1], [0, 0, 1, 1], [], []>} : vector<2x32xf32>, vector<32x128xf32>, vector<2x128xf32> -> vector<2x128xf32>
    %923 = arith.addf %921, %922 : vector<2x128xf32>
    %924 = vector.extract_strided_slice %923 {offsets = [0, 0], sizes = [2, 32], strides = [1, 1]} : vector<2x128xf32> to vector<2x32xf32>
    %925 = arith.negf %924 : vector<2x32xf32>
    %926 = math.exp %925 : vector<2x32xf32>
    %cst_236 = arith.constant 1.000000e+00 : f32
    %927 = vector.broadcast %cst_236 : f32 to vector<2x32xf32>
    %928 = arith.addf %927, %926 : vector<2x32xf32>
    %929 = arith.divf %927, %928 : vector<2x32xf32>
    %930 = vector.extract_strided_slice %923 {offsets = [0, 32], sizes = [2, 32], strides = [1, 1]} : vector<2x128xf32> to vector<2x32xf32>
    %931 = arith.negf %930 : vector<2x32xf32>
    %932 = math.exp %931 : vector<2x32xf32>
    %cst_237 = arith.constant 1.000000e+00 : f32
    %933 = vector.broadcast %cst_237 : f32 to vector<2x32xf32>
    %934 = arith.addf %933, %932 : vector<2x32xf32>
    %935 = arith.divf %933, %934 : vector<2x32xf32>
    %936 = vector.extract_strided_slice %923 {offsets = [0, 64], sizes = [2, 32], strides = [1, 1]} : vector<2x128xf32> to vector<2x32xf32>
    %937 = math.tanh %936 : vector<2x32xf32>
    %938 = vector.extract_strided_slice %923 {offsets = [0, 96], sizes = [2, 32], strides = [1, 1]} : vector<2x128xf32> to vector<2x32xf32>
    %939 = arith.negf %938 : vector<2x32xf32>
    %940 = math.exp %939 : vector<2x32xf32>
    %cst_238 = arith.constant 1.000000e+00 : f32
    %941 = vector.broadcast %cst_238 : f32 to vector<2x32xf32>
    %942 = arith.addf %941, %940 : vector<2x32xf32>
    %943 = arith.divf %941, %942 : vector<2x32xf32>
    %944 = arith.mulf %935, %917 : vector<2x32xf32>
    %945 = arith.mulf %929, %937 : vector<2x32xf32>
    %946 = arith.addf %944, %945 : vector<2x32xf32>
    %947 = math.tanh %946 : vector<2x32xf32>
    %948 = arith.mulf %943, %947 : vector<2x32xf32>
    %949 = vector.extract_strided_slice %803 {offsets = [0, 5, 0], sizes = [2, 1, 128], strides = [1, 1, 1]} : vector<2x8x256xf32> to vector<2x1x128xf32>
    %950 = vector.shape_cast %949 : vector<2x1x128xf32> to vector<2x128xf32>
    %cst_239 = arith.constant dense<0.000000e+00> : vector<2x128xf32>
    %951 = tpu.matmul %948, %804, %cst_239 {dimension_numbers = #tpu.dot_dimension_numbers<[1], [0], [0], [1], [0, 0, 1, 1], [], []>} : vector<2x32xf32>, vector<32x128xf32>, vector<2x128xf32> -> vector<2x128xf32>
    %952 = arith.addf %950, %951 : vector<2x128xf32>
    %953 = vector.extract_strided_slice %952 {offsets = [0, 0], sizes = [2, 32], strides = [1, 1]} : vector<2x128xf32> to vector<2x32xf32>
    %954 = arith.negf %953 : vector<2x32xf32>
    %955 = math.exp %954 : vector<2x32xf32>
    %cst_240 = arith.constant 1.000000e+00 : f32
    %956 = vector.broadcast %cst_240 : f32 to vector<2x32xf32>
    %957 = arith.addf %956, %955 : vector<2x32xf32>
    %958 = arith.divf %956, %957 : vector<2x32xf32>
    %959 = vector.extract_strided_slice %952 {offsets = [0, 32], sizes = [2, 32], strides = [1, 1]} : vector<2x128xf32> to vector<2x32xf32>
    %960 = arith.negf %959 : vector<2x32xf32>
    %961 = math.exp %960 : vector<2x32xf32>
    %cst_241 = arith.constant 1.000000e+00 : f32
    %962 = vector.broadcast %cst_241 : f32 to vector<2x32xf32>
    %963 = arith.addf %962, %961 : vector<2x32xf32>
    %964 = arith.divf %962, %963 : vector<2x32xf32>
    %965 = vector.extract_strided_slice %952 {offsets = [0, 64], sizes = [2, 32], strides = [1, 1]} : vector<2x128xf32> to vector<2x32xf32>
    %966 = math.tanh %965 : vector<2x32xf32>
    %967 = vector.extract_strided_slice %952 {offsets = [0, 96], sizes = [2, 32], strides = [1, 1]} : vector<2x128xf32> to vector<2x32xf32>
    %968 = arith.negf %967 : vector<2x32xf32>
    %969 = math.exp %968 : vector<2x32xf32>
    %cst_242 = arith.constant 1.000000e+00 : f32
    %970 = vector.broadcast %cst_242 : f32 to vector<2x32xf32>
    %971 = arith.addf %970, %969 : vector<2x32xf32>
    %972 = arith.divf %970, %971 : vector<2x32xf32>
    %973 = arith.mulf %964, %946 : vector<2x32xf32>
    %974 = arith.mulf %958, %966 : vector<2x32xf32>
    %975 = arith.addf %973, %974 : vector<2x32xf32>
    %976 = math.tanh %975 : vector<2x32xf32>
    %977 = arith.mulf %972, %976 : vector<2x32xf32>
    %978 = vector.extract_strided_slice %803 {offsets = [0, 6, 0], sizes = [2, 1, 128], strides = [1, 1, 1]} : vector<2x8x256xf32> to vector<2x1x128xf32>
    %979 = vector.shape_cast %978 : vector<2x1x128xf32> to vector<2x128xf32>
    %cst_243 = arith.constant dense<0.000000e+00> : vector<2x128xf32>
    %980 = tpu.matmul %977, %804, %cst_243 {dimension_numbers = #tpu.dot_dimension_numbers<[1], [0], [0], [1], [0, 0, 1, 1], [], []>} : vector<2x32xf32>, vector<32x128xf32>, vector<2x128xf32> -> vector<2x128xf32>
    %981 = arith.addf %979, %980 : vector<2x128xf32>
    %982 = vector.extract_strided_slice %981 {offsets = [0, 0], sizes = [2, 32], strides = [1, 1]} : vector<2x128xf32> to vector<2x32xf32>
    %983 = arith.negf %982 : vector<2x32xf32>
    %984 = math.exp %983 : vector<2x32xf32>
    %cst_244 = arith.constant 1.000000e+00 : f32
    %985 = vector.broadcast %cst_244 : f32 to vector<2x32xf32>
    %986 = arith.addf %985, %984 : vector<2x32xf32>
    %987 = arith.divf %985, %986 : vector<2x32xf32>
    %988 = vector.extract_strided_slice %981 {offsets = [0, 32], sizes = [2, 32], strides = [1, 1]} : vector<2x128xf32> to vector<2x32xf32>
    %989 = arith.negf %988 : vector<2x32xf32>
    %990 = math.exp %989 : vector<2x32xf32>
    %cst_245 = arith.constant 1.000000e+00 : f32
    %991 = vector.broadcast %cst_245 : f32 to vector<2x32xf32>
    %992 = arith.addf %991, %990 : vector<2x32xf32>
    %993 = arith.divf %991, %992 : vector<2x32xf32>
    %994 = vector.extract_strided_slice %981 {offsets = [0, 64], sizes = [2, 32], strides = [1, 1]} : vector<2x128xf32> to vector<2x32xf32>
    %995 = math.tanh %994 : vector<2x32xf32>
    %996 = vector.extract_strided_slice %981 {offsets = [0, 96], sizes = [2, 32], strides = [1, 1]} : vector<2x128xf32> to vector<2x32xf32>
    %997 = arith.negf %996 : vector<2x32xf32>
    %998 = math.exp %997 : vector<2x32xf32>
    %cst_246 = arith.constant 1.000000e+00 : f32
    %999 = vector.broadcast %cst_246 : f32 to vector<2x32xf32>
    %1000 = arith.addf %999, %998 : vector<2x32xf32>
    %1001 = arith.divf %999, %1000 : vector<2x32xf32>
    %1002 = arith.mulf %993, %975 : vector<2x32xf32>
    %1003 = arith.mulf %987, %995 : vector<2x32xf32>
    %1004 = arith.addf %1002, %1003 : vector<2x32xf32>
    %1005 = math.tanh %1004 : vector<2x32xf32>
    %1006 = arith.mulf %1001, %1005 : vector<2x32xf32>
    %1007 = vector.extract_strided_slice %803 {offsets = [0, 7, 0], sizes = [2, 1, 128], strides = [1, 1, 1]} : vector<2x8x256xf32> to vector<2x1x128xf32>
    %1008 = vector.shape_cast %1007 : vector<2x1x128xf32> to vector<2x128xf32>
    %cst_247 = arith.constant dense<0.000000e+00> : vector<2x128xf32>
    %1009 = tpu.matmul %1006, %804, %cst_247 {dimension_numbers = #tpu.dot_dimension_numbers<[1], [0], [0], [1], [0, 0, 1, 1], [], []>} : vector<2x32xf32>, vector<32x128xf32>, vector<2x128xf32> -> vector<2x128xf32>
    %1010 = arith.addf %1008, %1009 : vector<2x128xf32>
    %1011 = vector.extract_strided_slice %1010 {offsets = [0, 0], sizes = [2, 32], strides = [1, 1]} : vector<2x128xf32> to vector<2x32xf32>
    %1012 = arith.negf %1011 : vector<2x32xf32>
    %1013 = math.exp %1012 : vector<2x32xf32>
    %cst_248 = arith.constant 1.000000e+00 : f32
    %1014 = vector.broadcast %cst_248 : f32 to vector<2x32xf32>
    %1015 = arith.addf %1014, %1013 : vector<2x32xf32>
    %1016 = arith.divf %1014, %1015 : vector<2x32xf32>
    %1017 = vector.extract_strided_slice %1010 {offsets = [0, 32], sizes = [2, 32], strides = [1, 1]} : vector<2x128xf32> to vector<2x32xf32>
    %1018 = arith.negf %1017 : vector<2x32xf32>
    %1019 = math.exp %1018 : vector<2x32xf32>
    %cst_249 = arith.constant 1.000000e+00 : f32
    %1020 = vector.broadcast %cst_249 : f32 to vector<2x32xf32>
    %1021 = arith.addf %1020, %1019 : vector<2x32xf32>
    %1022 = arith.divf %1020, %1021 : vector<2x32xf32>
    %1023 = vector.extract_strided_slice %1010 {offsets = [0, 64], sizes = [2, 32], strides = [1, 1]} : vector<2x128xf32> to vector<2x32xf32>
    %1024 = math.tanh %1023 : vector<2x32xf32>
    %1025 = vector.extract_strided_slice %1010 {offsets = [0, 96], sizes = [2, 32], strides = [1, 1]} : vector<2x128xf32> to vector<2x32xf32>
    %1026 = arith.negf %1025 : vector<2x32xf32>
    %1027 = math.exp %1026 : vector<2x32xf32>
    %cst_250 = arith.constant 1.000000e+00 : f32
    %1028 = vector.broadcast %cst_250 : f32 to vector<2x32xf32>
    %1029 = arith.addf %1028, %1027 : vector<2x32xf32>
    %1030 = arith.divf %1028, %1029 : vector<2x32xf32>
    %1031 = arith.mulf %1022, %1004 : vector<2x32xf32>
    %1032 = arith.mulf %1016, %1024 : vector<2x32xf32>
    %1033 = arith.addf %1031, %1032 : vector<2x32xf32>
    %1034 = math.tanh %1033 : vector<2x32xf32>
    %1035 = arith.mulf %1030, %1034 : vector<2x32xf32>
    %1036 = vector.extract_strided_slice %803 {offsets = [0, 7, 128], sizes = [2, 1, 128], strides = [1, 1, 1]} : vector<2x8x256xf32> to vector<2x1x128xf32>
    %1037 = vector.shape_cast %1036 : vector<2x1x128xf32> to vector<2x128xf32>
    %1038 = vector.extract_strided_slice %1037 {offsets = [0, 0], sizes = [2, 32], strides = [1, 1]} : vector<2x128xf32> to vector<2x32xf32>
    %1039 = arith.negf %1038 : vector<2x32xf32>
    %1040 = math.exp %1039 : vector<2x32xf32>
    %cst_251 = arith.constant 1.000000e+00 : f32
    %1041 = vector.broadcast %cst_251 : f32 to vector<2x32xf32>
    %1042 = arith.addf %1041, %1040 : vector<2x32xf32>
    %1043 = arith.divf %1041, %1042 : vector<2x32xf32>
    %1044 = vector.extract_strided_slice %1037 {offsets = [0, 32], sizes = [2, 32], strides = [1, 1]} : vector<2x128xf32> to vector<2x32xf32>
    %1045 = arith.negf %1044 : vector<2x32xf32>
    %1046 = math.exp %1045 : vector<2x32xf32>
    %cst_252 = arith.constant 1.000000e+00 : f32
    %1047 = vector.broadcast %cst_252 : f32 to vector<2x32xf32>
    %1048 = arith.addf %1047, %1046 : vector<2x32xf32>
    %1049 = arith.divf %1047, %1048 : vector<2x32xf32>
    %1050 = vector.extract_strided_slice %1037 {offsets = [0, 64], sizes = [2, 32], strides = [1, 1]} : vector<2x128xf32> to vector<2x32xf32>
    %1051 = math.tanh %1050 : vector<2x32xf32>
    %1052 = vector.extract_strided_slice %1037 {offsets = [0, 96], sizes = [2, 32], strides = [1, 1]} : vector<2x128xf32> to vector<2x32xf32>
    %1053 = arith.negf %1052 : vector<2x32xf32>
    %1054 = math.exp %1053 : vector<2x32xf32>
    %cst_253 = arith.constant 1.000000e+00 : f32
    %1055 = vector.broadcast %cst_253 : f32 to vector<2x32xf32>
    %1056 = arith.addf %1055, %1054 : vector<2x32xf32>
    %1057 = arith.divf %1055, %1056 : vector<2x32xf32>
    %1058 = arith.mulf %1049, %805 : vector<2x32xf32>
    %1059 = arith.mulf %1043, %1051 : vector<2x32xf32>
    %1060 = arith.addf %1058, %1059 : vector<2x32xf32>
    %1061 = math.tanh %1060 : vector<2x32xf32>
    %1062 = arith.mulf %1057, %1061 : vector<2x32xf32>
    %1063 = tpu.concatenate %1035, %1062 in 1 : vector<2x32xf32>, vector<2x32xf32> -> vector<2x64xf32>
    %c0_254 = arith.constant 0 : index
    %c0_255 = arith.constant 0 : index
    %1064 = vector.load %arg29[%c0_254, %c0_255] : memref<64x4xf32, #tpu.memory_space<vmem>>, vector<64x4xf32>
    %c0_256 = arith.constant 0 : index
    %c0_257 = arith.constant 0 : index
    %1065 = vector.load %arg30[%c0_256, %c0_257] : memref<1x4xf32, #tpu.memory_space<vmem>>, vector<1x4xf32>
    %cst_258 = arith.constant dense<0.000000e+00> : vector<2x4xf32>
    %1066 = tpu.matmul %1063, %1064, %cst_258 {dimension_numbers = #tpu.dot_dimension_numbers<[1], [0], [0], [1], [0, 0, 1, 1], [], []>} : vector<2x64xf32>, vector<64x4xf32>, vector<2x4xf32> -> vector<2x4xf32>
    %1067 = vector.broadcast %1065 : vector<1x4xf32> to vector<2x4xf32>
    %1068 = arith.addf %1066, %1067 : vector<2x4xf32>
    %c0_259 = arith.constant 0 : index
    %c0_260 = arith.constant 0 : index
    %1069 = vector.load %arg31[%c0_259, %c0_260] : memref<2x4xf32, #tpu.memory_space<vmem>>, vector<2x4xf32>
    tpu.vector_store %arg31[%c0_259, %c0_260], %1068 {strides = array<i32>} : memref<2x4xf32, #tpu.memory_space<vmem>>, vector<2x4xf32>,
    return
  }
}

</mosaic_0001>

<llo_original>
// kernel: transformer_bilstm_forward.1
$region0: #{transformer_bilstm_forward.1}
  #allocation0 [shape = 'u32[]', space=smem, size = 0x4, offset = 0x4, fixed_abs, tag = 'smem constant byte address 0x4 - core index']
  #allocation1 [shape = 'u32[72,128]{1,0:T(1,128)}', space=vmem, size = 0x9000, scoped, tag = 'internal scratch']
  #allocation2 [shape = 'f32[2,8,64]{2,1,0:T(8,128)}', space=vmem, size = 0x2000, scoped, tag = 'scratch operand']
  %s0 = inlined_call_operand.smem [shape: u32[32], index: -1, kind: input, shape index: {}]
  %s1 = sld [smem:[%s0]]
  %s2 = scalar_lea.smem %s0, 1
  %s3 = sld [smem:[%s2]]
  %s4 = scalar_lea.smem %s0, 2
  %s5 = sld [smem:[%s4]]
  %s6 = scalar_lea.smem %s0, 3
  %s7 = sld [smem:[%s6]]
  %s8 = scalar_lea.smem %s0, 4
  %s9 = sld [smem:[%s8]]
  %s10 = scalar_lea.smem %s0, 5
  %s11 = sld [smem:[%s10]]
  %s12 = scalar_lea.smem %s0, 6
  %s13 = sld [smem:[%s12]]
  %s14 = scalar_lea.smem %s0, 7
  %s15 = sld [smem:[%s14]]
  %s16 = scalar_lea.smem %s0, 8
  %s17 = sld [smem:[%s16]]
  %s18 = scalar_lea.smem %s0, 9
  %s19 = sld [smem:[%s18]]
  %s20 = scalar_lea.smem %s0, 10
  %s21 = sld [smem:[%s20]]
  %s22 = scalar_lea.smem %s0, 11
  %s23 = sld [smem:[%s22]]
  %s24 = scalar_lea.smem %s0, 12
  %s25 = sld [smem:[%s24]]
  %s26 = scalar_lea.smem %s0, 13
  %s27 = sld [smem:[%s26]]
  %s28 = scalar_lea.smem %s0, 14
  %s29 = sld [smem:[%s28]]
  %s30 = scalar_lea.smem %s0, 15
  %s31 = sld [smem:[%s30]]
  %s32 = scalar_lea.smem %s0, 16
  %s33 = sld [smem:[%s32]]
  %s34 = scalar_lea.smem %s0, 17
  %s35 = sld [smem:[%s34]]
  %s36 = scalar_lea.smem %s0, 18
  %s37 = sld [smem:[%s36]]
  %s38 = scalar_lea.smem %s0, 19
  %s39 = sld [smem:[%s38]]
  %s40 = scalar_lea.smem %s0, 20
  %s41 = sld [smem:[%s40]]
  %s42 = scalar_lea.smem %s0, 21
  %s43 = sld [smem:[%s42]]
  %s44 = scalar_lea.smem %s0, 22
  %s45 = sld [smem:[%s44]]
  %s46 = scalar_lea.smem %s0, 23
  %s47 = sld [smem:[%s46]]
  %s48 = scalar_lea.smem %s0, 24
  %s49 = sld [smem:[%s48]]
  %s50 = scalar_lea.smem %s0, 25
  %s51 = sld [smem:[%s50]]
  %s52 = scalar_lea.smem %s0, 26
  %s53 = sld [smem:[%s52]]
  %s54 = scalar_lea.smem %s0, 27
  %s55 = sld [smem:[%s54]]
  %s56 = scalar_lea.smem %s0, 28
  %s57 = sld [smem:[%s56]]
  %s58 = scalar_lea.smem %s0, 29
  %s59 = sld [smem:[%s58]]
  %s60 = scalar_lea.smem %s0, 30
  %s61 = sld [smem:[%s60]]
  %s62 = scalar_lea.smem %s0, 31
  %s63 = sld [smem:[%s62]]
  %s64 = sld [smem:[#allocation0]]
  $region134: #{transformer_bilstm_forward.1} parent=0
    _
  %s66 = ssub.s32 1, %s64
  %s67 = scalar_select 0, %s66, %s64
  $region1: #{transformer_bilstm_forward.1} parent=0
    #allocation3 [shape = 'u8[1024]{0}', space=vmem, size = 0x400, scoped, tag = 'output window, operand 0, single buffered']
    #allocation4 [shape = 's32[1]{0}', space=sflag, size = 0x4, scoped, tag = 'scoped memory for transformer_bilstm_forward.1']
    %68 = vsyncpa [#allocation4], 0
    // Predicated region
    $region2: #{transformer_bilstm_forward.1} parent=1 // pred_check
      _
    $region3: #{transformer_bilstm_forward.1} parent=1 // pred_check_branch
      %70 = sbr.rel (0) target = $region5
    $region4: #{transformer_bilstm_forward.1} parent=1 // pred_region
      _
    $region5: #{transformer_bilstm_forward.1} parent=1 // pred_fallthru
      _
    // Predicated region
    $region6: #{transformer_bilstm_forward.1} parent=1 // pred_check
      _
    $region7: #{transformer_bilstm_forward.1} parent=1 // pred_check_branch
      %72 = sbr.rel (0) target = $region9
    $region8: #{transformer_bilstm_forward.1} parent=1 // pred_region
      _
    $region9: #{transformer_bilstm_forward.1} parent=1 // pred_fallthru
      _
    // Predicated region
    $region10: #{transformer_bilstm_forward.1} parent=1 // pred_check
      _
    $region11: #{transformer_bilstm_forward.1} parent=1 // pred_check_branch
      %74 = sbr.rel (0) target = $region13
    $region12: #{transformer_bilstm_forward.1} parent=1 // pred_region
      _
    $region13: #{transformer_bilstm_forward.1} parent=1 // pred_fallthru
      _
    // Predicated region
    $region14: #{transformer_bilstm_forward.1} parent=1 // pred_check
      _
    $region15: #{transformer_bilstm_forward.1} parent=1 // pred_check_branch
      %76 = sbr.rel (0) target = $region17
    $region16: #{transformer_bilstm_forward.1} parent=1 // pred_region
      _
    $region17: #{transformer_bilstm_forward.1} parent=1 // pred_fallthru
      _
    // Predicated region
    $region18: #{transformer_bilstm_forward.1} parent=1 // pred_check
      _
    $region19: #{transformer_bilstm_forward.1} parent=1 // pred_check_branch
      %78 = sbr.rel (0) target = $region21
    $region20: #{transformer_bilstm_forward.1} parent=1 // pred_region
      _
    $region21: #{transformer_bilstm_forward.1} parent=1 // pred_fallthru
      _
    // Predicated region
    $region22: #{transformer_bilstm_forward.1} parent=1 // pred_check
      _
    $region23: #{transformer_bilstm_forward.1} parent=1 // pred_check_branch
      %80 = sbr.rel (0) target = $region25
    $region24: #{transformer_bilstm_forward.1} parent=1 // pred_region
      _
    $region25: #{transformer_bilstm_forward.1} parent=1 // pred_fallthru
      _
    // Predicated region
    $region26: #{transformer_bilstm_forward.1} parent=1 // pred_check
      _
    $region27: #{transformer_bilstm_forward.1} parent=1 // pred_check_branch
      %82 = sbr.rel (0) target = $region29
    $region28: #{transformer_bilstm_forward.1} parent=1 // pred_region
      _
    $region29: #{transformer_bilstm_forward.1} parent=1 // pred_fallthru
      _
    // Predicated region
    $region30: #{transformer_bilstm_forward.1} parent=1 // pred_check
      _
    $region31: #{transformer_bilstm_forward.1} parent=1 // pred_check_branch
      %84 = sbr.rel (0) target = $region33
    $region32: #{transformer_bilstm_forward.1} parent=1 // pred_region
      _
    $region33: #{transformer_bilstm_forward.1} parent=1 // pred_fallthru
      _
    // Predicated region
    $region34: #{transformer_bilstm_forward.1} parent=1 // pred_check
      _
    $region35: #{transformer_bilstm_forward.1} parent=1 // pred_check_branch
      %86 = sbr.rel (0) target = $region37
    $region36: #{transformer_bilstm_forward.1} parent=1 // pred_region
      _
    $region37: #{transformer_bilstm_forward.1} parent=1 // pred_fallthru
      _
    // Predicated region
    $region38: #{transformer_bilstm_forward.1} parent=1 // pred_check
      _
    $region39: #{transformer_bilstm_forward.1} parent=1 // pred_check_branch
      %88 = sbr.rel (0) target = $region41
    $region40: #{transformer_bilstm_forward.1} parent=1 // pred_region
      _
    $region41: #{transformer_bilstm_forward.1} parent=1 // pred_fallthru
      _
    // Predicated region
    $region42: #{transformer_bilstm_forward.1} parent=1 // pred_check
      _
    $region43: #{transformer_bilstm_forward.1} parent=1 // pred_check_branch
      %90 = sbr.rel (0) target = $region45
    $region44: #{transformer_bilstm_forward.1} parent=1 // pred_region
      _
    $region45: #{transformer_bilstm_forward.1} parent=1 // pred_fallthru
      _
    // Predicated region
    $region46: #{transformer_bilstm_forward.1} parent=1 // pred_check
      _
    $region47: #{transformer_bilstm_forward.1} parent=1 // pred_check_branch
      %92 = sbr.rel (0) target = $region49
    $region48: #{transformer_bilstm_forward.1} parent=1 // pred_region
      _
    $region49: #{transformer_bilstm_forward.1} parent=1 // pred_fallthru
      _
    // Predicated region
    $region50: #{transformer_bilstm_forward.1} parent=1 // pred_check
      _
    $region51: #{transformer_bilstm_forward.1} parent=1 // pred_check_branch
      %94 = sbr.rel (0) target = $region53
    $region52: #{transformer_bilstm_forward.1} parent=1 // pred_region
      _
    $region53: #{transformer_bilstm_forward.1} parent=1 // pred_fallthru
      _
    // Predicated region
    $region54: #{transformer_bilstm_forward.1} parent=1 // pred_check
      _
    $region55: #{transformer_bilstm_forward.1} parent=1 // pred_check_branch
      %96 = sbr.rel (0) target = $region57
    $region56: #{transformer_bilstm_forward.1} parent=1 // pred_region
      _
    $region57: #{transformer_bilstm_forward.1} parent=1 // pred_fallthru
      _
    // Predicated region
    $region58: #{transformer_bilstm_forward.1} parent=1 // pred_check
      _
    $region59: #{transformer_bilstm_forward.1} parent=1 // pred_check_branch
      %98 = sbr.rel (0) target = $region61
    $region60: #{transformer_bilstm_forward.1} parent=1 // pred_region
      _
    $region61: #{transformer_bilstm_forward.1} parent=1 // pred_fallthru
      _
    // Predicated region
    $region62: #{transformer_bilstm_forward.1} parent=1 // pred_check
      _
    $region63: #{transformer_bilstm_forward.1} parent=1 // pred_check_branch
      %100 = sbr.rel (0) target = $region65
    $region64: #{transformer_bilstm_forward.1} parent=1 // pred_region
      _
    $region65: #{transformer_bilstm_forward.1} parent=1 // pred_fallthru
      _
    // Predicated region
    $region66: #{transformer_bilstm_forward.1} parent=1 // pred_check
      _
    $region67: #{transformer_bilstm_forward.1} parent=1 // pred_check_branch
      %102 = sbr.rel (0) target = $region69
    $region68: #{transformer_bilstm_forward.1} parent=1 // pred_region
      _
    $region69: #{transformer_bilstm_forward.1} parent=1 // pred_fallthru
      _
    // Predicated region
    $region70: #{transformer_bilstm_forward.1} parent=1 // pred_check
      _
    $region71: #{transformer_bilstm_forward.1} parent=1 // pred_check_branch
      %104 = sbr.rel (0) target = $region73
    $region72: #{transformer_bilstm_forward.1} parent=1 // pred_region
      _
    $region73: #{transformer_bilstm_forward.1} parent=1 // pred_fallthru
      _
    // Predicated region
    $region74: #{transformer_bilstm_forward.1} parent=1 // pred_check
      _
    $region75: #{transformer_bilstm_forward.1} parent=1 // pred_check_branch
      %106 = sbr.rel (0) target = $region77
    $region76: #{transformer_bilstm_forward.1} parent=1 // pred_region
      _
    $region77: #{transformer_bilstm_forward.1} parent=1 // pred_fallthru
      _
    // Predicated region
    $region78: #{transformer_bilstm_forward.1} parent=1 // pred_check
      _
    $region79: #{transformer_bilstm_forward.1} parent=1 // pred_check_branch
      %108 = sbr.rel (0) target = $region81
    $region80: #{transformer_bilstm_forward.1} parent=1 // pred_region
      _
    $region81: #{transformer_bilstm_forward.1} parent=1 // pred_fallthru
      _
    // Predicated region
    $region82: #{transformer_bilstm_forward.1} parent=1 // pred_check
      _
    $region83: #{transformer_bilstm_forward.1} parent=1 // pred_check_branch
      %110 = sbr.rel (0) target = $region85
    $region84: #{transformer_bilstm_forward.1} parent=1 // pred_region
      _
    $region85: #{transformer_bilstm_forward.1} parent=1 // pred_fallthru
      _
    // Predicated region
    $region86: #{transformer_bilstm_forward.1} parent=1 // pred_check
      _
    $region87: #{transformer_bilstm_forward.1} parent=1 // pred_check_branch
      %112 = sbr.rel (0) target = $region89
    $region88: #{transformer_bilstm_forward.1} parent=1 // pred_region
      _
    $region89: #{transformer_bilstm_forward.1} parent=1 // pred_fallthru
      _
    // Predicated region
    $region90: #{transformer_bilstm_forward.1} parent=1 // pred_check
      _
    $region91: #{transformer_bilstm_forward.1} parent=1 // pred_check_branch
      %114 = sbr.rel (0) target = $region93
    $region92: #{transformer_bilstm_forward.1} parent=1 // pred_region
      _
    $region93: #{transformer_bilstm_forward.1} parent=1 // pred_fallthru
      _
    // Predicated region
    $region94: #{transformer_bilstm_forward.1} parent=1 // pred_check
      _
    $region95: #{transformer_bilstm_forward.1} parent=1 // pred_check_branch
      %116 = sbr.rel (0) target = $region97
    $region96: #{transformer_bilstm_forward.1} parent=1 // pred_region
      _
    $region97: #{transformer_bilstm_forward.1} parent=1 // pred_fallthru
      _
    // Predicated region
    $region98: #{transformer_bilstm_forward.1} parent=1 // pred_check
      _
    $region99: #{transformer_bilstm_forward.1} parent=1 // pred_check_branch
      %118 = sbr.rel (0) target = $region101
    $region100: #{transformer_bilstm_forward.1} parent=1 // pred_region
      _
    $region101: #{transformer_bilstm_forward.1} parent=1 // pred_fallthru
      _
    // Predicated region
    $region102: #{transformer_bilstm_forward.1} parent=1 // pred_check
      _
    $region103: #{transformer_bilstm_forward.1} parent=1 // pred_check_branch
      %120 = sbr.rel (0) target = $region105
    $region104: #{transformer_bilstm_forward.1} parent=1 // pred_region
      _
    $region105: #{transformer_bilstm_forward.1} parent=1 // pred_fallthru
      _
    // Predicated region
    $region106: #{transformer_bilstm_forward.1} parent=1 // pred_check
      _
    $region107: #{transformer_bilstm_forward.1} parent=1 // pred_check_branch
      %122 = sbr.rel (0) target = $region109
    $region108: #{transformer_bilstm_forward.1} parent=1 // pred_region
      _
    $region109: #{transformer_bilstm_forward.1} parent=1 // pred_fallthru
      _
    // Predicated region
    $region110: #{transformer_bilstm_forward.1} parent=1 // pred_check
      _
    $region111: #{transformer_bilstm_forward.1} parent=1 // pred_check_branch
      %124 = sbr.rel (0) target = $region113
    $region112: #{transformer_bilstm_forward.1} parent=1 // pred_region
      _
    $region113: #{transformer_bilstm_forward.1} parent=1 // pred_fallthru
      _
    // Predicated region
    $region114: #{transformer_bilstm_forward.1} parent=1 // pred_check
      _
    $region115: #{transformer_bilstm_forward.1} parent=1 // pred_check_branch
      %126 = sbr.rel (0) target = $region117
    $region116: #{transformer_bilstm_forward.1} parent=1 // pred_region
      _
    $region117: #{transformer_bilstm_forward.1} parent=1 // pred_fallthru
      _
    // Predicated region
    $region118: #{transformer_bilstm_forward.1} parent=1 // pred_check
      _
    $region119: #{transformer_bilstm_forward.1} parent=1 // pred_check_branch
      %128 = sbr.rel (0) target = $region121
    $region120: #{transformer_bilstm_forward.1} parent=1 // pred_region
      _
    $region121: #{transformer_bilstm_forward.1} parent=1 // pred_fallthru
      _
    // Predicated region
    $region122: #{transformer_bilstm_forward.1} parent=1 // pred_check
      _
    $region123: #{transformer_bilstm_forward.1} parent=1 // pred_check_branch
      %130 = sbr.rel (0) target = $region125
    $region124: #{transformer_bilstm_forward.1} parent=1 // pred_region
      _
    $region125: #{transformer_bilstm_forward.1} parent=1 // pred_fallthru
      _
    %v131 = vld [vmem:[%s1] sm:$0xff]
    %v132 = vld [vmem:[%s1 + $0x8] sm:$0xff]
    %v133 = vld [vmem:[%s3] sm:$0xff]
    %v134 = vld [vmem:[%s3 + $0x8] sm:$0xff]
    %v135 = vld [vmem:[%s5] sm:$0x1]
    %v136 = vld [vmem:[%s7] sm:$0x1]
    %v137 = vld [vmem:[%s9] sm:$0x1]
    %v138 = vld [vmem:[%s11] sm:$0x1]
    %v139 = vld [vmem:[%s13] sm:$0xff]
    %v140 = vld [vmem:[%s13 + $0x8] sm:$0xff]
    %v141 = vld [vmem:[%s15] sm:$0x1]
    %v142 = vld [vmem:[%s17] sm:$0xff]
    %v143 = vld [vmem:[%s17 + $0x8] sm:$0xff]
    %v144 = vld [vmem:[%s17 + $0x10] sm:$0xff]
    %v145 = vld [vmem:[%s17 + $0x18] sm:$0xff]
    %v146 = vld [vmem:[%s19] sm:$0x1]
    %v147 = vld [vmem:[%s21] sm:$0x1]
    %v148 = vld [vmem:[%s23] sm:$0x1]
    %v150 = vperm.slane %v135, 0
    %vm152 = vcmask 130048
    %v154 = vsel %vm152, %v131, 0
    %v157 = vsel %vm152, %v132, 0
    %159 = vmatpush.msra.mxu0 0.0
    %160 = vmatpush.msra.mxu0 0.0
    %161 = vmatpush.msra.mxu0 0.0
    %162 = vmatpush.msra.mxu0 0.0
    %163 = vmatpush.msra.mxu0 0.0
    %164 = vmatpush.msra.mxu0 0.0
    %165 = vmatpush.msra.mxu0 0.0
    %166 = vmatpush.msra.mxu0 0.0
    %167 = vmatpush.msra.mxu0 0.0
    %168 = vmatpush.msra.mxu0 0.0
    %169 = vmatpush.msra.mxu0 0.0
    %170 = vmatpush.msra.mxu0 0.0
    %171 = vmatpush.msra.mxu0 0.0
    %172 = vmatpush.msra.mxu0 0.0
    %173 = vmatpush.msra.mxu0 %v134
    %174 = vmatpush.msra.mxu0 %v133
    %175 = vmatmul.f32.gmra.mxu0 %v154
    %v176 = vpop.f32.mrf.mxu0
    %v177 = vadd.f32 %v150, %v176
    %178 = vmatmul.f32.gmra.mxu0 %v157
    %v179 = vpop.f32.mrf.mxu0
    %v180 = vadd.f32 %v150, %v179
    %181 = vdwg.mxu0
    %183 = vrot.lane.b32.xlu0 %v177, 112
    %v184 = vpop.permute.xlu0 %183
    %vm185 = vcmask 31744
    %v186 = vsel %vm185, %v177, 0
    %v188 = vsel %vm185, %v184, 0
    %190 = vmatpush.xpose.msra.mxu0 0.0
    %191 = vmatpush.xpose.msra.mxu0 0.0
    %192 = vmatpush.xpose.msra.mxu0 0.0
    %193 = vmatpush.xpose.msra.mxu0 0.0
    %194 = vmatpush.xpose.msra.mxu0 0.0
    %195 = vmatpush.xpose.msra.mxu0 0.0
    %196 = vmatpush.xpose.msra.mxu0 0.0
    %197 = vmatpush.xpose.msra.mxu0 0.0
    %198 = vmatpush.xpose.msra.mxu0 0.0
    %199 = vmatpush.xpose.msra.mxu0 0.0
    %200 = vmatpush.xpose.msra.mxu0 0.0
    %201 = vmatpush.xpose.msra.mxu0 0.0
    %202 = vmatpush.xpose.msra.mxu0 0.0
    %203 = vmatpush.xpose.msra.mxu0 0.0
    %204 = vmatpush.xpose.msra.mxu0 0.0
    %205 = vmatpush.xpose.msra.mxu0 %v188
    %206 = vmatmul.f32.gmra.mxu0 %v186
    %v207 = vpop.f32.mrf.mxu0
    %v208 = vadd.f32 0.0, %v207
    %209 = vdwg.mxu0
    %211 = vrot.lane.b32.xlu0 %v180, 112
    %v212 = vpop.permute.xlu0 %211
    %v213 = vsel %vm185, %v180, 0
    %v215 = vsel %vm185, %v212, 0
    %217 = vmatpush.xpose.msra.mxu0 0.0
    %218 = vmatpush.xpose.msra.mxu0 0.0
    %219 = vmatpush.xpose.msra.mxu0 0.0
    %220 = vmatpush.xpose.msra.mxu0 0.0
    %221 = vmatpush.xpose.msra.mxu0 0.0
    %222 = vmatpush.xpose.msra.mxu0 0.0
    %223 = vmatpush.xpose.msra.mxu0 0.0
    %224 = vmatpush.xpose.msra.mxu0 0.0
    %225 = vmatpush.xpose.msra.mxu0 0.0
    %226 = vmatpush.xpose.msra.mxu0 0.0
    %227 = vmatpush.xpose.msra.mxu0 0.0
    %228 = vmatpush.xpose.msra.mxu0 0.0
    %229 = vmatpush.xpose.msra.mxu0 0.0
    %230 = vmatpush.xpose.msra.mxu0 0.0
    %231 = vmatpush.xpose.msra.mxu0 0.0
    %232 = vmatpush.xpose.msra.mxu0 %v215
    %233 = vmatmul.f32.gmra.mxu0 %v213
    %v234 = vpop.f32.mrf.mxu0
    %v235 = vadd.f32 0.0, %v234
    %236 = vdwg.mxu0
    %vm237 = vcmask 64512
    %v238 = vsel %vm237, %v208, -inf
    %239 = vmax.xlane.f32.xlu0 %v238
    %v240 = vpop.xlane.xlu0 %239
    %v241 = vsel %vm237, %v235, -inf
    %242 = vmax.xlane.f32.xlu0 %v241
    %v243 = vpop.xlane.xlu0 %242
    %v244 = vsub.f32 %v208, %v240
    %v245 = vsub.f32 %v235, %v243
    %v246 = vmul.f32 %v244, 1.442695
    %v247 = vpow.pop %v246
    %v248 = vmul.f32 %v245, 1.442695
    %v249 = vpow.pop %v248
    %v250 = vsel %vm237, %v247, 0.0
    %251 = vadd.xlane.f32.xlu0 %v250
    %v252 = vpop.xlane.xlu0 %251
    %v253 = vsel %vm237, %v249, 0.0
    %254 = vadd.xlane.f32.xlu0 %v253
    %v255 = vpop.xlane.xlu0 %254
    %v256 = vrcp.pop %v252
    %v257 = vrcp.pop %v255
    %v258 = vmul.f32 %v247, %v256
    %v259 = vmul.f32 %v249, %v257
    %260 = vrot.lane.b32.xlu0 %v177, 124
    %v261 = vpop.permute.xlu0 %260
    %262 = vrot.lane.b32.xlu0 %v177, 108
    %v263 = vpop.permute.xlu0 %262
    %v264 = vsel %vm185, %v261, 0
    %v266 = vsel %vm185, %v263, 0
    %268 = vmatpush.xpose.msra.mxu0 0.0
    %269 = vmatpush.xpose.msra.mxu0 0.0
    %270 = vmatpush.xpose.msra.mxu0 0.0
    %271 = vmatpush.xpose.msra.mxu0 0.0
    %272 = vmatpush.xpose.msra.mxu0 0.0
    %273 = vmatpush.xpose.msra.mxu0 0.0
    %274 = vmatpush.xpose.msra.mxu0 0.0
    %275 = vmatpush.xpose.msra.mxu0 0.0
    %276 = vmatpush.xpose.msra.mxu0 0.0
    %277 = vmatpush.xpose.msra.mxu0 0.0
    %278 = vmatpush.xpose.msra.mxu0 0.0
    %279 = vmatpush.xpose.msra.mxu0 0.0
    %280 = vmatpush.xpose.msra.mxu0 0.0
    %281 = vmatpush.xpose.msra.mxu0 0.0
    %282 = vmatpush.xpose.msra.mxu0 0.0
    %283 = vmatpush.xpose.msra.mxu0 %v266
    %284 = vmatmul.f32.gmra.mxu0 %v264
    %v285 = vpop.f32.mrf.mxu0
    %v286 = vadd.f32 0.0, %v285
    %287 = vdwg.mxu0
    %288 = vrot.lane.b32.xlu0 %v180, 124
    %v289 = vpop.permute.xlu0 %288
    %290 = vrot.lane.b32.xlu0 %v180, 108
    %v291 = vpop.permute.xlu0 %290
    %v292 = vsel %vm185, %v289, 0
    %v294 = vsel %vm185, %v291, 0
    %296 = vmatpush.xpose.msra.mxu0 0.0
    %297 = vmatpush.xpose.msra.mxu0 0.0
    %298 = vmatpush.xpose.msra.mxu0 0.0
    %299 = vmatpush.xpose.msra.mxu0 0.0
    %300 = vmatpush.xpose.msra.mxu0 0.0
    %301 = vmatpush.xpose.msra.mxu0 0.0
    %302 = vmatpush.xpose.msra.mxu0 0.0
    %303 = vmatpush.xpose.msra.mxu0 0.0
    %304 = vmatpush.xpose.msra.mxu0 0.0
    %305 = vmatpush.xpose.msra.mxu0 0.0
    %306 = vmatpush.xpose.msra.mxu0 0.0
    %307 = vmatpush.xpose.msra.mxu0 0.0
    %308 = vmatpush.xpose.msra.mxu0 0.0
    %309 = vmatpush.xpose.msra.mxu0 0.0
    %310 = vmatpush.xpose.msra.mxu0 0.0
    %311 = vmatpush.xpose.msra.mxu0 %v294
    %312 = vmatmul.f32.gmra.mxu0 %v292
    %v313 = vpop.f32.mrf.mxu0
    %v314 = vadd.f32 0.0, %v313
    %315 = vdwg.mxu0
    %v316 = vsel %vm237, %v286, -inf
    %317 = vmax.xlane.f32.xlu0 %v316
    %v318 = vpop.xlane.xlu0 %317
    %v319 = vsel %vm237, %v314, -inf
    %320 = vmax.xlane.f32.xlu0 %v319
    %v321 = vpop.xlane.xlu0 %320
    %v322 = vsub.f32 %v286, %v318
    %v323 = vsub.f32 %v314, %v321
    %v324 = vmul.f32 %v322, 1.442695
    %v325 = vpow.pop %v324
    %v326 = vmul.f32 %v323, 1.442695
    %v327 = vpow.pop %v326
    %v328 = vsel %vm237, %v325, 0.0
    %329 = vadd.xlane.f32.xlu0 %v328
    %v330 = vpop.xlane.xlu0 %329
    %v331 = vsel %vm237, %v327, 0.0
    %332 = vadd.xlane.f32.xlu0 %v331
    %v333 = vpop.xlane.xlu0 %332
    %v334 = vrcp.pop %v330
    %v335 = vrcp.pop %v333
    %v336 = vmul.f32 %v325, %v334
    %v337 = vmul.f32 %v327, %v335
    %338 = vrot.lane.b32.xlu0 %v177, 80
    %v339 = vpop.permute.xlu0 %338
    %v342 = vsel %vm237, %v336, 0
    %344 = vmatpush.msra.mxu0 0.0
    %345 = vmatpush.msra.mxu0 0.0
    %346 = vmatpush.msra.mxu0 0.0
    %347 = vmatpush.msra.mxu0 0.0
    %348 = vmatpush.msra.mxu0 0.0
    %349 = vmatpush.msra.mxu0 0.0
    %350 = vmatpush.msra.mxu0 0.0
    %351 = vmatpush.msra.mxu0 0.0
    %352 = vmatpush.msra.mxu0 0.0
    %353 = vmatpush.msra.mxu0 0.0
    %354 = vmatpush.msra.mxu0 0.0
    %355 = vmatpush.msra.mxu0 0.0
    %356 = vmatpush.msra.mxu0 0.0
    %357 = vmatpush.msra.mxu0 0.0
    %358 = vmatpush.msra.mxu0 0.0
    %359 = vmatpush.msra.mxu0 %v339
    %360 = vmatmul.f32.gmra.mxu0 %v342
    %v361 = vpop.f32.mrf.mxu0
    %v362 = vadd.f32 0.0, %v361
    %363 = vdwg.mxu0
    %364 = vrot.lane.b32.xlu0 %v180, 80
    %v365 = vpop.permute.xlu0 %364
    %v368 = vsel %vm237, %v337, 0
    %370 = vmatpush.msra.mxu0 0.0
    %371 = vmatpush.msra.mxu0 0.0
    %372 = vmatpush.msra.mxu0 0.0
    %373 = vmatpush.msra.mxu0 0.0
    %374 = vmatpush.msra.mxu0 0.0
    %375 = vmatpush.msra.mxu0 0.0
    %376 = vmatpush.msra.mxu0 0.0
    %377 = vmatpush.msra.mxu0 0.0
    %378 = vmatpush.msra.mxu0 0.0
    %379 = vmatpush.msra.mxu0 0.0
    %380 = vmatpush.msra.mxu0 0.0
    %381 = vmatpush.msra.mxu0 0.0
    %382 = vmatpush.msra.mxu0 0.0
    %383 = vmatpush.msra.mxu0 0.0
    %384 = vmatpush.msra.mxu0 0.0
    %385 = vmatpush.msra.mxu0 %v365
    %386 = vmatmul.f32.gmra.mxu0 %v368
    %v387 = vpop.f32.mrf.mxu0
    %v388 = vadd.f32 0.0, %v387
    %389 = vdwg.mxu0
    %390 = vrot.lane.b32.xlu0 %v177, 96
    %v391 = vpop.permute.xlu0 %390
    %v394 = vsel %vm237, %v258, 0
    %396 = vmatpush.msra.mxu0 0.0
    %397 = vmatpush.msra.mxu0 0.0
    %398 = vmatpush.msra.mxu0 0.0
    %399 = vmatpush.msra.mxu0 0.0
    %400 = vmatpush.msra.mxu0 0.0
    %401 = vmatpush.msra.mxu0 0.0
    %402 = vmatpush.msra.mxu0 0.0
    %403 = vmatpush.msra.mxu0 0.0
    %404 = vmatpush.msra.mxu0 0.0
    %405 = vmatpush.msra.mxu0 0.0
    %406 = vmatpush.msra.mxu0 0.0
    %407 = vmatpush.msra.mxu0 0.0
    %408 = vmatpush.msra.mxu0 0.0
    %409 = vmatpush.msra.mxu0 0.0
    %410 = vmatpush.msra.mxu0 0.0
    %411 = vmatpush.msra.mxu0 %v391
    %412 = vmatmul.f32.gmra.mxu0 %v394
    %v413 = vpop.f32.mrf.mxu0
    %v414 = vadd.f32 %v362, %v413
    %415 = vdwg.mxu0
    %416 = vrot.lane.b32.xlu0 %v180, 96
    %v417 = vpop.permute.xlu0 %416
    %v420 = vsel %vm237, %v259, 0
    %422 = vmatpush.msra.mxu0 0.0
    %423 = vmatpush.msra.mxu0 0.0
    %424 = vmatpush.msra.mxu0 0.0
    %425 = vmatpush.msra.mxu0 0.0
    %426 = vmatpush.msra.mxu0 0.0
    %427 = vmatpush.msra.mxu0 0.0
    %428 = vmatpush.msra.mxu0 0.0
    %429 = vmatpush.msra.mxu0 0.0
    %430 = vmatpush.msra.mxu0 0.0
    %431 = vmatpush.msra.mxu0 0.0
    %432 = vmatpush.msra.mxu0 0.0
    %433 = vmatpush.msra.mxu0 0.0
    %434 = vmatpush.msra.mxu0 0.0
    %435 = vmatpush.msra.mxu0 0.0
    %436 = vmatpush.msra.mxu0 0.0
    %437 = vmatpush.msra.mxu0 %v417
    %438 = vmatmul.f32.gmra.mxu0 %v420
    %v439 = vpop.f32.mrf.mxu0
    %v440 = vadd.f32 %v388, %v439
    %441 = vdwg.mxu0
    %442 = vrot.lane.b32.xlu0 %v177, 120
    %v443 = vpop.permute.xlu0 %442
    %444 = vrot.lane.b32.xlu0 %v177, 104
    %v445 = vpop.permute.xlu0 %444
    %v446 = vsel %vm185, %v443, 0
    %v448 = vsel %vm185, %v445, 0
    %450 = vmatpush.xpose.msra.mxu0 0.0
    %451 = vmatpush.xpose.msra.mxu0 0.0
    %452 = vmatpush.xpose.msra.mxu0 0.0
    %453 = vmatpush.xpose.msra.mxu0 0.0
    %454 = vmatpush.xpose.msra.mxu0 0.0
    %455 = vmatpush.xpose.msra.mxu0 0.0
    %456 = vmatpush.xpose.msra.mxu0 0.0
    %457 = vmatpush.xpose.msra.mxu0 0.0
    %458 = vmatpush.xpose.msra.mxu0 0.0
    %459 = vmatpush.xpose.msra.mxu0 0.0
    %460 = vmatpush.xpose.msra.mxu0 0.0
    %461 = vmatpush.xpose.msra.mxu0 0.0
    %462 = vmatpush.xpose.msra.mxu0 0.0
    %463 = vmatpush.xpose.msra.mxu0 0.0
    %464 = vmatpush.xpose.msra.mxu0 0.0
    %465 = vmatpush.xpose.msra.mxu0 %v448
    %466 = vmatmul.f32.gmra.mxu0 %v446
    %v467 = vpop.f32.mrf.mxu0
    %v468 = vadd.f32 0.0, %v467
    %469 = vdwg.mxu0
    %470 = vrot.lane.b32.xlu0 %v180, 120
    %v471 = vpop.permute.xlu0 %470
    %472 = vrot.lane.b32.xlu0 %v180, 104
    %v473 = vpop.permute.xlu0 %472
    %v474 = vsel %vm185, %v471, 0
    %v476 = vsel %vm185, %v473, 0
    %478 = vmatpush.xpose.msra.mxu0 0.0
    %479 = vmatpush.xpose.msra.mxu0 0.0
    %480 = vmatpush.xpose.msra.mxu0 0.0
    %481 = vmatpush.xpose.msra.mxu0 0.0
    %482 = vmatpush.xpose.msra.mxu0 0.0
    %483 = vmatpush.xpose.msra.mxu0 0.0
    %484 = vmatpush.xpose.msra.mxu0 0.0
    %485 = vmatpush.xpose.msra.mxu0 0.0
    %486 = vmatpush.xpose.msra.mxu0 0.0
    %487 = vmatpush.xpose.msra.mxu0 0.0
    %488 = vmatpush.xpose.msra.mxu0 0.0
    %489 = vmatpush.xpose.msra.mxu0 0.0
    %490 = vmatpush.xpose.msra.mxu0 0.0
    %491 = vmatpush.xpose.msra.mxu0 0.0
    %492 = vmatpush.xpose.msra.mxu0 0.0
    %493 = vmatpush.xpose.msra.mxu0 %v476
    %494 = vmatmul.f32.gmra.mxu0 %v474
    %v495 = vpop.f32.mrf.mxu0
    %v496 = vadd.f32 0.0, %v495
    %497 = vdwg.mxu0
    %v498 = vsel %vm237, %v468, -inf
    %499 = vmax.xlane.f32.xlu0 %v498
    %v500 = vpop.xlane.xlu0 %499
    %v501 = vsel %vm237, %v496, -inf
    %502 = vmax.xlane.f32.xlu0 %v501
    %v503 = vpop.xlane.xlu0 %502
    %v504 = vsub.f32 %v468, %v500
    %v505 = vsub.f32 %v496, %v503
    %v506 = vmul.f32 %v504, 1.442695
    %v507 = vpow.pop %v506
    %v508 = vmul.f32 %v505, 1.442695
    %v509 = vpow.pop %v508
    %v510 = vsel %vm237, %v507, 0.0
    %511 = vadd.xlane.f32.xlu0 %v510
    %v512 = vpop.xlane.xlu0 %511
    %v513 = vsel %vm237, %v509, 0.0
    %514 = vadd.xlane.f32.xlu0 %v513
    %v515 = vpop.xlane.xlu0 %514
    %v516 = vrcp.pop %v512
    %v517 = vrcp.pop %v515
    %v518 = vmul.f32 %v507, %v516
    %v519 = vmul.f32 %v509, %v517
    %520 = vrot.lane.b32.xlu0 %v177, 64
    %v521 = vpop.permute.xlu0 %520
    %v524 = vsel %vm237, %v518, 0
    %526 = vmatpush.msra.mxu0 0.0
    %527 = vmatpush.msra.mxu0 0.0
    %528 = vmatpush.msra.mxu0 0.0
    %529 = vmatpush.msra.mxu0 0.0
    %530 = vmatpush.msra.mxu0 0.0
    %531 = vmatpush.msra.mxu0 0.0
    %532 = vmatpush.msra.mxu0 0.0
    %533 = vmatpush.msra.mxu0 0.0
    %534 = vmatpush.msra.mxu0 0.0
    %535 = vmatpush.msra.mxu0 0.0
    %536 = vmatpush.msra.mxu0 0.0
    %537 = vmatpush.msra.mxu0 0.0
    %538 = vmatpush.msra.mxu0 0.0
    %539 = vmatpush.msra.mxu0 0.0
    %540 = vmatpush.msra.mxu0 0.0
    %541 = vmatpush.msra.mxu0 %v521
    %542 = vmatmul.f32.gmra.mxu0 %v524
    %v543 = vpop.f32.mrf.mxu0
    %v544 = vadd.f32 0.0, %v543
    %545 = vdwg.mxu0
    %546 = vrot.lane.b32.xlu0 %v180, 64
    %v547 = vpop.permute.xlu0 %546
    %v550 = vsel %vm237, %v519, 0
    %552 = vmatpush.msra.mxu0 0.0
    %553 = vmatpush.msra.mxu0 0.0
    %554 = vmatpush.msra.mxu0 0.0
    %555 = vmatpush.msra.mxu0 0.0
    %556 = vmatpush.msra.mxu0 0.0
    %557 = vmatpush.msra.mxu0 0.0
    %558 = vmatpush.msra.mxu0 0.0
    %559 = vmatpush.msra.mxu0 0.0
    %560 = vmatpush.msra.mxu0 0.0
    %561 = vmatpush.msra.mxu0 0.0
    %562 = vmatpush.msra.mxu0 0.0
    %563 = vmatpush.msra.mxu0 0.0
    %564 = vmatpush.msra.mxu0 0.0
    %565 = vmatpush.msra.mxu0 0.0
    %566 = vmatpush.msra.mxu0 0.0
    %567 = vmatpush.msra.mxu0 %v547
    %568 = vmatmul.f32.gmra.mxu0 %v550
    %v569 = vpop.f32.mrf.mxu0
    %v570 = vadd.f32 0.0, %v569
    %571 = vdwg.mxu0
    %v572 = vadd.f32 %v414, %v544
    %v573 = vadd.f32 %v440, %v570
    %574 = vrot.lane.b32.xlu0 %v177, 116
    %v575 = vpop.permute.xlu0 %574
    %576 = vrot.lane.b32.xlu0 %v177, 100
    %v577 = vpop.permute.xlu0 %576
    %v578 = vsel %vm185, %v575, 0
    %v580 = vsel %vm185, %v577, 0
    %582 = vmatpush.xpose.msra.mxu0 0.0
    %583 = vmatpush.xpose.msra.mxu0 0.0
    %584 = vmatpush.xpose.msra.mxu0 0.0
    %585 = vmatpush.xpose.msra.mxu0 0.0
    %586 = vmatpush.xpose.msra.mxu0 0.0
    %587 = vmatpush.xpose.msra.mxu0 0.0
    %588 = vmatpush.xpose.msra.mxu0 0.0
    %589 = vmatpush.xpose.msra.mxu0 0.0
    %590 = vmatpush.xpose.msra.mxu0 0.0
    %591 = vmatpush.xpose.msra.mxu0 0.0
    %592 = vmatpush.xpose.msra.mxu0 0.0
    %593 = vmatpush.xpose.msra.mxu0 0.0
    %594 = vmatpush.xpose.msra.mxu0 0.0
    %595 = vmatpush.xpose.msra.mxu0 0.0
    %596 = vmatpush.xpose.msra.mxu0 0.0
    %597 = vmatpush.xpose.msra.mxu0 %v580
    %598 = vmatmul.f32.gmra.mxu0 %v578
    %v599 = vpop.f32.mrf.mxu0
    %v600 = vadd.f32 0.0, %v599
    %601 = vdwg.mxu0
    %602 = vrot.lane.b32.xlu0 %v180, 116
    %v603 = vpop.permute.xlu0 %602
    %604 = vrot.lane.b32.xlu0 %v180, 100
    %v605 = vpop.permute.xlu0 %604
    %v606 = vsel %vm185, %v603, 0
    %v608 = vsel %vm185, %v605, 0
    %610 = vmatpush.xpose.msra.mxu0 0.0
    %611 = vmatpush.xpose.msra.mxu0 0.0
    %612 = vmatpush.xpose.msra.mxu0 0.0
    %613 = vmatpush.xpose.msra.mxu0 0.0
    %614 = vmatpush.xpose.msra.mxu0 0.0
    %615 = vmatpush.xpose.msra.mxu0 0.0
    %616 = vmatpush.xpose.msra.mxu0 0.0
    %617 = vmatpush.xpose.msra.mxu0 0.0
    %618 = vmatpush.xpose.msra.mxu0 0.0
    %619 = vmatpush.xpose.msra.mxu0 0.0
    %620 = vmatpush.xpose.msra.mxu0 0.0
    %621 = vmatpush.xpose.msra.mxu0 0.0
    %622 = vmatpush.xpose.msra.mxu0 0.0
    %623 = vmatpush.xpose.msra.mxu0 0.0
    %624 = vmatpush.xpose.msra.mxu0 0.0
    %625 = vmatpush.xpose.msra.mxu0 %v608
    %626 = vmatmul.f32.gmra.mxu0 %v606
    %v627 = vpop.f32.mrf.mxu0
    %v628 = vadd.f32 0.0, %v627
    %629 = vdwg.mxu0
    %v630 = vsel %vm237, %v600, -inf
    %631 = vmax.xlane.f32.xlu0 %v630
    %v632 = vpop.xlane.xlu0 %631
    %v633 = vsel %vm237, %v628, -inf
    %634 = vmax.xlane.f32.xlu0 %v633
    %v635 = vpop.xlane.xlu0 %634
    %v636 = vsub.f32 %v600, %v632
    %v637 = vsub.f32 %v628, %v635
    %v638 = vmul.f32 %v636, 1.442695
    %v639 = vpow.pop %v638
    %v640 = vmul.f32 %v637, 1.442695
    %v641 = vpow.pop %v640
    %v642 = vsel %vm237, %v639, 0.0
    %643 = vadd.xlane.f32.xlu0 %v642
    %v644 = vpop.xlane.xlu0 %643
    %v645 = vsel %vm237, %v641, 0.0
    %646 = vadd.xlane.f32.xlu0 %v645
    %v647 = vpop.xlane.xlu0 %646
    %v648 = vrcp.pop %v644
    %v649 = vrcp.pop %v647
    %v650 = vmul.f32 %v639, %v648
    %v651 = vmul.f32 %v641, %v649
    %652 = vrot.lane.b32.xlu0 %v177, 48
    %v653 = vpop.permute.xlu0 %652
    %v656 = vsel %vm237, %v650, 0
    %658 = vmatpush.msra.mxu0 0.0
    %659 = vmatpush.msra.mxu0 0.0
    %660 = vmatpush.msra.mxu0 0.0
    %661 = vmatpush.msra.mxu0 0.0
    %662 = vmatpush.msra.mxu0 0.0
    %663 = vmatpush.msra.mxu0 0.0
    %664 = vmatpush.msra.mxu0 0.0
    %665 = vmatpush.msra.mxu0 0.0
    %666 = vmatpush.msra.mxu0 0.0
    %667 = vmatpush.msra.mxu0 0.0
    %668 = vmatpush.msra.mxu0 0.0
    %669 = vmatpush.msra.mxu0 0.0
    %670 = vmatpush.msra.mxu0 0.0
    %671 = vmatpush.msra.mxu0 0.0
    %672 = vmatpush.msra.mxu0 0.0
    %673 = vmatpush.msra.mxu0 %v653
    %674 = vmatmul.f32.gmra.mxu0 %v656
    %v675 = vpop.f32.mrf.mxu0
    %v676 = vadd.f32 0.0, %v675
    %677 = vdwg.mxu0
    %678 = vrot.lane.b32.xlu0 %v180, 48
    %v679 = vpop.permute.xlu0 %678
    %v682 = vsel %vm237, %v651, 0
    %684 = vmatpush.msra.mxu0 0.0
    %685 = vmatpush.msra.mxu0 0.0
    %686 = vmatpush.msra.mxu0 0.0
    %687 = vmatpush.msra.mxu0 0.0
    %688 = vmatpush.msra.mxu0 0.0
    %689 = vmatpush.msra.mxu0 0.0
    %690 = vmatpush.msra.mxu0 0.0
    %691 = vmatpush.msra.mxu0 0.0
    %692 = vmatpush.msra.mxu0 0.0
    %693 = vmatpush.msra.mxu0 0.0
    %694 = vmatpush.msra.mxu0 0.0
    %695 = vmatpush.msra.mxu0 0.0
    %696 = vmatpush.msra.mxu0 0.0
    %697 = vmatpush.msra.mxu0 0.0
    %698 = vmatpush.msra.mxu0 0.0
    %699 = vmatpush.msra.mxu0 %v679
    %700 = vmatmul.f32.gmra.mxu0 %v682
    %v701 = vpop.f32.mrf.mxu0
    %v702 = vadd.f32 0.0, %v701
    %703 = vdwg.mxu0
    %v704 = vadd.f32 %v572, %v676
    %v705 = vadd.f32 %v573, %v702
    %v707 = vperm.slane %v136, 0
    %v709 = vadd.f32 %v704, %v707
    %v710 = vadd.f32 %v705, %v707
    %v711 = vadd.f32 %v131, %v709
    %v712 = vadd.f32 %v132, %v710
    %v713 = vsel %vm152, %v711, 0.0
    %714 = vadd.xlane.f32.xlu0 %v713
    %v715 = vpop.xlane.xlu0 %714
    %v716 = vsel %vm152, %v712, 0.0
    %717 = vadd.xlane.f32.xlu0 %v716
    %v718 = vpop.xlane.xlu0 %717
    %v719 = vrcp.pop 16.0
    %v720 = vmul.f32 16.0, %v719
    %v721 = vsub.f32 1.0, %v720
    %v722 = vmul.f32 %v719, %v721
    %v723 = vadd.f32 %v719, %v722
    %vm724 = vweird.f32 %v719
    %v725 = vsel %vm724, %v719, %v723
    %v726 = vmul.f32 %v715, %v725
    %v727 = vmul.f32 %v718, %v725
    %v728 = vsub.f32 %v711, %v726
    %v729 = vsub.f32 %v712, %v727
    %v730 = vmul.f32 %v728, %v728
    %v731 = vmul.f32 %v729, %v729
    %v732 = vsel %vm152, %v730, 0.0
    %733 = vadd.xlane.f32.xlu0 %v732
    %v734 = vpop.xlane.xlu0 %733
    %v735 = vsel %vm152, %v731, 0.0
    %736 = vadd.xlane.f32.xlu0 %v735
    %v737 = vpop.xlane.xlu0 %736
    %v738 = vmul.f32 %v734, %v725
    %v739 = vmul.f32 %v737, %v725
    %v740 = vadd.f32 %v738, 1e-05
    %v741 = vadd.f32 %v739, 1e-05
    %v742 = vrsqrt.pop %v740
    %v743 = vmul.f32 %v742, %v740
    %v744 = vmul.f32 %v743, %v742
    %v745 = vmul.f32 0.5, %v744
    %v746 = vsub.f32 1.5, %v745
    %v747 = vmul.f32 %v742, %v746
    %vm748 = vweird.f32 %v740
    %vm749 = vweird.f32 %v742
    %vm750 = vmor %vm748, %vm749
    %v751 = vsel %vm750, %v742, %v747
    %v752 = vrsqrt.pop %v741
    %v753 = vmul.f32 %v752, %v741
    %v754 = vmul.f32 %v753, %v752
    %v755 = vmul.f32 0.5, %v754
    %v756 = vsub.f32 1.5, %v755
    %v757 = vmul.f32 %v752, %v756
    %vm758 = vweird.f32 %v741
    %vm759 = vweird.f32 %v752
    %vm760 = vmor %vm758, %vm759
    %v761 = vsel %vm760, %v752, %v757
    %v762 = vmul.f32 %v728, %v751
    %v763 = vmul.f32 %v729, %v761
    %v765 = vperm.slane %v137, 0
    %v767 = vmul.f32 %v762, %v765
    %v768 = vmul.f32 %v763, %v765
    %v770 = vperm.slane %v138, 0
    %v772 = vadd.f32 %v767, %v770
    %v773 = vadd.f32 %v768, %v770
    %v775 = vperm.slane %v141, 0
    %v778 = vsel %vm152, %v772, 0
    %v781 = vsel %vm152, %v773, 0
    %783 = vmatpush.msra.mxu0 0.0
    %784 = vmatpush.msra.mxu0 0.0
    %785 = vmatpush.msra.mxu0 0.0
    %786 = vmatpush.msra.mxu0 0.0
    %787 = vmatpush.msra.mxu0 0.0
    %788 = vmatpush.msra.mxu0 0.0
    %789 = vmatpush.msra.mxu0 0.0
    %790 = vmatpush.msra.mxu0 0.0
    %791 = vmatpush.msra.mxu0 0.0
    %792 = vmatpush.msra.mxu0 0.0
    %793 = vmatpush.msra.mxu0 0.0
    %794 = vmatpush.msra.mxu0 0.0
    %795 = vmatpush.msra.mxu0 0.0
    %796 = vmatpush.msra.mxu0 0.0
    %797 = vmatpush.msra.mxu0 %v140
    %798 = vmatpush.msra.mxu0 %v139
    %799 = vmatmul.f32.gmra.mxu0 %v778
    %v800 = vpop.f32.mrf.mxu0
    %v801 = vadd.f32 %v775, %v800
    %802 = vmatmul.f32.gmra.mxu0 %v781
    %v803 = vpop.f32.mrf.mxu0
    %v804 = vadd.f32 %v775, %v803
    %805 = vdwg.mxu0
    %v806 = vmax.f32 %v801, 0.0
    %v807 = vmax.f32 %v804, 0.0
    %v809 = vperm.slane %v146, 0
    %vm811 = vcmask 261120
    %v813 = vsel %vm811, %v806, 0
    %v816 = vsel %vm811, %v807, 0
    %818 = vmatpush.msra.mxu0 0.0
    %819 = vmatpush.msra.mxu0 0.0
    %820 = vmatpush.msra.mxu0 0.0
    %821 = vmatpush.msra.mxu0 0.0
    %822 = vmatpush.msra.mxu0 0.0
    %823 = vmatpush.msra.mxu0 0.0
    %824 = vmatpush.msra.mxu0 0.0
    %825 = vmatpush.msra.mxu0 0.0
    %826 = vmatpush.msra.mxu0 0.0
    %827 = vmatpush.msra.mxu0 0.0
    %828 = vmatpush.msra.mxu0 0.0
    %829 = vmatpush.msra.mxu0 0.0
    %830 = vmatpush.msra.mxu0 %v145
    %831 = vmatpush.msra.mxu0 %v144
    %832 = vmatpush.msra.mxu0 %v143
    %833 = vmatpush.msra.mxu0 %v142
    %834 = vmatmul.f32.gmra.mxu0 %v813
    %v835 = vpop.f32.mrf.mxu0
    %v836 = vadd.f32 %v809, %v835
    %837 = vmatmul.f32.gmra.mxu0 %v816
    %v838 = vpop.f32.mrf.mxu0
    %v839 = vadd.f32 %v809, %v838
    %840 = vdwg.mxu0
    %v841 = vadd.f32 %v772, %v836
    %v842 = vadd.f32 %v773, %v839
    %v843 = vsel %vm152, %v841, 0.0
    %844 = vadd.xlane.f32.xlu0 %v843
    %v845 = vpop.xlane.xlu0 %844
    %v846 = vsel %vm152, %v842, 0.0
    %847 = vadd.xlane.f32.xlu0 %v846
    %v848 = vpop.xlane.xlu0 %847
    %v849 = vmul.f32 %v845, %v725
    %v850 = vmul.f32 %v848, %v725
    %v851 = vsub.f32 %v841, %v849
    %v852 = vsub.f32 %v842, %v850
    %v853 = vmul.f32 %v851, %v851
    %v854 = vmul.f32 %v852, %v852
    %v855 = vsel %vm152, %v853, 0.0
    %856 = vadd.xlane.f32.xlu0 %v855
    %v857 = vpop.xlane.xlu0 %856
    %v858 = vsel %vm152, %v854, 0.0
    %859 = vadd.xlane.f32.xlu0 %v858
    %v860 = vpop.xlane.xlu0 %859
    %v861 = vmul.f32 %v857, %v725
    %v862 = vmul.f32 %v860, %v725
    %v863 = vadd.f32 %v861, 1e-05
    %v864 = vadd.f32 %v862, 1e-05
    %v865 = vrsqrt.pop %v863
    %v866 = vmul.f32 %v865, %v863
    %v867 = vmul.f32 %v866, %v865
    %v868 = vmul.f32 0.5, %v867
    %v869 = vsub.f32 1.5, %v868
    %v870 = vmul.f32 %v865, %v869
    %vm871 = vweird.f32 %v863
    %vm872 = vweird.f32 %v865
    %vm873 = vmor %vm871, %vm872
    %v874 = vsel %vm873, %v865, %v870
    %v875 = vrsqrt.pop %v864
    %v876 = vmul.f32 %v875, %v864
    %v877 = vmul.f32 %v876, %v875
    %v878 = vmul.f32 0.5, %v877
    %v879 = vsub.f32 1.5, %v878
    %v880 = vmul.f32 %v875, %v879
    %vm881 = vweird.f32 %v864
    %vm882 = vweird.f32 %v875
    %vm883 = vmor %vm881, %vm882
    %v884 = vsel %vm883, %v875, %v880
    %v885 = vmul.f32 %v851, %v874
    %v886 = vmul.f32 %v852, %v884
    %v888 = vperm.slane %v147, 0
    %v890 = vmul.f32 %v885, %v888
    %v891 = vmul.f32 %v886, %v888
    %v893 = vperm.slane %v148, 0
    %v895 = vadd.f32 %v890, %v893
    %v896 = vadd.f32 %v891, %v893
    %v897 = vld [vmem:[%s25] sm:$0xff]
    %v898 = vld [vmem:[%s25 + $0x8] sm:$0xff]
    %v899 = vld [vmem:[%s27] sm:$0x1]
    %v900 = vld [vmem:[%s29] sm:$0x1]
    %v901 = vld [vmem:[%s31] sm:$0x1]
    %v902 = vld [vmem:[%s33] sm:$0x1]
    %v903 = vld [vmem:[%s35] sm:$0xff]
    %v904 = vld [vmem:[%s35 + $0x8] sm:$0xff]
    %v905 = vld [vmem:[%s37] sm:$0x1]
    %v906 = vld [vmem:[%s39] sm:$0xff]
    %v907 = vld [vmem:[%s39 + $0x8] sm:$0xff]
    %v908 = vld [vmem:[%s39 + $0x10] sm:$0xff]
    %v909 = vld [vmem:[%s39 + $0x18] sm:$0xff]
    %v910 = vld [vmem:[%s41] sm:$0x1]
    %v911 = vld [vmem:[%s43] sm:$0x1]
    %v912 = vld [vmem:[%s45] sm:$0x1]
    %v914 = vperm.slane %v899, 0
    %v917 = vsel %vm152, %v895, 0
    %v920 = vsel %vm152, %v896, 0
    %922 = vmatpush.msra.mxu0 0.0
    %923 = vmatpush.msra.mxu0 0.0
    %924 = vmatpush.msra.mxu0 0.0
    %925 = vmatpush.msra.mxu0 0.0
    %926 = vmatpush.msra.mxu0 0.0
    %927 = vmatpush.msra.mxu0 0.0
    %928 = vmatpush.msra.mxu0 0.0
    %929 = vmatpush.msra.mxu0 0.0
    %930 = vmatpush.msra.mxu0 0.0
    %931 = vmatpush.msra.mxu0 0.0
    %932 = vmatpush.msra.mxu0 0.0
    %933 = vmatpush.msra.mxu0 0.0
    %934 = vmatpush.msra.mxu0 0.0
    %935 = vmatpush.msra.mxu0 0.0
    %936 = vmatpush.msra.mxu0 %v898
    %937 = vmatpush.msra.mxu0 %v897
    %938 = vmatmul.f32.gmra.mxu0 %v917
    %v939 = vpop.f32.mrf.mxu0
    %v940 = vadd.f32 %v914, %v939
    %941 = vmatmul.f32.gmra.mxu0 %v920
    %v942 = vpop.f32.mrf.mxu0
    %v943 = vadd.f32 %v914, %v942
    %944 = vdwg.mxu0
    %946 = vrot.lane.b32.xlu0 %v940, 112
    %v947 = vpop.permute.xlu0 %946
    %v948 = vsel %vm185, %v940, 0
    %v950 = vsel %vm185, %v947, 0
    %952 = vmatpush.xpose.msra.mxu0 0.0
    %953 = vmatpush.xpose.msra.mxu0 0.0
    %954 = vmatpush.xpose.msra.mxu0 0.0
    %955 = vmatpush.xpose.msra.mxu0 0.0
    %956 = vmatpush.xpose.msra.mxu0 0.0
    %957 = vmatpush.xpose.msra.mxu0 0.0
    %958 = vmatpush.xpose.msra.mxu0 0.0
    %959 = vmatpush.xpose.msra.mxu0 0.0
    %960 = vmatpush.xpose.msra.mxu0 0.0
    %961 = vmatpush.xpose.msra.mxu0 0.0
    %962 = vmatpush.xpose.msra.mxu0 0.0
    %963 = vmatpush.xpose.msra.mxu0 0.0
    %964 = vmatpush.xpose.msra.mxu0 0.0
    %965 = vmatpush.xpose.msra.mxu0 0.0
    %966 = vmatpush.xpose.msra.mxu0 0.0
    %967 = vmatpush.xpose.msra.mxu0 %v950
    %968 = vmatmul.f32.gmra.mxu0 %v948
    %v969 = vpop.f32.mrf.mxu0
    %v970 = vadd.f32 0.0, %v969
    %971 = vdwg.mxu0
    %973 = vrot.lane.b32.xlu0 %v943, 112
    %v974 = vpop.permute.xlu0 %973
    %v975 = vsel %vm185, %v943, 0
    %v977 = vsel %vm185, %v974, 0
    %979 = vmatpush.xpose.msra.mxu0 0.0
    %980 = vmatpush.xpose.msra.mxu0 0.0
    %981 = vmatpush.xpose.msra.mxu0 0.0
    %982 = vmatpush.xpose.msra.mxu0 0.0
    %983 = vmatpush.xpose.msra.mxu0 0.0
    %984 = vmatpush.xpose.msra.mxu0 0.0
    %985 = vmatpush.xpose.msra.mxu0 0.0
    %986 = vmatpush.xpose.msra.mxu0 0.0
    %987 = vmatpush.xpose.msra.mxu0 0.0
    %988 = vmatpush.xpose.msra.mxu0 0.0
    %989 = vmatpush.xpose.msra.mxu0 0.0
    %990 = vmatpush.xpose.msra.mxu0 0.0
    %991 = vmatpush.xpose.msra.mxu0 0.0
    %992 = vmatpush.xpose.msra.mxu0 0.0
    %993 = vmatpush.xpose.msra.mxu0 0.0
    %994 = vmatpush.xpose.msra.mxu0 %v977
    %995 = vmatmul.f32.gmra.mxu0 %v975
    %v996 = vpop.f32.mrf.mxu0
    %v997 = vadd.f32 0.0, %v996
    %998 = vdwg.mxu0
    %v999 = vsel %vm237, %v970, -inf
    %1000 = vmax.xlane.f32.xlu0 %v999
    %v1001 = vpop.xlane.xlu0 %1000
    %v1002 = vsel %vm237, %v997, -inf
    %1003 = vmax.xlane.f32.xlu0 %v1002
    %v1004 = vpop.xlane.xlu0 %1003
    %v1005 = vsub.f32 %v970, %v1001
    %v1006 = vsub.f32 %v997, %v1004
    %v1007 = vmul.f32 %v1005, 1.442695
    %v1008 = vpow.pop %v1007
    %v1009 = vmul.f32 %v1006, 1.442695
    %v1010 = vpow.pop %v1009
    %v1011 = vsel %vm237, %v1008, 0.0
    %1012 = vadd.xlane.f32.xlu0 %v1011
    %v1013 = vpop.xlane.xlu0 %1012
    %v1014 = vsel %vm237, %v1010, 0.0
    %1015 = vadd.xlane.f32.xlu0 %v1014
    %v1016 = vpop.xlane.xlu0 %1015
    %v1017 = vrcp.pop %v1013
    %v1018 = vrcp.pop %v1016
    %v1019 = vmul.f32 %v1008, %v1017
    %v1020 = vmul.f32 %v1010, %v1018
    %1021 = vrot.lane.b32.xlu0 %v940, 124
    %v1022 = vpop.permute.xlu0 %1021
    %1023 = vrot.lane.b32.xlu0 %v940, 108
    %v1024 = vpop.permute.xlu0 %1023
    %v1025 = vsel %vm185, %v1022, 0
    %v1027 = vsel %vm185, %v1024, 0
    %1029 = vmatpush.xpose.msra.mxu0 0.0
    %1030 = vmatpush.xpose.msra.mxu0 0.0
    %1031 = vmatpush.xpose.msra.mxu0 0.0
    %1032 = vmatpush.xpose.msra.mxu0 0.0
    %1033 = vmatpush.xpose.msra.mxu0 0.0
    %1034 = vmatpush.xpose.msra.mxu0 0.0
    %1035 = vmatpush.xpose.msra.mxu0 0.0
    %1036 = vmatpush.xpose.msra.mxu0 0.0
    %1037 = vmatpush.xpose.msra.mxu0 0.0
    %1038 = vmatpush.xpose.msra.mxu0 0.0
    %1039 = vmatpush.xpose.msra.mxu0 0.0
    %1040 = vmatpush.xpose.msra.mxu0 0.0
    %1041 = vmatpush.xpose.msra.mxu0 0.0
    %1042 = vmatpush.xpose.msra.mxu0 0.0
    %1043 = vmatpush.xpose.msra.mxu0 0.0
    %1044 = vmatpush.xpose.msra.mxu0 %v1027
    %1045 = vmatmul.f32.gmra.mxu0 %v1025
    %v1046 = vpop.f32.mrf.mxu0
    %v1047 = vadd.f32 0.0, %v1046
    %1048 = vdwg.mxu0
    %1049 = vrot.lane.b32.xlu0 %v943, 124
    %v1050 = vpop.permute.xlu0 %1049
    %1051 = vrot.lane.b32.xlu0 %v943, 108
    %v1052 = vpop.permute.xlu0 %1051
    %v1053 = vsel %vm185, %v1050, 0
    %v1055 = vsel %vm185, %v1052, 0
    %1057 = vmatpush.xpose.msra.mxu0 0.0
    %1058 = vmatpush.xpose.msra.mxu0 0.0
    %1059 = vmatpush.xpose.msra.mxu0 0.0
    %1060 = vmatpush.xpose.msra.mxu0 0.0
    %1061 = vmatpush.xpose.msra.mxu0 0.0
    %1062 = vmatpush.xpose.msra.mxu0 0.0
    %1063 = vmatpush.xpose.msra.mxu0 0.0
    %1064 = vmatpush.xpose.msra.mxu0 0.0
    %1065 = vmatpush.xpose.msra.mxu0 0.0
    %1066 = vmatpush.xpose.msra.mxu0 0.0
    %1067 = vmatpush.xpose.msra.mxu0 0.0
    %1068 = vmatpush.xpose.msra.mxu0 0.0
    %1069 = vmatpush.xpose.msra.mxu0 0.0
    %1070 = vmatpush.xpose.msra.mxu0 0.0
    %1071 = vmatpush.xpose.msra.mxu0 0.0
    %1072 = vmatpush.xpose.msra.mxu0 %v1055
    %1073 = vmatmul.f32.gmra.mxu0 %v1053
    %v1074 = vpop.f32.mrf.mxu0
    %v1075 = vadd.f32 0.0, %v1074
    %1076 = vdwg.mxu0
    %v1077 = vsel %vm237, %v1047, -inf
    %1078 = vmax.xlane.f32.xlu0 %v1077
    %v1079 = vpop.xlane.xlu0 %1078
    %v1080 = vsel %vm237, %v1075, -inf
    %1081 = vmax.xlane.f32.xlu0 %v1080
    %v1082 = vpop.xlane.xlu0 %1081
    %v1083 = vsub.f32 %v1047, %v1079
    %v1084 = vsub.f32 %v1075, %v1082
    %v1085 = vmul.f32 %v1083, 1.442695
    %v1086 = vpow.pop %v1085
    %v1087 = vmul.f32 %v1084, 1.442695
    %v1088 = vpow.pop %v1087
    %v1089 = vsel %vm237, %v1086, 0.0
    %1090 = vadd.xlane.f32.xlu0 %v1089
    %v1091 = vpop.xlane.xlu0 %1090
    %v1092 = vsel %vm237, %v1088, 0.0
    %1093 = vadd.xlane.f32.xlu0 %v1092
    %v1094 = vpop.xlane.xlu0 %1093
    %v1095 = vrcp.pop %v1091
    %v1096 = vrcp.pop %v1094
    %v1097 = vmul.f32 %v1086, %v1095
    %v1098 = vmul.f32 %v1088, %v1096
    %1099 = vrot.lane.b32.xlu0 %v940, 80
    %v1100 = vpop.permute.xlu0 %1099
    %v1103 = vsel %vm237, %v1097, 0
    %1105 = vmatpush.msra.mxu0 0.0
    %1106 = vmatpush.msra.mxu0 0.0
    %1107 = vmatpush.msra.mxu0 0.0
    %1108 = vmatpush.msra.mxu0 0.0
    %1109 = vmatpush.msra.mxu0 0.0
    %1110 = vmatpush.msra.mxu0 0.0
    %1111 = vmatpush.msra.mxu0 0.0
    %1112 = vmatpush.msra.mxu0 0.0
    %1113 = vmatpush.msra.mxu0 0.0
    %1114 = vmatpush.msra.mxu0 0.0
    %1115 = vmatpush.msra.mxu0 0.0
    %1116 = vmatpush.msra.mxu0 0.0
    %1117 = vmatpush.msra.mxu0 0.0
    %1118 = vmatpush.msra.mxu0 0.0
    %1119 = vmatpush.msra.mxu0 0.0
    %1120 = vmatpush.msra.mxu0 %v1100
    %1121 = vmatmul.f32.gmra.mxu0 %v1103
    %v1122 = vpop.f32.mrf.mxu0
    %v1123 = vadd.f32 0.0, %v1122
    %1124 = vdwg.mxu0
    %1125 = vrot.lane.b32.xlu0 %v943, 80
    %v1126 = vpop.permute.xlu0 %1125
    %v1129 = vsel %vm237, %v1098, 0
    %1131 = vmatpush.msra.mxu0 0.0
    %1132 = vmatpush.msra.mxu0 0.0
    %1133 = vmatpush.msra.mxu0 0.0
    %1134 = vmatpush.msra.mxu0 0.0
    %1135 = vmatpush.msra.mxu0 0.0
    %1136 = vmatpush.msra.mxu0 0.0
    %1137 = vmatpush.msra.mxu0 0.0
    %1138 = vmatpush.msra.mxu0 0.0
    %1139 = vmatpush.msra.mxu0 0.0
    %1140 = vmatpush.msra.mxu0 0.0
    %1141 = vmatpush.msra.mxu0 0.0
    %1142 = vmatpush.msra.mxu0 0.0
    %1143 = vmatpush.msra.mxu0 0.0
    %1144 = vmatpush.msra.mxu0 0.0
    %1145 = vmatpush.msra.mxu0 0.0
    %1146 = vmatpush.msra.mxu0 %v1126
    %1147 = vmatmul.f32.gmra.mxu0 %v1129
    %v1148 = vpop.f32.mrf.mxu0
    %v1149 = vadd.f32 0.0, %v1148
    %1150 = vdwg.mxu0
    %1151 = vrot.lane.b32.xlu0 %v940, 96
    %v1152 = vpop.permute.xlu0 %1151
    %v1155 = vsel %vm237, %v1019, 0
    %1157 = vmatpush.msra.mxu0 0.0
    %1158 = vmatpush.msra.mxu0 0.0
    %1159 = vmatpush.msra.mxu0 0.0
    %1160 = vmatpush.msra.mxu0 0.0
    %1161 = vmatpush.msra.mxu0 0.0
    %1162 = vmatpush.msra.mxu0 0.0
    %1163 = vmatpush.msra.mxu0 0.0
    %1164 = vmatpush.msra.mxu0 0.0
    %1165 = vmatpush.msra.mxu0 0.0
    %1166 = vmatpush.msra.mxu0 0.0
    %1167 = vmatpush.msra.mxu0 0.0
    %1168 = vmatpush.msra.mxu0 0.0
    %1169 = vmatpush.msra.mxu0 0.0
    %1170 = vmatpush.msra.mxu0 0.0
    %1171 = vmatpush.msra.mxu0 0.0
    %1172 = vmatpush.msra.mxu0 %v1152
    %1173 = vmatmul.f32.gmra.mxu0 %v1155
    %v1174 = vpop.f32.mrf.mxu0
    %v1175 = vadd.f32 %v1123, %v1174
    %1176 = vdwg.mxu0
    %1177 = vrot.lane.b32.xlu0 %v943, 96
    %v1178 = vpop.permute.xlu0 %1177
    %v1181 = vsel %vm237, %v1020, 0
    %1183 = vmatpush.msra.mxu0 0.0
    %1184 = vmatpush.msra.mxu0 0.0
    %1185 = vmatpush.msra.mxu0 0.0
    %1186 = vmatpush.msra.mxu0 0.0
    %1187 = vmatpush.msra.mxu0 0.0
    %1188 = vmatpush.msra.mxu0 0.0
    %1189 = vmatpush.msra.mxu0 0.0
    %1190 = vmatpush.msra.mxu0 0.0
    %1191 = vmatpush.msra.mxu0 0.0
    %1192 = vmatpush.msra.mxu0 0.0
    %1193 = vmatpush.msra.mxu0 0.0
    %1194 = vmatpush.msra.mxu0 0.0
    %1195 = vmatpush.msra.mxu0 0.0
    %1196 = vmatpush.msra.mxu0 0.0
    %1197 = vmatpush.msra.mxu0 0.0
    %1198 = vmatpush.msra.mxu0 %v1178
    %1199 = vmatmul.f32.gmra.mxu0 %v1181
    %v1200 = vpop.f32.mrf.mxu0
    %v1201 = vadd.f32 %v1149, %v1200
    %1202 = vdwg.mxu0
    %1203 = vrot.lane.b32.xlu0 %v940, 120
    %v1204 = vpop.permute.xlu0 %1203
    %1205 = vrot.lane.b32.xlu0 %v940, 104
    %v1206 = vpop.permute.xlu0 %1205
    %v1207 = vsel %vm185, %v1204, 0
    %v1209 = vsel %vm185, %v1206, 0
    %1211 = vmatpush.xpose.msra.mxu0 0.0
    %1212 = vmatpush.xpose.msra.mxu0 0.0
    %1213 = vmatpush.xpose.msra.mxu0 0.0
    %1214 = vmatpush.xpose.msra.mxu0 0.0
    %1215 = vmatpush.xpose.msra.mxu0 0.0
    %1216 = vmatpush.xpose.msra.mxu0 0.0
    %1217 = vmatpush.xpose.msra.mxu0 0.0
    %1218 = vmatpush.xpose.msra.mxu0 0.0
    %1219 = vmatpush.xpose.msra.mxu0 0.0
    %1220 = vmatpush.xpose.msra.mxu0 0.0
    %1221 = vmatpush.xpose.msra.mxu0 0.0
    %1222 = vmatpush.xpose.msra.mxu0 0.0
    %1223 = vmatpush.xpose.msra.mxu0 0.0
    %1224 = vmatpush.xpose.msra.mxu0 0.0
    %1225 = vmatpush.xpose.msra.mxu0 0.0
    %1226 = vmatpush.xpose.msra.mxu0 %v1209
    %1227 = vmatmul.f32.gmra.mxu0 %v1207
    %v1228 = vpop.f32.mrf.mxu0
    %v1229 = vadd.f32 0.0, %v1228
    %1230 = vdwg.mxu0
    %1231 = vrot.lane.b32.xlu0 %v943, 120
    %v1232 = vpop.permute.xlu0 %1231
    %1233 = vrot.lane.b32.xlu0 %v943, 104
    %v1234 = vpop.permute.xlu0 %1233
    %v1235 = vsel %vm185, %v1232, 0
    %v1237 = vsel %vm185, %v1234, 0
    %1239 = vmatpush.xpose.msra.mxu0 0.0
    %1240 = vmatpush.xpose.msra.mxu0 0.0
    %1241 = vmatpush.xpose.msra.mxu0 0.0
    %1242 = vmatpush.xpose.msra.mxu0 0.0
    %1243 = vmatpush.xpose.msra.mxu0 0.0
    %1244 = vmatpush.xpose.msra.mxu0 0.0
    %1245 = vmatpush.xpose.msra.mxu0 0.0
    %1246 = vmatpush.xpose.msra.mxu0 0.0
    %1247 = vmatpush.xpose.msra.mxu0 0.0
    %1248 = vmatpush.xpose.msra.mxu0 0.0
    %1249 = vmatpush.xpose.msra.mxu0 0.0
    %1250 = vmatpush.xpose.msra.mxu0 0.0
    %1251 = vmatpush.xpose.msra.mxu0 0.0
    %1252 = vmatpush.xpose.msra.mxu0 0.0
    %1253 = vmatpush.xpose.msra.mxu0 0.0
    %1254 = vmatpush.xpose.msra.mxu0 %v1237
    %1255 = vmatmul.f32.gmra.mxu0 %v1235
    %v1256 = vpop.f32.mrf.mxu0
    %v1257 = vadd.f32 0.0, %v1256
    %1258 = vdwg.mxu0
    %v1259 = vsel %vm237, %v1229, -inf
    %1260 = vmax.xlane.f32.xlu0 %v1259
    %v1261 = vpop.xlane.xlu0 %1260
    %v1262 = vsel %vm237, %v1257, -inf
    %1263 = vmax.xlane.f32.xlu0 %v1262
    %v1264 = vpop.xlane.xlu0 %1263
    %v1265 = vsub.f32 %v1229, %v1261
    %v1266 = vsub.f32 %v1257, %v1264
    %v1267 = vmul.f32 %v1265, 1.442695
    %v1268 = vpow.pop %v1267
    %v1269 = vmul.f32 %v1266, 1.442695
    %v1270 = vpow.pop %v1269
    %v1271 = vsel %vm237, %v1268, 0.0
    %1272 = vadd.xlane.f32.xlu0 %v1271
    %v1273 = vpop.xlane.xlu0 %1272
    %v1274 = vsel %vm237, %v1270, 0.0
    %1275 = vadd.xlane.f32.xlu0 %v1274
    %v1276 = vpop.xlane.xlu0 %1275
    %v1277 = vrcp.pop %v1273
    %v1278 = vrcp.pop %v1276
    %v1279 = vmul.f32 %v1268, %v1277
    %v1280 = vmul.f32 %v1270, %v1278
    %1281 = vrot.lane.b32.xlu0 %v940, 64
    %v1282 = vpop.permute.xlu0 %1281
    %v1285 = vsel %vm237, %v1279, 0
    %1287 = vmatpush.msra.mxu0 0.0
    %1288 = vmatpush.msra.mxu0 0.0
    %1289 = vmatpush.msra.mxu0 0.0
    %1290 = vmatpush.msra.mxu0 0.0
    %1291 = vmatpush.msra.mxu0 0.0
    %1292 = vmatpush.msra.mxu0 0.0
    %1293 = vmatpush.msra.mxu0 0.0
    %1294 = vmatpush.msra.mxu0 0.0
    %1295 = vmatpush.msra.mxu0 0.0
    %1296 = vmatpush.msra.mxu0 0.0
    %1297 = vmatpush.msra.mxu0 0.0
    %1298 = vmatpush.msra.mxu0 0.0
    %1299 = vmatpush.msra.mxu0 0.0
    %1300 = vmatpush.msra.mxu0 0.0
    %1301 = vmatpush.msra.mxu0 0.0
    %1302 = vmatpush.msra.mxu0 %v1282
    %1303 = vmatmul.f32.gmra.mxu0 %v1285
    %v1304 = vpop.f32.mrf.mxu0
    %v1305 = vadd.f32 0.0, %v1304
    %1306 = vdwg.mxu0
    %1307 = vrot.lane.b32.xlu0 %v943, 64
    %v1308 = vpop.permute.xlu0 %1307
    %v1311 = vsel %vm237, %v1280, 0
    %1313 = vmatpush.msra.mxu0 0.0
    %1314 = vmatpush.msra.mxu0 0.0
    %1315 = vmatpush.msra.mxu0 0.0
    %1316 = vmatpush.msra.mxu0 0.0
    %1317 = vmatpush.msra.mxu0 0.0
    %1318 = vmatpush.msra.mxu0 0.0
    %1319 = vmatpush.msra.mxu0 0.0
    %1320 = vmatpush.msra.mxu0 0.0
    %1321 = vmatpush.msra.mxu0 0.0
    %1322 = vmatpush.msra.mxu0 0.0
    %1323 = vmatpush.msra.mxu0 0.0
    %1324 = vmatpush.msra.mxu0 0.0
    %1325 = vmatpush.msra.mxu0 0.0
    %1326 = vmatpush.msra.mxu0 0.0
    %1327 = vmatpush.msra.mxu0 0.0
    %1328 = vmatpush.msra.mxu0 %v1308
    %1329 = vmatmul.f32.gmra.mxu0 %v1311
    %v1330 = vpop.f32.mrf.mxu0
    %v1331 = vadd.f32 0.0, %v1330
    %1332 = vdwg.mxu0
    %v1333 = vadd.f32 %v1175, %v1305
    %v1334 = vadd.f32 %v1201, %v1331
    %1335 = vrot.lane.b32.xlu0 %v940, 116
    %v1336 = vpop.permute.xlu0 %1335
    %1337 = vrot.lane.b32.xlu0 %v940, 100
    %v1338 = vpop.permute.xlu0 %1337
    %v1339 = vsel %vm185, %v1336, 0
    %v1341 = vsel %vm185, %v1338, 0
    %1343 = vmatpush.xpose.msra.mxu0 0.0
    %1344 = vmatpush.xpose.msra.mxu0 0.0
    %1345 = vmatpush.xpose.msra.mxu0 0.0
    %1346 = vmatpush.xpose.msra.mxu0 0.0
    %1347 = vmatpush.xpose.msra.mxu0 0.0
    %1348 = vmatpush.xpose.msra.mxu0 0.0
    %1349 = vmatpush.xpose.msra.mxu0 0.0
    %1350 = vmatpush.xpose.msra.mxu0 0.0
    %1351 = vmatpush.xpose.msra.mxu0 0.0
    %1352 = vmatpush.xpose.msra.mxu0 0.0
    %1353 = vmatpush.xpose.msra.mxu0 0.0
    %1354 = vmatpush.xpose.msra.mxu0 0.0
    %1355 = vmatpush.xpose.msra.mxu0 0.0
    %1356 = vmatpush.xpose.msra.mxu0 0.0
    %1357 = vmatpush.xpose.msra.mxu0 0.0
    %1358 = vmatpush.xpose.msra.mxu0 %v1341
    %1359 = vmatmul.f32.gmra.mxu0 %v1339
    %v1360 = vpop.f32.mrf.mxu0
    %v1361 = vadd.f32 0.0, %v1360
    %1362 = vdwg.mxu0
    %1363 = vrot.lane.b32.xlu0 %v943, 116
    %v1364 = vpop.permute.xlu0 %1363
    %1365 = vrot.lane.b32.xlu0 %v943, 100
    %v1366 = vpop.permute.xlu0 %1365
    %v1367 = vsel %vm185, %v1364, 0
    %v1369 = vsel %vm185, %v1366, 0
    %1371 = vmatpush.xpose.msra.mxu0 0.0
    %1372 = vmatpush.xpose.msra.mxu0 0.0
    %1373 = vmatpush.xpose.msra.mxu0 0.0
    %1374 = vmatpush.xpose.msra.mxu0 0.0
    %1375 = vmatpush.xpose.msra.mxu0 0.0
    %1376 = vmatpush.xpose.msra.mxu0 0.0
    %1377 = vmatpush.xpose.msra.mxu0 0.0
    %1378 = vmatpush.xpose.msra.mxu0 0.0
    %1379 = vmatpush.xpose.msra.mxu0 0.0
    %1380 = vmatpush.xpose.msra.mxu0 0.0
    %1381 = vmatpush.xpose.msra.mxu0 0.0
    %1382 = vmatpush.xpose.msra.mxu0 0.0
    %1383 = vmatpush.xpose.msra.mxu0 0.0
    %1384 = vmatpush.xpose.msra.mxu0 0.0
    %1385 = vmatpush.xpose.msra.mxu0 0.0
    %1386 = vmatpush.xpose.msra.mxu0 %v1369
    %1387 = vmatmul.f32.gmra.mxu0 %v1367
    %v1388 = vpop.f32.mrf.mxu0
    %v1389 = vadd.f32 0.0, %v1388
    %1390 = vdwg.mxu0
    %v1391 = vsel %vm237, %v1361, -inf
    %1392 = vmax.xlane.f32.xlu0 %v1391
    %v1393 = vpop.xlane.xlu0 %1392
    %v1394 = vsel %vm237, %v1389, -inf
    %1395 = vmax.xlane.f32.xlu0 %v1394
    %v1396 = vpop.xlane.xlu0 %1395
    %v1397 = vsub.f32 %v1361, %v1393
    %v1398 = vsub.f32 %v1389, %v1396
    %v1399 = vmul.f32 %v1397, 1.442695
    %v1400 = vpow.pop %v1399
    %v1401 = vmul.f32 %v1398, 1.442695
    %v1402 = vpow.pop %v1401
    %v1403 = vsel %vm237, %v1400, 0.0
    %1404 = vadd.xlane.f32.xlu0 %v1403
    %v1405 = vpop.xlane.xlu0 %1404
    %v1406 = vsel %vm237, %v1402, 0.0
    %1407 = vadd.xlane.f32.xlu0 %v1406
    %v1408 = vpop.xlane.xlu0 %1407
    %v1409 = vrcp.pop %v1405
    %v1410 = vrcp.pop %v1408
    %v1411 = vmul.f32 %v1400, %v1409
    %v1412 = vmul.f32 %v1402, %v1410
    %1413 = vrot.lane.b32.xlu0 %v940, 48
    %v1414 = vpop.permute.xlu0 %1413
    %v1417 = vsel %vm237, %v1411, 0
    %1419 = vmatpush.msra.mxu0 0.0
    %1420 = vmatpush.msra.mxu0 0.0
    %1421 = vmatpush.msra.mxu0 0.0
    %1422 = vmatpush.msra.mxu0 0.0
    %1423 = vmatpush.msra.mxu0 0.0
    %1424 = vmatpush.msra.mxu0 0.0
    %1425 = vmatpush.msra.mxu0 0.0
    %1426 = vmatpush.msra.mxu0 0.0
    %1427 = vmatpush.msra.mxu0 0.0
    %1428 = vmatpush.msra.mxu0 0.0
    %1429 = vmatpush.msra.mxu0 0.0
    %1430 = vmatpush.msra.mxu0 0.0
    %1431 = vmatpush.msra.mxu0 0.0
    %1432 = vmatpush.msra.mxu0 0.0
    %1433 = vmatpush.msra.mxu0 0.0
    %1434 = vmatpush.msra.mxu0 %v1414
    %1435 = vmatmul.f32.gmra.mxu0 %v1417
    %v1436 = vpop.f32.mrf.mxu0
    %v1437 = vadd.f32 0.0, %v1436
    %1438 = vdwg.mxu0
    %1439 = vrot.lane.b32.xlu0 %v943, 48
    %v1440 = vpop.permute.xlu0 %1439
    %v1443 = vsel %vm237, %v1412, 0
    %1445 = vmatpush.msra.mxu0 0.0
    %1446 = vmatpush.msra.mxu0 0.0
    %1447 = vmatpush.msra.mxu0 0.0
    %1448 = vmatpush.msra.mxu0 0.0
    %1449 = vmatpush.msra.mxu0 0.0
    %1450 = vmatpush.msra.mxu0 0.0
    %1451 = vmatpush.msra.mxu0 0.0
    %1452 = vmatpush.msra.mxu0 0.0
    %1453 = vmatpush.msra.mxu0 0.0
    %1454 = vmatpush.msra.mxu0 0.0
    %1455 = vmatpush.msra.mxu0 0.0
    %1456 = vmatpush.msra.mxu0 0.0
    %1457 = vmatpush.msra.mxu0 0.0
    %1458 = vmatpush.msra.mxu0 0.0
    %1459 = vmatpush.msra.mxu0 0.0
    %1460 = vmatpush.msra.mxu0 %v1440
    %1461 = vmatmul.f32.gmra.mxu0 %v1443
    %v1462 = vpop.f32.mrf.mxu0
    %v1463 = vadd.f32 0.0, %v1462
    %1464 = vdwg.mxu0
    %v1465 = vadd.f32 %v1333, %v1437
    %v1466 = vadd.f32 %v1334, %v1463
    %v1468 = vperm.slane %v900, 0
    %v1470 = vadd.f32 %v1465, %v1468
    %v1471 = vadd.f32 %v1466, %v1468
    %v1472 = vadd.f32 %v895, %v1470
    %v1473 = vadd.f32 %v896, %v1471
    %v1474 = vsel %vm152, %v1472, 0.0
    %1475 = vadd.xlane.f32.xlu0 %v1474
    %v1476 = vpop.xlane.xlu0 %1475
    %v1477 = vsel %vm152, %v1473, 0.0
    %1478 = vadd.xlane.f32.xlu0 %v1477
    %v1479 = vpop.xlane.xlu0 %1478
    %v1480 = vmul.f32 %v1476, %v725
    %v1481 = vmul.f32 %v1479, %v725
    %v1482 = vsub.f32 %v1472, %v1480
    %v1483 = vsub.f32 %v1473, %v1481
    %v1484 = vmul.f32 %v1482, %v1482
    %v1485 = vmul.f32 %v1483, %v1483
    %v1486 = vsel %vm152, %v1484, 0.0
    %1487 = vadd.xlane.f32.xlu0 %v1486
    %v1488 = vpop.xlane.xlu0 %1487
    %v1489 = vsel %vm152, %v1485, 0.0
    %1490 = vadd.xlane.f32.xlu0 %v1489
    %v1491 = vpop.xlane.xlu0 %1490
    %v1492 = vmul.f32 %v1488, %v725
    %v1493 = vmul.f32 %v1491, %v725
    %v1494 = vadd.f32 %v1492, 1e-05
    %v1495 = vadd.f32 %v1493, 1e-05
    %v1496 = vrsqrt.pop %v1494
    %v1497 = vmul.f32 %v1496, %v1494
    %v1498 = vmul.f32 %v1497, %v1496
    %v1499 = vmul.f32 0.5, %v1498
    %v1500 = vsub.f32 1.5, %v1499
    %v1501 = vmul.f32 %v1496, %v1500
    %vm1502 = vweird.f32 %v1494
    %vm1503 = vweird.f32 %v1496
    %vm1504 = vmor %vm1502, %vm1503
    %v1505 = vsel %vm1504, %v1496, %v1501
    %v1506 = vrsqrt.pop %v1495
    %v1507 = vmul.f32 %v1506, %v1495
    %v1508 = vmul.f32 %v1507, %v1506
    %v1509 = vmul.f32 0.5, %v1508
    %v1510 = vsub.f32 1.5, %v1509
    %v1511 = vmul.f32 %v1506, %v1510
    %vm1512 = vweird.f32 %v1495
    %vm1513 = vweird.f32 %v1506
    %vm1514 = vmor %vm1512, %vm1513
    %v1515 = vsel %vm1514, %v1506, %v1511
    %v1516 = vmul.f32 %v1482, %v1505
    %v1517 = vmul.f32 %v1483, %v1515
    %v1519 = vperm.slane %v901, 0
    %v1521 = vmul.f32 %v1516, %v1519
    %v1522 = vmul.f32 %v1517, %v1519
    %v1524 = vperm.slane %v902, 0
    %v1526 = vadd.f32 %v1521, %v1524
    %v1527 = vadd.f32 %v1522, %v1524
    %v1529 = vperm.slane %v905, 0
    %v1532 = vsel %vm152, %v1526, 0
    %v1535 = vsel %vm152, %v1527, 0
    %1537 = vmatpush.msra.mxu0 0.0
    %1538 = vmatpush.msra.mxu0 0.0
    %1539 = vmatpush.msra.mxu0 0.0
    %1540 = vmatpush.msra.mxu0 0.0
    %1541 = vmatpush.msra.mxu0 0.0
    %1542 = vmatpush.msra.mxu0 0.0
    %1543 = vmatpush.msra.mxu0 0.0
    %1544 = vmatpush.msra.mxu0 0.0
    %1545 = vmatpush.msra.mxu0 0.0
    %1546 = vmatpush.msra.mxu0 0.0
    %1547 = vmatpush.msra.mxu0 0.0
    %1548 = vmatpush.msra.mxu0 0.0
    %1549 = vmatpush.msra.mxu0 0.0
    %1550 = vmatpush.msra.mxu0 0.0
    %1551 = vmatpush.msra.mxu0 %v904
    %1552 = vmatpush.msra.mxu0 %v903
    %1553 = vmatmul.f32.gmra.mxu0 %v1532
    %v1554 = vpop.f32.mrf.mxu0
    %v1555 = vadd.f32 %v1529, %v1554
    %1556 = vmatmul.f32.gmra.mxu0 %v1535
    %v1557 = vpop.f32.mrf.mxu0
    %v1558 = vadd.f32 %v1529, %v1557
    %1559 = vdwg.mxu0
    %v1560 = vmax.f32 %v1555, 0.0
    %v1561 = vmax.f32 %v1558, 0.0
    %v1563 = vperm.slane %v910, 0
    %v1566 = vsel %vm811, %v1560, 0
    %v1569 = vsel %vm811, %v1561, 0
    %1571 = vmatpush.msra.mxu0 0.0
    %1572 = vmatpush.msra.mxu0 0.0
    %1573 = vmatpush.msra.mxu0 0.0
    %1574 = vmatpush.msra.mxu0 0.0
    %1575 = vmatpush.msra.mxu0 0.0
    %1576 = vmatpush.msra.mxu0 0.0
    %1577 = vmatpush.msra.mxu0 0.0
    %1578 = vmatpush.msra.mxu0 0.0
    %1579 = vmatpush.msra.mxu0 0.0
    %1580 = vmatpush.msra.mxu0 0.0
    %1581 = vmatpush.msra.mxu0 0.0
    %1582 = vmatpush.msra.mxu0 0.0
    %1583 = vmatpush.msra.mxu0 %v909
    %1584 = vmatpush.msra.mxu0 %v908
    %1585 = vmatpush.msra.mxu0 %v907
    %1586 = vmatpush.msra.mxu0 %v906
    %1587 = vmatmul.f32.gmra.mxu0 %v1566
    %v1588 = vpop.f32.mrf.mxu0
    %v1589 = vadd.f32 %v1563, %v1588
    %1590 = vmatmul.f32.gmra.mxu0 %v1569
    %v1591 = vpop.f32.mrf.mxu0
    %v1592 = vadd.f32 %v1563, %v1591
    %1593 = vdwg.mxu0
    %v1594 = vadd.f32 %v1526, %v1589
    %v1595 = vadd.f32 %v1527, %v1592
    %v1596 = vsel %vm152, %v1594, 0.0
    %1597 = vadd.xlane.f32.xlu0 %v1596
    %v1598 = vpop.xlane.xlu0 %1597
    %v1599 = vsel %vm152, %v1595, 0.0
    %1600 = vadd.xlane.f32.xlu0 %v1599
    %v1601 = vpop.xlane.xlu0 %1600
    %v1602 = vmul.f32 %v1598, %v725
    %v1603 = vmul.f32 %v1601, %v725
    %v1604 = vsub.f32 %v1594, %v1602
    %v1605 = vsub.f32 %v1595, %v1603
    %v1606 = vmul.f32 %v1604, %v1604
    %v1607 = vmul.f32 %v1605, %v1605
    %v1608 = vsel %vm152, %v1606, 0.0
    %1609 = vadd.xlane.f32.xlu0 %v1608
    %v1610 = vpop.xlane.xlu0 %1609
    %v1611 = vsel %vm152, %v1607, 0.0
    %1612 = vadd.xlane.f32.xlu0 %v1611
    %v1613 = vpop.xlane.xlu0 %1612
    %v1614 = vmul.f32 %v1610, %v725
    %v1615 = vmul.f32 %v1613, %v725
    %v1616 = vadd.f32 %v1614, 1e-05
    %v1617 = vadd.f32 %v1615, 1e-05
    %v1618 = vrsqrt.pop %v1616
    %v1619 = vmul.f32 %v1618, %v1616
    %v1620 = vmul.f32 %v1619, %v1618
    %v1621 = vmul.f32 0.5, %v1620
    %v1622 = vsub.f32 1.5, %v1621
    %v1623 = vmul.f32 %v1618, %v1622
    %vm1624 = vweird.f32 %v1616
    %vm1625 = vweird.f32 %v1618
    %vm1626 = vmor %vm1624, %vm1625
    %v1627 = vsel %vm1626, %v1618, %v1623
    %v1628 = vrsqrt.pop %v1617
    %v1629 = vmul.f32 %v1628, %v1617
    %v1630 = vmul.f32 %v1629, %v1628
    %v1631 = vmul.f32 0.5, %v1630
    %v1632 = vsub.f32 1.5, %v1631
    %v1633 = vmul.f32 %v1628, %v1632
    %vm1634 = vweird.f32 %v1617
    %vm1635 = vweird.f32 %v1628
    %vm1636 = vmor %vm1634, %vm1635
    %v1637 = vsel %vm1636, %v1628, %v1633
    %v1638 = vmul.f32 %v1604, %v1627
    %v1639 = vmul.f32 %v1605, %v1637
    %v1641 = vperm.slane %v911, 0
    %v1643 = vmul.f32 %v1638, %v1641
    %v1644 = vmul.f32 %v1639, %v1641
    %v1646 = vperm.slane %v912, 0
    %v1648 = vadd.f32 %v1643, %v1646
    %v1649 = vadd.f32 %v1644, %v1646
    %v1650 = vld [vmem:[%s47] sm:$0xff]
    %v1651 = vld [vmem:[%s47 + $0x8] sm:$0xff]
    %v1652 = vld [vmem:[%s47 + $0x10] sm:$0xff]
    %v1653 = vld [vmem:[%s47 + $0x18] sm:$0xff]
    %v1654 = vld [vmem:[%s49] sm:$0x3]
    %v1655 = vld [vmem:[%s51] sm:$0xff]
    %v1656 = vld [vmem:[%s51 + $0x8] sm:$0xff]
    %v1657 = vld [vmem:[%s51 + $0x10] sm:$0xff]
    %v1658 = vld [vmem:[%s51 + $0x18] sm:$0xff]
    %v1659 = vld [vmem:[%s51 + $0x20] sm:$0xff]
    %v1660 = vld [vmem:[%s51 + $0x28] sm:$0xff]
    %v1661 = vld [vmem:[%s51 + $0x30] sm:$0xff]
    %v1662 = vld [vmem:[%s51 + $0x38] sm:$0xff]
    %v1663 = vld [vmem:[%s51 + $0x40] sm:$0xff]
    %v1664 = vld [vmem:[%s51 + $0x48] sm:$0xff]
    %v1665 = vld [vmem:[%s51 + $0x50] sm:$0xff]
    %v1666 = vld [vmem:[%s51 + $0x58] sm:$0xff]
    %v1667 = vld [vmem:[%s51 + $0x60] sm:$0xff]
    %v1668 = vld [vmem:[%s51 + $0x68] sm:$0xff]
    %v1669 = vld [vmem:[%s51 + $0x70] sm:$0xff]
    %v1670 = vld [vmem:[%s51 + $0x78] sm:$0xff]
    %v1672 = vperm.slane %v1654, 0
    %v1673 = vperm.slane %v1654, 1
    %v1677 = vsel %vm152, %v1648, 0
    %v1680 = vsel %vm152, %v1649, 0
    %1682 = vmatpush.msra.mxu0 0.0
    %1683 = vmatpush.msra.mxu0 0.0
    %1684 = vmatpush.msra.mxu0 0.0
    %1685 = vmatpush.msra.mxu0 0.0
    %1686 = vmatpush.msra.mxu0 0.0
    %1687 = vmatpush.msra.mxu0 0.0
    %1688 = vmatpush.msra.mxu0 0.0
    %1689 = vmatpush.msra.mxu0 0.0
    %1690 = vmatpush.msra.mxu0 0.0
    %1691 = vmatpush.msra.mxu0 0.0
    %1692 = vmatpush.msra.mxu0 0.0
    %1693 = vmatpush.msra.mxu0 0.0
    %1694 = vmatpush.msra.mxu0 0.0
    %1695 = vmatpush.msra.mxu0 0.0
    %1696 = vmatpush.msra.mxu0 %v1652
    %1697 = vmatpush.msra.mxu0 %v1650
    %1698 = vmatmul.f32.gmra.mxu0 %v1677
    %v1699 = vpop.f32.mrf.mxu0
    %v1700 = vadd.f32 %v1672, %v1699
    %1701 = vmatmul.f32.gmra.mxu0 %v1680
    %v1702 = vpop.f32.mrf.mxu0
    %v1703 = vadd.f32 %v1672, %v1702
    %1704 = vdwg.mxu0
    %1705 = vmatpush.msra.mxu0 0.0
    %1706 = vmatpush.msra.mxu0 0.0
    %1707 = vmatpush.msra.mxu0 0.0
    %1708 = vmatpush.msra.mxu0 0.0
    %1709 = vmatpush.msra.mxu0 0.0
    %1710 = vmatpush.msra.mxu0 0.0
    %1711 = vmatpush.msra.mxu0 0.0
    %1712 = vmatpush.msra.mxu0 0.0
    %1713 = vmatpush.msra.mxu0 0.0
    %1714 = vmatpush.msra.mxu0 0.0
    %1715 = vmatpush.msra.mxu0 0.0
    %1716 = vmatpush.msra.mxu0 0.0
    %1717 = vmatpush.msra.mxu0 0.0
    %1718 = vmatpush.msra.mxu0 0.0
    %1719 = vmatpush.msra.mxu0 %v1653
    %1720 = vmatpush.msra.mxu0 %v1651
    %1721 = vmatmul.f32.gmra.mxu0 %v1677
    %v1722 = vpop.f32.mrf.mxu0
    %v1723 = vadd.f32 %v1673, %v1722
    %1724 = vmatmul.f32.gmra.mxu0 %v1680
    %v1725 = vpop.f32.mrf.mxu0
    %v1726 = vadd.f32 %v1673, %v1725
    %1727 = vdwg.mxu0
    %v1728 = vxor.u32 %v1700, 2147483648
    %v1729 = vxor.u32 %v1703, 2147483648
    %v1730 = vmul.f32 %v1728, 1.442695
    %v1731 = vpow.pop %v1730
    %v1732 = vmul.f32 %v1729, 1.442695
    %v1733 = vpow.pop %v1732
    %v1734 = vadd.f32 %v1731, 1.0
    %v1735 = vadd.f32 %v1733, 1.0
    %v1736 = vrcp.pop %v1734
    %v1737 = vmul.f32 %v1734, %v1736
    %v1738 = vsub.f32 1.0, %v1737
    %v1739 = vmul.f32 %v1736, %v1738
    %v1740 = vadd.f32 %v1736, %v1739
    %vm1741 = vweird.f32 %v1734
    %vm1742 = vweird.f32 %v1736
    %vm1743 = vmor %vm1741, %vm1742
    %v1744 = vsel %vm1743, %v1736, %v1740
    %v1745 = vand.u32 2147483647, %v1734
    %vm1746 = vcmp.eq.f32.partialorder %v1745, 8.507059e+37
    %v1747 = vand.u32 %v1734, 2147483648
    %v1748 = vor.u32 1.1754944e-38, %v1747
    %v1749 = vsel %vm1746, %v1748, %v1744
    %v1750 = vmul.f32 1.0, %v1749
    %v1751 = vrcp.pop %v1735
    %v1752 = vmul.f32 %v1735, %v1751
    %v1753 = vsub.f32 1.0, %v1752
    %v1754 = vmul.f32 %v1751, %v1753
    %v1755 = vadd.f32 %v1751, %v1754
    %vm1756 = vweird.f32 %v1735
    %vm1757 = vweird.f32 %v1751
    %vm1758 = vmor %vm1756, %vm1757
    %v1759 = vsel %vm1758, %v1751, %v1755
    %v1760 = vand.u32 2147483647, %v1735
    %vm1761 = vcmp.eq.f32.partialorder %v1760, 8.507059e+37
    %v1762 = vand.u32 %v1735, 2147483648
    %v1763 = vor.u32 1.1754944e-38, %v1762
    %v1764 = vsel %vm1761, %v1763, %v1759
    %v1765 = vmul.f32 1.0, %v1764
    %v1766 = vtanh.pop %v1700
    %v1767 = vtanh.pop %v1703
    %v1768 = vmul.f32 %v1750, 0.0
    %v1769 = vmul.f32 %v1765, 0.0
    %1772 = vrot.lane.b32.xlu0 %v1766, 64
    %v1773 = vpop.permute.xlu0 %1772
    %1774 = vrot.lane.b32.xlu0 %v1767, 64
    %v1775 = vpop.permute.xlu0 %1774
    %v1778 = vmul.f32 %v1750, %v1773
    %v1779 = vmul.f32 %v1765, %v1775
    %1782 = vrot.lane.b32.xlu0 %v1778, 32
    %v1783 = vpop.permute.xlu0 %1782
    %1784 = vrot.lane.b32.xlu0 %v1779, 32
    %v1785 = vpop.permute.xlu0 %1784
    %v1788 = vadd.f32 %v1768, %v1783
    %v1789 = vadd.f32 %v1769, %v1785
    %v1790 = vtanh.pop %v1788
    %v1791 = vtanh.pop %v1789
    %1794 = vrot.lane.b32.xlu0 %v1790, 64
    %v1795 = vpop.permute.xlu0 %1794
    %1796 = vrot.lane.b32.xlu0 %v1791, 64
    %v1797 = vpop.permute.xlu0 %1796
    %v1800 = vmul.f32 %v1750, %v1795
    %v1801 = vmul.f32 %v1765, %v1797
    %v1802 = vxor.u32 %v1723, 2147483648
    %v1803 = vxor.u32 %v1726, 2147483648
    %v1804 = vmul.f32 %v1802, 1.442695
    %v1805 = vpow.pop %v1804
    %v1806 = vmul.f32 %v1803, 1.442695
    %v1807 = vpow.pop %v1806
    %v1808 = vadd.f32 %v1805, 1.0
    %v1809 = vadd.f32 %v1807, 1.0
    %v1810 = vrcp.pop %v1808
    %v1811 = vmul.f32 %v1808, %v1810
    %v1812 = vsub.f32 1.0, %v1811
    %v1813 = vmul.f32 %v1810, %v1812
    %v1814 = vadd.f32 %v1810, %v1813
    %vm1815 = vweird.f32 %v1808
    %vm1816 = vweird.f32 %v1810
    %vm1817 = vmor %vm1815, %vm1816
    %v1818 = vsel %vm1817, %v1810, %v1814
    %v1819 = vand.u32 2147483647, %v1808
    %vm1820 = vcmp.eq.f32.partialorder %v1819, 8.507059e+37
    %v1821 = vand.u32 %v1808, 2147483648
    %v1822 = vor.u32 1.1754944e-38, %v1821
    %v1823 = vsel %vm1820, %v1822, %v1818
    %v1824 = vmul.f32 1.0, %v1823
    %v1825 = vrcp.pop %v1809
    %v1826 = vmul.f32 %v1809, %v1825
    %v1827 = vsub.f32 1.0, %v1826
    %v1828 = vmul.f32 %v1825, %v1827
    %v1829 = vadd.f32 %v1825, %v1828
    %vm1830 = vweird.f32 %v1809
    %vm1831 = vweird.f32 %v1825
    %vm1832 = vmor %vm1830, %vm1831
    %v1833 = vsel %vm1832, %v1825, %v1829
    %v1834 = vand.u32 2147483647, %v1809
    %vm1835 = vcmp.eq.f32.partialorder %v1834, 8.507059e+37
    %v1836 = vand.u32 %v1809, 2147483648
    %v1837 = vor.u32 1.1754944e-38, %v1836
    %v1838 = vsel %vm1835, %v1837, %v1833
    %v1839 = vmul.f32 1.0, %v1838
    %v1840 = vtanh.pop %v1723
    %v1841 = vtanh.pop %v1726
    %v1842 = vmul.f32 %v1824, 0.0
    %v1843 = vmul.f32 %v1839, 0.0
    %1846 = vrot.lane.b32.xlu0 %v1840, 64
    %v1847 = vpop.permute.xlu0 %1846
    %1848 = vrot.lane.b32.xlu0 %v1841, 64
    %v1849 = vpop.permute.xlu0 %1848
    %v1852 = vmul.f32 %v1824, %v1847
    %v1853 = vmul.f32 %v1839, %v1849
    %1856 = vrot.lane.b32.xlu0 %v1852, 32
    %v1857 = vpop.permute.xlu0 %1856
    %1858 = vrot.lane.b32.xlu0 %v1853, 32
    %v1859 = vpop.permute.xlu0 %1858
    %v1862 = vadd.f32 %v1842, %v1857
    %v1863 = vadd.f32 %v1843, %v1859
    %v1864 = vtanh.pop %v1862
    %v1865 = vtanh.pop %v1863
    %1868 = vrot.lane.b32.xlu0 %v1864, 64
    %v1869 = vpop.permute.xlu0 %1868
    %1870 = vrot.lane.b32.xlu0 %v1865, 64
    %v1871 = vpop.permute.xlu0 %1870
    %v1874 = vmul.f32 %v1824, %v1869
    %v1875 = vmul.f32 %v1839, %v1871
    %v1878 = vrot.slane %v1801, 7
    %vm1879 = vcmask 1041409
    %v1880 = vsel %vm1879, %v1878, %v1800
    %1881 = vrot.lane.b32.xlu0 %v1880, 32
    %v1882 = vpop.permute.xlu0 %1881
    %v1886 = vrot.slane %v1874, 7
    %v1887 = vrot.slane %v1875, 6
    %v1888 = vsel %vm1879, %v1887, %v1886
    %1889 = vrot.lane.b32.xlu0 %v1888, 64
    %v1890 = vpop.permute.xlu0 %1889
    %v1892 = vsel %vm811, %v1882, %v1890
    %1893 = vrot.lane.b32.xlu0 %v1800, 32
    %v1894 = vpop.permute.xlu0 %1893
    %1895 = vrot.lane.b32.xlu0 %v1801, 32
    %v1896 = vpop.permute.xlu0 %1895
    %vm1899 = vcmask 253952
    %1900 = vst.msk [vmem:[#allocation2] sm:$0x1] %vm1899, %v1894
    %1901 = vst.msk [vmem:[#allocation2 + $0x8] sm:$0x1] %vm1899, %v1896
    %1902 = vrot.lane.b32.xlu0 %v1874, 64
    %v1903 = vpop.permute.xlu0 %1902
    %1904 = vrot.lane.b32.xlu0 %v1875, 64
    %v1905 = vpop.permute.xlu0 %1904
    %vm1908 = vcmask 523527
    %1909 = vst.msk [vmem:[#allocation2] sm:$0x80] %vm1908, %v1903
    %1910 = vst.msk [vmem:[#allocation2 + $0x8] sm:$0x80] %vm1908, %v1905
    %vm1911 = vcmask 523264
    %v1913 = vsel %vm1911, %v1892, 0
    %1915 = vmatpush.msra.mxu0 0.0
    %1916 = vmatpush.msra.mxu0 0.0
    %1917 = vmatpush.msra.mxu0 0.0
    %1918 = vmatpush.msra.mxu0 0.0
    %1919 = vmatpush.msra.mxu0 0.0
    %1920 = vmatpush.msra.mxu0 0.0
    %1921 = vmatpush.msra.mxu0 0.0
    %1922 = vmatpush.msra.mxu0 0.0
    %1923 = vmatpush.msra.mxu0 %v1669
    %1924 = vmatpush.msra.mxu0 %v1667
    %1925 = vmatpush.msra.mxu0 %v1665
    %1926 = vmatpush.msra.mxu0 %v1663
    %1927 = vmatpush.msra.mxu0 %v1661
    %1928 = vmatpush.msra.mxu0 %v1659
    %1929 = vmatpush.msra.mxu0 %v1657
    %1930 = vmatpush.msra.mxu0 %v1655
    %1931 = vmatmul.f32.gmra.mxu0 %v1913
    %v1932 = vpop.f32.mrf.mxu0
    %v1933 = vadd.f32 0.0, %v1932
    %1934 = vdwg.mxu0
    %1935 = vmatpush.msra.mxu0 0.0
    %1936 = vmatpush.msra.mxu0 0.0
    %1937 = vmatpush.msra.mxu0 0.0
    %1938 = vmatpush.msra.mxu0 0.0
    %1939 = vmatpush.msra.mxu0 0.0
    %1940 = vmatpush.msra.mxu0 0.0
    %1941 = vmatpush.msra.mxu0 0.0
    %1942 = vmatpush.msra.mxu0 0.0
    %1943 = vmatpush.msra.mxu0 %v1670
    %1944 = vmatpush.msra.mxu0 %v1668
    %1945 = vmatpush.msra.mxu0 %v1666
    %1946 = vmatpush.msra.mxu0 %v1664
    %1947 = vmatpush.msra.mxu0 %v1662
    %1948 = vmatpush.msra.mxu0 %v1660
    %1949 = vmatpush.msra.mxu0 %v1658
    %1950 = vmatpush.msra.mxu0 %v1656
    %1951 = vmatmul.f32.gmra.mxu0 %v1913
    %v1952 = vpop.f32.mrf.mxu0
    %v1953 = vadd.f32 0.0, %v1952
    %1954 = vdwg.mxu0
    %v1956 = vrot.slane %v1933, 7
    %v1959 = vadd.f32 %v1700, %v1956
    %v1960 = vadd.f32 %v1703, %v1933
    %v1962 = vrot.slane %v1953, 2
    %v1963 = vrot.slane %v1953, 3
    %v1966 = vadd.f32 %v1723, %v1962
    %v1967 = vadd.f32 %v1726, %v1963
    %v1968 = vxor.u32 %v1959, 2147483648
    %v1969 = vxor.u32 %v1960, 2147483648
    %v1970 = vmul.f32 %v1968, 1.442695
    %v1971 = vpow.pop %v1970
    %v1972 = vmul.f32 %v1969, 1.442695
    %v1973 = vpow.pop %v1972
    %v1974 = vadd.f32 %v1971, 1.0
    %v1975 = vadd.f32 %v1973, 1.0
    %v1976 = vrcp.pop %v1974
    %v1977 = vmul.f32 %v1974, %v1976
    %v1978 = vsub.f32 1.0, %v1977
    %v1979 = vmul.f32 %v1976, %v1978
    %v1980 = vadd.f32 %v1976, %v1979
    %vm1981 = vweird.f32 %v1974
    %vm1982 = vweird.f32 %v1976
    %vm1983 = vmor %vm1981, %vm1982
    %v1984 = vsel %vm1983, %v1976, %v1980
    %v1985 = vand.u32 2147483647, %v1974
    %vm1986 = vcmp.eq.f32.partialorder %v1985, 8.507059e+37
    %v1987 = vand.u32 %v1974, 2147483648
    %v1988 = vor.u32 1.1754944e-38, %v1987
    %v1989 = vsel %vm1986, %v1988, %v1984
    %v1990 = vmul.f32 1.0, %v1989
    %v1991 = vrcp.pop %v1975
    %v1992 = vmul.f32 %v1975, %v1991
    %v1993 = vsub.f32 1.0, %v1992
    %v1994 = vmul.f32 %v1991, %v1993
    %v1995 = vadd.f32 %v1991, %v1994
    %vm1996 = vweird.f32 %v1975
    %vm1997 = vweird.f32 %v1991
    %vm1998 = vmor %vm1996, %vm1997
    %v1999 = vsel %vm1998, %v1991, %v1995
    %v2000 = vand.u32 2147483647, %v1975
    %vm2001 = vcmp.eq.f32.partialorder %v2000, 8.507059e+37
    %v2002 = vand.u32 %v1975, 2147483648
    %v2003 = vor.u32 1.1754944e-38, %v2002
    %v2004 = vsel %vm2001, %v2003, %v1999
    %v2005 = vmul.f32 1.0, %v2004
    %v2006 = vtanh.pop %v1959
    %v2007 = vtanh.pop %v1960
    %v2010 = vrot.slane %v1788, 7
    %v2011 = vrot.slane %v1789, 7
    %v2014 = vmul.f32 %v1990, %v2010
    %v2015 = vmul.f32 %v2005, %v2011
    %2018 = vrot.lane.b32.xlu0 %v2006, 64
    %v2019 = vpop.permute.xlu0 %2018
    %2020 = vrot.lane.b32.xlu0 %v2007, 64
    %v2021 = vpop.permute.xlu0 %2020
    %v2024 = vmul.f32 %v1990, %v2019
    %v2025 = vmul.f32 %v2005, %v2021
    %2028 = vrot.lane.b32.xlu0 %v2024, 32
    %v2029 = vpop.permute.xlu0 %2028
    %2030 = vrot.lane.b32.xlu0 %v2025, 32
    %v2031 = vpop.permute.xlu0 %2030
    %v2034 = vadd.f32 %v2014, %v2029
    %v2035 = vadd.f32 %v2015, %v2031
    %v2036 = vtanh.pop %v2034
    %v2037 = vtanh.pop %v2035
    %2040 = vrot.lane.b32.xlu0 %v2036, 64
    %v2041 = vpop.permute.xlu0 %2040
    %2042 = vrot.lane.b32.xlu0 %v2037, 64
    %v2043 = vpop.permute.xlu0 %2042
    %v2046 = vmul.f32 %v1990, %v2041
    %v2047 = vmul.f32 %v2005, %v2043
    %v2048 = vxor.u32 %v1966, 2147483648
    %v2049 = vxor.u32 %v1967, 2147483648
    %v2050 = vmul.f32 %v2048, 1.442695
    %v2051 = vpow.pop %v2050
    %v2052 = vmul.f32 %v2049, 1.442695
    %v2053 = vpow.pop %v2052
    %v2054 = vadd.f32 %v2051, 1.0
    %v2055 = vadd.f32 %v2053, 1.0
    %v2056 = vrcp.pop %v2054
    %v2057 = vmul.f32 %v2054, %v2056
    %v2058 = vsub.f32 1.0, %v2057
    %v2059 = vmul.f32 %v2056, %v2058
    %v2060 = vadd.f32 %v2056, %v2059
    %vm2061 = vweird.f32 %v2054
    %vm2062 = vweird.f32 %v2056
    %vm2063 = vmor %vm2061, %vm2062
    %v2064 = vsel %vm2063, %v2056, %v2060
    %v2065 = vand.u32 2147483647, %v2054
    %vm2066 = vcmp.eq.f32.partialorder %v2065, 8.507059e+37
    %v2067 = vand.u32 %v2054, 2147483648
    %v2068 = vor.u32 1.1754944e-38, %v2067
    %v2069 = vsel %vm2066, %v2068, %v2064
    %v2070 = vmul.f32 1.0, %v2069
    %v2071 = vrcp.pop %v2055
    %v2072 = vmul.f32 %v2055, %v2071
    %v2073 = vsub.f32 1.0, %v2072
    %v2074 = vmul.f32 %v2071, %v2073
    %v2075 = vadd.f32 %v2071, %v2074
    %vm2076 = vweird.f32 %v2055
    %vm2077 = vweird.f32 %v2071
    %vm2078 = vmor %vm2076, %vm2077
    %v2079 = vsel %vm2078, %v2071, %v2075
    %v2080 = vand.u32 2147483647, %v2055
    %vm2081 = vcmp.eq.f32.partialorder %v2080, 8.507059e+37
    %v2082 = vand.u32 %v2055, 2147483648
    %v2083 = vor.u32 1.1754944e-38, %v2082
    %v2084 = vsel %vm2081, %v2083, %v2079
    %v2085 = vmul.f32 1.0, %v2084
    %v2086 = vtanh.pop %v1966
    %v2087 = vtanh.pop %v1967
    %v2090 = vrot.slane %v1862, 1
    %v2091 = vrot.slane %v1863, 1
    %v2094 = vmul.f32 %v2070, %v2090
    %v2095 = vmul.f32 %v2085, %v2091
    %2098 = vrot.lane.b32.xlu0 %v2086, 64
    %v2099 = vpop.permute.xlu0 %2098
    %2100 = vrot.lane.b32.xlu0 %v2087, 64
    %v2101 = vpop.permute.xlu0 %2100
    %v2104 = vmul.f32 %v2070, %v2099
    %v2105 = vmul.f32 %v2085, %v2101
    %2108 = vrot.lane.b32.xlu0 %v2104, 32
    %v2109 = vpop.permute.xlu0 %2108
    %2110 = vrot.lane.b32.xlu0 %v2105, 32
    %v2111 = vpop.permute.xlu0 %2110
    %v2114 = vadd.f32 %v2094, %v2109
    %v2115 = vadd.f32 %v2095, %v2111
    %v2116 = vtanh.pop %v2114
    %v2117 = vtanh.pop %v2115
    %2120 = vrot.lane.b32.xlu0 %v2116, 64
    %v2121 = vpop.permute.xlu0 %2120
    %2122 = vrot.lane.b32.xlu0 %v2117, 64
    %v2123 = vpop.permute.xlu0 %2122
    %v2126 = vmul.f32 %v2070, %v2121
    %v2127 = vmul.f32 %v2085, %v2123
    %v2130 = vrot.slane %v2047, 7
    %vm2131 = vcmask 1042434
    %v2132 = vsel %vm2131, %v2130, %v2046
    %2133 = vrot.lane.b32.xlu0 %v2132, 32
    %v2134 = vpop.permute.xlu0 %2133
    %v2138 = vrot.slane %v2126, 5
    %v2139 = vrot.slane %v2127, 4
    %v2140 = vsel %vm2131, %v2139, %v2138
    %2141 = vrot.lane.b32.xlu0 %v2140, 64
    %v2142 = vpop.permute.xlu0 %2141
    %v2144 = vsel %vm811, %v2134, %v2142
    %2145 = vrot.lane.b32.xlu0 %v2046, 32
    %v2146 = vpop.permute.xlu0 %2145
    %2147 = vrot.lane.b32.xlu0 %v2047, 32
    %v2148 = vpop.permute.xlu0 %2147
    %vm2151 = vcmask 254977
    %2152 = vst.msk [vmem:[#allocation2] sm:$0x2] %vm2151, %v2146
    %2153 = vst.msk [vmem:[#allocation2 + $0x8] sm:$0x2] %vm2151, %v2148
    %2154 = vrot.lane.b32.xlu0 %v2126, 64
    %v2155 = vpop.permute.xlu0 %2154
    %2156 = vrot.lane.b32.xlu0 %v2127, 64
    %v2157 = vpop.permute.xlu0 %2156
    %vm2160 = vcmask 522502
    %2161 = vst.msk [vmem:[#allocation2] sm:$0x40] %vm2160, %v2155
    %2162 = vst.msk [vmem:[#allocation2 + $0x8] sm:$0x40] %vm2160, %v2157
    %v2164 = vrot.slane %v2144, 1
    %v2165 = vsel %vm1911, %v2164, 0
    %2167 = vmatpush.msra.mxu0 0.0
    %2168 = vmatpush.msra.mxu0 0.0
    %2169 = vmatpush.msra.mxu0 0.0
    %2170 = vmatpush.msra.mxu0 0.0
    %2171 = vmatpush.msra.mxu0 0.0
    %2172 = vmatpush.msra.mxu0 0.0
    %2173 = vmatpush.msra.mxu0 0.0
    %2174 = vmatpush.msra.mxu0 0.0
    %2175 = vmatpush.msra.mxu0 %v1669
    %2176 = vmatpush.msra.mxu0 %v1667
    %2177 = vmatpush.msra.mxu0 %v1665
    %2178 = vmatpush.msra.mxu0 %v1663
    %2179 = vmatpush.msra.mxu0 %v1661
    %2180 = vmatpush.msra.mxu0 %v1659
    %2181 = vmatpush.msra.mxu0 %v1657
    %2182 = vmatpush.msra.mxu0 %v1655
    %2183 = vmatmul.f32.gmra.mxu0 %v2165
    %v2184 = vpop.f32.mrf.mxu0
    %v2185 = vadd.f32 0.0, %v2184
    %2186 = vdwg.mxu0
    %2187 = vmatpush.msra.mxu0 0.0
    %2188 = vmatpush.msra.mxu0 0.0
    %2189 = vmatpush.msra.mxu0 0.0
    %2190 = vmatpush.msra.mxu0 0.0
    %2191 = vmatpush.msra.mxu0 0.0
    %2192 = vmatpush.msra.mxu0 0.0
    %2193 = vmatpush.msra.mxu0 0.0
    %2194 = vmatpush.msra.mxu0 0.0
    %2195 = vmatpush.msra.mxu0 %v1670
    %2196 = vmatpush.msra.mxu0 %v1668
    %2197 = vmatpush.msra.mxu0 %v1666
    %2198 = vmatpush.msra.mxu0 %v1664
    %2199 = vmatpush.msra.mxu0 %v1662
    %2200 = vmatpush.msra.mxu0 %v1660
    %2201 = vmatpush.msra.mxu0 %v1658
    %2202 = vmatpush.msra.mxu0 %v1656
    %2203 = vmatmul.f32.gmra.mxu0 %v2165
    %v2204 = vpop.f32.mrf.mxu0
    %v2205 = vadd.f32 0.0, %v2204
    %2206 = vdwg.mxu0
    %v2208 = vrot.slane %v2185, 6
    %v2209 = vrot.slane %v2185, 7
    %v2212 = vadd.f32 %v1700, %v2208
    %v2213 = vadd.f32 %v1703, %v2209
    %v2215 = vrot.slane %v2205, 3
    %v2216 = vrot.slane %v2205, 4
    %v2219 = vadd.f32 %v1723, %v2215
    %v2220 = vadd.f32 %v1726, %v2216
    %v2221 = vxor.u32 %v2212, 2147483648
    %v2222 = vxor.u32 %v2213, 2147483648
    %v2223 = vmul.f32 %v2221, 1.442695
    %v2224 = vpow.pop %v2223
    %v2225 = vmul.f32 %v2222, 1.442695
    %v2226 = vpow.pop %v2225
    %v2227 = vadd.f32 %v2224, 1.0
    %v2228 = vadd.f32 %v2226, 1.0
    %v2229 = vrcp.pop %v2227
    %v2230 = vmul.f32 %v2227, %v2229
    %v2231 = vsub.f32 1.0, %v2230
    %v2232 = vmul.f32 %v2229, %v2231
    %v2233 = vadd.f32 %v2229, %v2232
    %vm2234 = vweird.f32 %v2227
    %vm2235 = vweird.f32 %v2229
    %vm2236 = vmor %vm2234, %vm2235
    %v2237 = vsel %vm2236, %v2229, %v2233
    %v2238 = vand.u32 2147483647, %v2227
    %vm2239 = vcmp.eq.f32.partialorder %v2238, 8.507059e+37
    %v2240 = vand.u32 %v2227, 2147483648
    %v2241 = vor.u32 1.1754944e-38, %v2240
    %v2242 = vsel %vm2239, %v2241, %v2237
    %v2243 = vmul.f32 1.0, %v2242
    %v2244 = vrcp.pop %v2228
    %v2245 = vmul.f32 %v2228, %v2244
    %v2246 = vsub.f32 1.0, %v2245
    %v2247 = vmul.f32 %v2244, %v2246
    %v2248 = vadd.f32 %v2244, %v2247
    %vm2249 = vweird.f32 %v2228
    %vm2250 = vweird.f32 %v2244
    %vm2251 = vmor %vm2249, %vm2250
    %v2252 = vsel %vm2251, %v2244, %v2248
    %v2253 = vand.u32 2147483647, %v2228
    %vm2254 = vcmp.eq.f32.partialorder %v2253, 8.507059e+37
    %v2255 = vand.u32 %v2228, 2147483648
    %v2256 = vor.u32 1.1754944e-38, %v2255
    %v2257 = vsel %vm2254, %v2256, %v2252
    %v2258 = vmul.f32 1.0, %v2257
    %v2259 = vtanh.pop %v2212
    %v2260 = vtanh.pop %v2213
    %v2263 = vrot.slane %v2034, 7
    %v2264 = vrot.slane %v2035, 7
    %v2267 = vmul.f32 %v2243, %v2263
    %v2268 = vmul.f32 %v2258, %v2264
    %2271 = vrot.lane.b32.xlu0 %v2259, 64
    %v2272 = vpop.permute.xlu0 %2271
    %2273 = vrot.lane.b32.xlu0 %v2260, 64
    %v2274 = vpop.permute.xlu0 %2273
    %v2277 = vmul.f32 %v2243, %v2272
    %v2278 = vmul.f32 %v2258, %v2274
    %2281 = vrot.lane.b32.xlu0 %v2277, 32
    %v2282 = vpop.permute.xlu0 %2281
    %2283 = vrot.lane.b32.xlu0 %v2278, 32
    %v2284 = vpop.permute.xlu0 %2283
    %v2287 = vadd.f32 %v2267, %v2282
    %v2288 = vadd.f32 %v2268, %v2284
    %v2289 = vtanh.pop %v2287
    %v2290 = vtanh.pop %v2288
    %2293 = vrot.lane.b32.xlu0 %v2289, 64
    %v2294 = vpop.permute.xlu0 %2293
    %2295 = vrot.lane.b32.xlu0 %v2290, 64
    %v2296 = vpop.permute.xlu0 %2295
    %v2299 = vmul.f32 %v2243, %v2294
    %v2300 = vmul.f32 %v2258, %v2296
    %v2301 = vxor.u32 %v2219, 2147483648
    %v2302 = vxor.u32 %v2220, 2147483648
    %v2303 = vmul.f32 %v2301, 1.442695
    %v2304 = vpow.pop %v2303
    %v2305 = vmul.f32 %v2302, 1.442695
    %v2306 = vpow.pop %v2305
    %v2307 = vadd.f32 %v2304, 1.0
    %v2308 = vadd.f32 %v2306, 1.0
    %v2309 = vrcp.pop %v2307
    %v2310 = vmul.f32 %v2307, %v2309
    %v2311 = vsub.f32 1.0, %v2310
    %v2312 = vmul.f32 %v2309, %v2311
    %v2313 = vadd.f32 %v2309, %v2312
    %vm2314 = vweird.f32 %v2307
    %vm2315 = vweird.f32 %v2309
    %vm2316 = vmor %vm2314, %vm2315
    %v2317 = vsel %vm2316, %v2309, %v2313
    %v2318 = vand.u32 2147483647, %v2307
    %vm2319 = vcmp.eq.f32.partialorder %v2318, 8.507059e+37
    %v2320 = vand.u32 %v2307, 2147483648
    %v2321 = vor.u32 1.1754944e-38, %v2320
    %v2322 = vsel %vm2319, %v2321, %v2317
    %v2323 = vmul.f32 1.0, %v2322
    %v2324 = vrcp.pop %v2308
    %v2325 = vmul.f32 %v2308, %v2324
    %v2326 = vsub.f32 1.0, %v2325
    %v2327 = vmul.f32 %v2324, %v2326
    %v2328 = vadd.f32 %v2324, %v2327
    %vm2329 = vweird.f32 %v2308
    %vm2330 = vweird.f32 %v2324
    %vm2331 = vmor %vm2329, %vm2330
    %v2332 = vsel %vm2331, %v2324, %v2328
    %v2333 = vand.u32 2147483647, %v2308
    %vm2334 = vcmp.eq.f32.partialorder %v2333, 8.507059e+37
    %v2335 = vand.u32 %v2308, 2147483648
    %v2336 = vor.u32 1.1754944e-38, %v2335
    %v2337 = vsel %vm2334, %v2336, %v2332
    %v2338 = vmul.f32 1.0, %v2337
    %v2339 = vtanh.pop %v2219
    %v2340 = vtanh.pop %v2220
    %v2343 = vrot.slane %v2114, 1
    %v2344 = vrot.slane %v2115, 1
    %v2347 = vmul.f32 %v2323, %v2343
    %v2348 = vmul.f32 %v2338, %v2344
    %2351 = vrot.lane.b32.xlu0 %v2339, 64
    %v2352 = vpop.permute.xlu0 %2351
    %2353 = vrot.lane.b32.xlu0 %v2340, 64
    %v2354 = vpop.permute.xlu0 %2353
    %v2357 = vmul.f32 %v2323, %v2352
    %v2358 = vmul.f32 %v2338, %v2354
    %2361 = vrot.lane.b32.xlu0 %v2357, 32
    %v2362 = vpop.permute.xlu0 %2361
    %2363 = vrot.lane.b32.xlu0 %v2358, 32
    %v2364 = vpop.permute.xlu0 %2363
    %v2367 = vadd.f32 %v2347, %v2362
    %v2368 = vadd.f32 %v2348, %v2364
    %v2369 = vtanh.pop %v2367
    %v2370 = vtanh.pop %v2368
    %2373 = vrot.lane.b32.xlu0 %v2369, 64
    %v2374 = vpop.permute.xlu0 %2373
    %2375 = vrot.lane.b32.xlu0 %v2370, 64
    %v2376 = vpop.permute.xlu0 %2375
    %v2379 = vmul.f32 %v2323, %v2374
    %v2380 = vmul.f32 %v2338, %v2376
    %v2383 = vrot.slane %v2300, 7
    %vm2384 = vcmask 1043459
    %v2385 = vsel %vm2384, %v2383, %v2299
    %2386 = vrot.lane.b32.xlu0 %v2385, 32
    %v2387 = vpop.permute.xlu0 %2386
    %v2391 = vrot.slane %v2379, 3
    %v2392 = vrot.slane %v2380, 2
    %v2393 = vsel %vm2384, %v2392, %v2391
    %2394 = vrot.lane.b32.xlu0 %v2393, 64
    %v2395 = vpop.permute.xlu0 %2394
    %v2397 = vsel %vm811, %v2387, %v2395
    %2398 = vrot.lane.b32.xlu0 %v2299, 32
    %v2399 = vpop.permute.xlu0 %2398
    %2400 = vrot.lane.b32.xlu0 %v2300, 32
    %v2401 = vpop.permute.xlu0 %2400
    %vm2404 = vcmask 256002
    %2405 = vst.msk [vmem:[#allocation2] sm:$0x4] %vm2404, %v2399
    %2406 = vst.msk [vmem:[#allocation2 + $0x8] sm:$0x4] %vm2404, %v2401
    %2407 = vrot.lane.b32.xlu0 %v2379, 64
    %v2408 = vpop.permute.xlu0 %2407
    %2409 = vrot.lane.b32.xlu0 %v2380, 64
    %v2410 = vpop.permute.xlu0 %2409
    %vm2413 = vcmask 521477
    %2414 = vst.msk [vmem:[#allocation2] sm:$0x20] %vm2413, %v2408
    %2415 = vst.msk [vmem:[#allocation2 + $0x8] sm:$0x20] %vm2413, %v2410
    %v2417 = vrot.slane %v2397, 2
    %v2418 = vsel %vm1911, %v2417, 0
    %2420 = vmatpush.msra.mxu0 0.0
    %2421 = vmatpush.msra.mxu0 0.0
    %2422 = vmatpush.msra.mxu0 0.0
    %2423 = vmatpush.msra.mxu0 0.0
    %2424 = vmatpush.msra.mxu0 0.0
    %2425 = vmatpush.msra.mxu0 0.0
    %2426 = vmatpush.msra.mxu0 0.0
    %2427 = vmatpush.msra.mxu0 0.0
    %2428 = vmatpush.msra.mxu0 %v1669
    %2429 = vmatpush.msra.mxu0 %v1667
    %2430 = vmatpush.msra.mxu0 %v1665
    %2431 = vmatpush.msra.mxu0 %v1663
    %2432 = vmatpush.msra.mxu0 %v1661
    %2433 = vmatpush.msra.mxu0 %v1659
    %2434 = vmatpush.msra.mxu0 %v1657
    %2435 = vmatpush.msra.mxu0 %v1655
    %2436 = vmatmul.f32.gmra.mxu0 %v2418
    %v2437 = vpop.f32.mrf.mxu0
    %v2438 = vadd.f32 0.0, %v2437
    %2439 = vdwg.mxu0
    %2440 = vmatpush.msra.mxu0 0.0
    %2441 = vmatpush.msra.mxu0 0.0
    %2442 = vmatpush.msra.mxu0 0.0
    %2443 = vmatpush.msra.mxu0 0.0
    %2444 = vmatpush.msra.mxu0 0.0
    %2445 = vmatpush.msra.mxu0 0.0
    %2446 = vmatpush.msra.mxu0 0.0
    %2447 = vmatpush.msra.mxu0 0.0
    %2448 = vmatpush.msra.mxu0 %v1670
    %2449 = vmatpush.msra.mxu0 %v1668
    %2450 = vmatpush.msra.mxu0 %v1666
    %2451 = vmatpush.msra.mxu0 %v1664
    %2452 = vmatpush.msra.mxu0 %v1662
    %2453 = vmatpush.msra.mxu0 %v1660
    %2454 = vmatpush.msra.mxu0 %v1658
    %2455 = vmatpush.msra.mxu0 %v1656
    %2456 = vmatmul.f32.gmra.mxu0 %v2418
    %v2457 = vpop.f32.mrf.mxu0
    %v2458 = vadd.f32 0.0, %v2457
    %2459 = vdwg.mxu0
    %v2461 = vrot.slane %v2438, 5
    %v2462 = vrot.slane %v2438, 6
    %v2465 = vadd.f32 %v1700, %v2461
    %v2466 = vadd.f32 %v1703, %v2462
    %v2468 = vrot.slane %v2458, 4
    %v2469 = vrot.slane %v2458, 5
    %v2472 = vadd.f32 %v1723, %v2468
    %v2473 = vadd.f32 %v1726, %v2469
    %v2474 = vxor.u32 %v2465, 2147483648
    %v2475 = vxor.u32 %v2466, 2147483648
    %v2476 = vmul.f32 %v2474, 1.442695
    %v2477 = vpow.pop %v2476
    %v2478 = vmul.f32 %v2475, 1.442695
    %v2479 = vpow.pop %v2478
    %v2480 = vadd.f32 %v2477, 1.0
    %v2481 = vadd.f32 %v2479, 1.0
    %v2482 = vrcp.pop %v2480
    %v2483 = vmul.f32 %v2480, %v2482
    %v2484 = vsub.f32 1.0, %v2483
    %v2485 = vmul.f32 %v2482, %v2484
    %v2486 = vadd.f32 %v2482, %v2485
    %vm2487 = vweird.f32 %v2480
    %vm2488 = vweird.f32 %v2482
    %vm2489 = vmor %vm2487, %vm2488
    %v2490 = vsel %vm2489, %v2482, %v2486
    %v2491 = vand.u32 2147483647, %v2480
    %vm2492 = vcmp.eq.f32.partialorder %v2491, 8.507059e+37
    %v2493 = vand.u32 %v2480, 2147483648
    %v2494 = vor.u32 1.1754944e-38, %v2493
    %v2495 = vsel %vm2492, %v2494, %v2490
    %v2496 = vmul.f32 1.0, %v2495
    %v2497 = vrcp.pop %v2481
    %v2498 = vmul.f32 %v2481, %v2497
    %v2499 = vsub.f32 1.0, %v2498
    %v2500 = vmul.f32 %v2497, %v2499
    %v2501 = vadd.f32 %v2497, %v2500
    %vm2502 = vweird.f32 %v2481
    %vm2503 = vweird.f32 %v2497
    %vm2504 = vmor %vm2502, %vm2503
    %v2505 = vsel %vm2504, %v2497, %v2501
    %v2506 = vand.u32 2147483647, %v2481
    %vm2507 = vcmp.eq.f32.partialorder %v2506, 8.507059e+37
    %v2508 = vand.u32 %v2481, 2147483648
    %v2509 = vor.u32 1.1754944e-38, %v2508
    %v2510 = vsel %vm2507, %v2509, %v2505
    %v2511 = vmul.f32 1.0, %v2510
    %v2512 = vtanh.pop %v2465
    %v2513 = vtanh.pop %v2466
    %v2516 = vrot.slane %v2287, 7
    %v2517 = vrot.slane %v2288, 7
    %v2520 = vmul.f32 %v2496, %v2516
    %v2521 = vmul.f32 %v2511, %v2517
    %2524 = vrot.lane.b32.xlu0 %v2512, 64
    %v2525 = vpop.permute.xlu0 %2524
    %2526 = vrot.lane.b32.xlu0 %v2513, 64
    %v2527 = vpop.permute.xlu0 %2526
    %v2530 = vmul.f32 %v2496, %v2525
    %v2531 = vmul.f32 %v2511, %v2527
    %2534 = vrot.lane.b32.xlu0 %v2530, 32
    %v2535 = vpop.permute.xlu0 %2534
    %2536 = vrot.lane.b32.xlu0 %v2531, 32
    %v2537 = vpop.permute.xlu0 %2536
    %v2540 = vadd.f32 %v2520, %v2535
    %v2541 = vadd.f32 %v2521, %v2537
    %v2542 = vtanh.pop %v2540
    %v2543 = vtanh.pop %v2541
    %2546 = vrot.lane.b32.xlu0 %v2542, 64
    %v2547 = vpop.permute.xlu0 %2546
    %2548 = vrot.lane.b32.xlu0 %v2543, 64
    %v2549 = vpop.permute.xlu0 %2548
    %v2552 = vmul.f32 %v2496, %v2547
    %v2553 = vmul.f32 %v2511, %v2549
    %v2554 = vxor.u32 %v2472, 2147483648
    %v2555 = vxor.u32 %v2473, 2147483648
    %v2556 = vmul.f32 %v2554, 1.442695
    %v2557 = vpow.pop %v2556
    %v2558 = vmul.f32 %v2555, 1.442695
    %v2559 = vpow.pop %v2558
    %v2560 = vadd.f32 %v2557, 1.0
    %v2561 = vadd.f32 %v2559, 1.0
    %v2562 = vrcp.pop %v2560
    %v2563 = vmul.f32 %v2560, %v2562
    %v2564 = vsub.f32 1.0, %v2563
    %v2565 = vmul.f32 %v2562, %v2564
    %v2566 = vadd.f32 %v2562, %v2565
    %vm2567 = vweird.f32 %v2560
    %vm2568 = vweird.f32 %v2562
    %vm2569 = vmor %vm2567, %vm2568
    %v2570 = vsel %vm2569, %v2562, %v2566
    %v2571 = vand.u32 2147483647, %v2560
    %vm2572 = vcmp.eq.f32.partialorder %v2571, 8.507059e+37
    %v2573 = vand.u32 %v2560, 2147483648
    %v2574 = vor.u32 1.1754944e-38, %v2573
    %v2575 = vsel %vm2572, %v2574, %v2570
    %v2576 = vmul.f32 1.0, %v2575
    %v2577 = vrcp.pop %v2561
    %v2578 = vmul.f32 %v2561, %v2577
    %v2579 = vsub.f32 1.0, %v2578
    %v2580 = vmul.f32 %v2577, %v2579
    %v2581 = vadd.f32 %v2577, %v2580
    %vm2582 = vweird.f32 %v2561
    %vm2583 = vweird.f32 %v2577
    %vm2584 = vmor %vm2582, %vm2583
    %v2585 = vsel %vm2584, %v2577, %v2581
    %v2586 = vand.u32 2147483647, %v2561
    %vm2587 = vcmp.eq.f32.partialorder %v2586, 8.507059e+37
    %v2588 = vand.u32 %v2561, 2147483648
    %v2589 = vor.u32 1.1754944e-38, %v2588
    %v2590 = vsel %vm2587, %v2589, %v2585
    %v2591 = vmul.f32 1.0, %v2590
    %v2592 = vtanh.pop %v2472
    %v2593 = vtanh.pop %v2473
    %v2596 = vrot.slane %v2367, 1
    %v2597 = vrot.slane %v2368, 1
    %v2600 = vmul.f32 %v2576, %v2596
    %v2601 = vmul.f32 %v2591, %v2597
    %2604 = vrot.lane.b32.xlu0 %v2592, 64
    %v2605 = vpop.permute.xlu0 %2604
    %2606 = vrot.lane.b32.xlu0 %v2593, 64
    %v2607 = vpop.permute.xlu0 %2606
    %v2610 = vmul.f32 %v2576, %v2605
    %v2611 = vmul.f32 %v2591, %v2607
    %2614 = vrot.lane.b32.xlu0 %v2610, 32
    %v2615 = vpop.permute.xlu0 %2614
    %2616 = vrot.lane.b32.xlu0 %v2611, 32
    %v2617 = vpop.permute.xlu0 %2616
    %v2620 = vadd.f32 %v2600, %v2615
    %v2621 = vadd.f32 %v2601, %v2617
    %v2622 = vtanh.pop %v2620
    %v2623 = vtanh.pop %v2621
    %2626 = vrot.lane.b32.xlu0 %v2622, 64
    %v2627 = vpop.permute.xlu0 %2626
    %2628 = vrot.lane.b32.xlu0 %v2623, 64
    %v2629 = vpop.permute.xlu0 %2628
    %v2632 = vmul.f32 %v2576, %v2627
    %v2633 = vmul.f32 %v2591, %v2629
    %v2636 = vrot.slane %v2553, 7
    %vm2637 = vcmask 1044484
    %v2638 = vsel %vm2637, %v2636, %v2552
    %2639 = vrot.lane.b32.xlu0 %v2638, 32
    %v2640 = vpop.permute.xlu0 %2639
    %v2644 = vrot.slane %v2632, 1
    %v2645 = vsel %vm2637, %v2633, %v2644
    %2646 = vrot.lane.b32.xlu0 %v2645, 64
    %v2647 = vpop.permute.xlu0 %2646
    %v2649 = vsel %vm811, %v2640, %v2647
    %2650 = vrot.lane.b32.xlu0 %v2552, 32
    %v2651 = vpop.permute.xlu0 %2650
    %2652 = vrot.lane.b32.xlu0 %v2553, 32
    %v2653 = vpop.permute.xlu0 %2652
    %vm2656 = vcmask 257027
    %2657 = vst.msk [vmem:[#allocation2] sm:$0x8] %vm2656, %v2651
    %2658 = vst.msk [vmem:[#allocation2 + $0x8] sm:$0x8] %vm2656, %v2653
    %2659 = vrot.lane.b32.xlu0 %v2632, 64
    %v2660 = vpop.permute.xlu0 %2659
    %2661 = vrot.lane.b32.xlu0 %v2633, 64
    %v2662 = vpop.permute.xlu0 %2661
    %vm2665 = vcmask 520452
    %2666 = vst.msk [vmem:[#allocation2] sm:$0x10] %vm2665, %v2660
    %2667 = vst.msk [vmem:[#allocation2 + $0x8] sm:$0x10] %vm2665, %v2662
    %v2669 = vrot.slane %v2649, 3
    %v2670 = vsel %vm1911, %v2669, 0
    %2672 = vmatpush.msra.mxu0 0.0
    %2673 = vmatpush.msra.mxu0 0.0
    %2674 = vmatpush.msra.mxu0 0.0
    %2675 = vmatpush.msra.mxu0 0.0
    %2676 = vmatpush.msra.mxu0 0.0
    %2677 = vmatpush.msra.mxu0 0.0
    %2678 = vmatpush.msra.mxu0 0.0
    %2679 = vmatpush.msra.mxu0 0.0
    %2680 = vmatpush.msra.mxu0 %v1669
    %2681 = vmatpush.msra.mxu0 %v1667
    %2682 = vmatpush.msra.mxu0 %v1665
    %2683 = vmatpush.msra.mxu0 %v1663
    %2684 = vmatpush.msra.mxu0 %v1661
    %2685 = vmatpush.msra.mxu0 %v1659
    %2686 = vmatpush.msra.mxu0 %v1657
    %2687 = vmatpush.msra.mxu0 %v1655
    %2688 = vmatmul.f32.gmra.mxu0 %v2670
    %v2689 = vpop.f32.mrf.mxu0
    %v2690 = vadd.f32 0.0, %v2689
    %2691 = vdwg.mxu0
    %2692 = vmatpush.msra.mxu0 0.0
    %2693 = vmatpush.msra.mxu0 0.0
    %2694 = vmatpush.msra.mxu0 0.0
    %2695 = vmatpush.msra.mxu0 0.0
    %2696 = vmatpush.msra.mxu0 0.0
    %2697 = vmatpush.msra.mxu0 0.0
    %2698 = vmatpush.msra.mxu0 0.0
    %2699 = vmatpush.msra.mxu0 0.0
    %2700 = vmatpush.msra.mxu0 %v1670
    %2701 = vmatpush.msra.mxu0 %v1668
    %2702 = vmatpush.msra.mxu0 %v1666
    %2703 = vmatpush.msra.mxu0 %v1664
    %2704 = vmatpush.msra.mxu0 %v1662
    %2705 = vmatpush.msra.mxu0 %v1660
    %2706 = vmatpush.msra.mxu0 %v1658
    %2707 = vmatpush.msra.mxu0 %v1656
    %2708 = vmatmul.f32.gmra.mxu0 %v2670
    %v2709 = vpop.f32.mrf.mxu0
    %v2710 = vadd.f32 0.0, %v2709
    %2711 = vdwg.mxu0
    %v2713 = vrot.slane %v2690, 4
    %v2714 = vrot.slane %v2690, 5
    %v2717 = vadd.f32 %v1700, %v2713
    %v2718 = vadd.f32 %v1703, %v2714
    %v2720 = vrot.slane %v2710, 5
    %v2721 = vrot.slane %v2710, 6
    %v2724 = vadd.f32 %v1723, %v2720
    %v2725 = vadd.f32 %v1726, %v2721
    %v2726 = vxor.u32 %v2717, 2147483648
    %v2727 = vxor.u32 %v2718, 2147483648
    %v2728 = vmul.f32 %v2726, 1.442695
    %v2729 = vpow.pop %v2728
    %v2730 = vmul.f32 %v2727, 1.442695
    %v2731 = vpow.pop %v2730
    %v2732 = vadd.f32 %v2729, 1.0
    %v2733 = vadd.f32 %v2731, 1.0
    %v2734 = vrcp.pop %v2732
    %v2735 = vmul.f32 %v2732, %v2734
    %v2736 = vsub.f32 1.0, %v2735
    %v2737 = vmul.f32 %v2734, %v2736
    %v2738 = vadd.f32 %v2734, %v2737
    %vm2739 = vweird.f32 %v2732
    %vm2740 = vweird.f32 %v2734
    %vm2741 = vmor %vm2739, %vm2740
    %v2742 = vsel %vm2741, %v2734, %v2738
    %v2743 = vand.u32 2147483647, %v2732
    %vm2744 = vcmp.eq.f32.partialorder %v2743, 8.507059e+37
    %v2745 = vand.u32 %v2732, 2147483648
    %v2746 = vor.u32 1.1754944e-38, %v2745
    %v2747 = vsel %vm2744, %v2746, %v2742
    %v2748 = vmul.f32 1.0, %v2747
    %v2749 = vrcp.pop %v2733
    %v2750 = vmul.f32 %v2733, %v2749
    %v2751 = vsub.f32 1.0, %v2750
    %v2752 = vmul.f32 %v2749, %v2751
    %v2753 = vadd.f32 %v2749, %v2752
    %vm2754 = vweird.f32 %v2733
    %vm2755 = vweird.f32 %v2749
    %vm2756 = vmor %vm2754, %vm2755
    %v2757 = vsel %vm2756, %v2749, %v2753
    %v2758 = vand.u32 2147483647, %v2733
    %vm2759 = vcmp.eq.f32.partialorder %v2758, 8.507059e+37
    %v2760 = vand.u32 %v2733, 2147483648
    %v2761 = vor.u32 1.1754944e-38, %v2760
    %v2762 = vsel %vm2759, %v2761, %v2757
    %v2763 = vmul.f32 1.0, %v2762
    %v2764 = vtanh.pop %v2717
    %v2765 = vtanh.pop %v2718
    %v2768 = vrot.slane %v2540, 7
    %v2769 = vrot.slane %v2541, 7
    %v2772 = vmul.f32 %v2748, %v2768
    %v2773 = vmul.f32 %v2763, %v2769
    %2776 = vrot.lane.b32.xlu0 %v2764, 64
    %v2777 = vpop.permute.xlu0 %2776
    %2778 = vrot.lane.b32.xlu0 %v2765, 64
    %v2779 = vpop.permute.xlu0 %2778
    %v2782 = vmul.f32 %v2748, %v2777
    %v2783 = vmul.f32 %v2763, %v2779
    %2786 = vrot.lane.b32.xlu0 %v2782, 32
    %v2787 = vpop.permute.xlu0 %2786
    %2788 = vrot.lane.b32.xlu0 %v2783, 32
    %v2789 = vpop.permute.xlu0 %2788
    %v2792 = vadd.f32 %v2772, %v2787
    %v2793 = vadd.f32 %v2773, %v2789
    %v2794 = vtanh.pop %v2792
    %v2795 = vtanh.pop %v2793
    %2798 = vrot.lane.b32.xlu0 %v2794, 64
    %v2799 = vpop.permute.xlu0 %2798
    %2800 = vrot.lane.b32.xlu0 %v2795, 64
    %v2801 = vpop.permute.xlu0 %2800
    %v2804 = vmul.f32 %v2748, %v2799
    %v2805 = vmul.f32 %v2763, %v2801
    %v2806 = vxor.u32 %v2724, 2147483648
    %v2807 = vxor.u32 %v2725, 2147483648
    %v2808 = vmul.f32 %v2806, 1.442695
    %v2809 = vpow.pop %v2808
    %v2810 = vmul.f32 %v2807, 1.442695
    %v2811 = vpow.pop %v2810
    %v2812 = vadd.f32 %v2809, 1.0
    %v2813 = vadd.f32 %v2811, 1.0
    %v2814 = vrcp.pop %v2812
    %v2815 = vmul.f32 %v2812, %v2814
    %v2816 = vsub.f32 1.0, %v2815
    %v2817 = vmul.f32 %v2814, %v2816
    %v2818 = vadd.f32 %v2814, %v2817
    %vm2819 = vweird.f32 %v2812
    %vm2820 = vweird.f32 %v2814
    %vm2821 = vmor %vm2819, %vm2820
    %v2822 = vsel %vm2821, %v2814, %v2818
    %v2823 = vand.u32 2147483647, %v2812
    %vm2824 = vcmp.eq.f32.partialorder %v2823, 8.507059e+37
    %v2825 = vand.u32 %v2812, 2147483648
    %v2826 = vor.u32 1.1754944e-38, %v2825
    %v2827 = vsel %vm2824, %v2826, %v2822
    %v2828 = vmul.f32 1.0, %v2827
    %v2829 = vrcp.pop %v2813
    %v2830 = vmul.f32 %v2813, %v2829
    %v2831 = vsub.f32 1.0, %v2830
    %v2832 = vmul.f32 %v2829, %v2831
    %v2833 = vadd.f32 %v2829, %v2832
    %vm2834 = vweird.f32 %v2813
    %vm2835 = vweird.f32 %v2829
    %vm2836 = vmor %vm2834, %vm2835
    %v2837 = vsel %vm2836, %v2829, %v2833
    %v2838 = vand.u32 2147483647, %v2813
    %vm2839 = vcmp.eq.f32.partialorder %v2838, 8.507059e+37
    %v2840 = vand.u32 %v2813, 2147483648
    %v2841 = vor.u32 1.1754944e-38, %v2840
    %v2842 = vsel %vm2839, %v2841, %v2837
    %v2843 = vmul.f32 1.0, %v2842
    %v2844 = vtanh.pop %v2724
    %v2845 = vtanh.pop %v2725
    %v2848 = vrot.slane %v2620, 1
    %v2849 = vrot.slane %v2621, 1
    %v2852 = vmul.f32 %v2828, %v2848
    %v2853 = vmul.f32 %v2843, %v2849
    %2856 = vrot.lane.b32.xlu0 %v2844, 64
    %v2857 = vpop.permute.xlu0 %2856
    %2858 = vrot.lane.b32.xlu0 %v2845, 64
    %v2859 = vpop.permute.xlu0 %2858
    %v2862 = vmul.f32 %v2828, %v2857
    %v2863 = vmul.f32 %v2843, %v2859
    %2866 = vrot.lane.b32.xlu0 %v2862, 32
    %v2867 = vpop.permute.xlu0 %2866
    %2868 = vrot.lane.b32.xlu0 %v2863, 32
    %v2869 = vpop.permute.xlu0 %2868
    %v2872 = vadd.f32 %v2852, %v2867
    %v2873 = vadd.f32 %v2853, %v2869
    %v2874 = vtanh.pop %v2872
    %v2875 = vtanh.pop %v2873
    %2878 = vrot.lane.b32.xlu0 %v2874, 64
    %v2879 = vpop.permute.xlu0 %2878
    %2880 = vrot.lane.b32.xlu0 %v2875, 64
    %v2881 = vpop.permute.xlu0 %2880
    %v2884 = vmul.f32 %v2828, %v2879
    %v2885 = vmul.f32 %v2843, %v2881
    %v2888 = vrot.slane %v2805, 7
    %vm2889 = vcmask 1045509
    %v2890 = vsel %vm2889, %v2888, %v2804
    %2891 = vrot.lane.b32.xlu0 %v2890, 32
    %v2892 = vpop.permute.xlu0 %2891
    %v2896 = vrot.slane %v2884, 7
    %v2897 = vrot.slane %v2885, 6
    %v2898 = vsel %vm2889, %v2897, %v2896
    %2899 = vrot.lane.b32.xlu0 %v2898, 64
    %v2900 = vpop.permute.xlu0 %2899
    %v2902 = vsel %vm811, %v2892, %v2900
    %2903 = vrot.lane.b32.xlu0 %v2804, 32
    %v2904 = vpop.permute.xlu0 %2903
    %2905 = vrot.lane.b32.xlu0 %v2805, 32
    %v2906 = vpop.permute.xlu0 %2905
    %vm2909 = vcmask 258052
    %2910 = vst.msk [vmem:[#allocation2] sm:$0x10] %vm2909, %v2904
    %2911 = vst.msk [vmem:[#allocation2 + $0x8] sm:$0x10] %vm2909, %v2906
    %2912 = vrot.lane.b32.xlu0 %v2884, 64
    %v2913 = vpop.permute.xlu0 %2912
    %2914 = vrot.lane.b32.xlu0 %v2885, 64
    %v2915 = vpop.permute.xlu0 %2914
    %vm2918 = vcmask 519427
    %2919 = vst.msk [vmem:[#allocation2] sm:$0x8] %vm2918, %v2913
    %2920 = vst.msk [vmem:[#allocation2 + $0x8] sm:$0x8] %vm2918, %v2915
    %v2922 = vrot.slane %v2902, 4
    %v2923 = vsel %vm1911, %v2922, 0
    %2925 = vmatpush.msra.mxu0 0.0
    %2926 = vmatpush.msra.mxu0 0.0
    %2927 = vmatpush.msra.mxu0 0.0
    %2928 = vmatpush.msra.mxu0 0.0
    %2929 = vmatpush.msra.mxu0 0.0
    %2930 = vmatpush.msra.mxu0 0.0
    %2931 = vmatpush.msra.mxu0 0.0
    %2932 = vmatpush.msra.mxu0 0.0
    %2933 = vmatpush.msra.mxu0 %v1669
    %2934 = vmatpush.msra.mxu0 %v1667
    %2935 = vmatpush.msra.mxu0 %v1665
    %2936 = vmatpush.msra.mxu0 %v1663
    %2937 = vmatpush.msra.mxu0 %v1661
    %2938 = vmatpush.msra.mxu0 %v1659
    %2939 = vmatpush.msra.mxu0 %v1657
    %2940 = vmatpush.msra.mxu0 %v1655
    %2941 = vmatmul.f32.gmra.mxu0 %v2923
    %v2942 = vpop.f32.mrf.mxu0
    %v2943 = vadd.f32 0.0, %v2942
    %2944 = vdwg.mxu0
    %2945 = vmatpush.msra.mxu0 0.0
    %2946 = vmatpush.msra.mxu0 0.0
    %2947 = vmatpush.msra.mxu0 0.0
    %2948 = vmatpush.msra.mxu0 0.0
    %2949 = vmatpush.msra.mxu0 0.0
    %2950 = vmatpush.msra.mxu0 0.0
    %2951 = vmatpush.msra.mxu0 0.0
    %2952 = vmatpush.msra.mxu0 0.0
    %2953 = vmatpush.msra.mxu0 %v1670
    %2954 = vmatpush.msra.mxu0 %v1668
    %2955 = vmatpush.msra.mxu0 %v1666
    %2956 = vmatpush.msra.mxu0 %v1664
    %2957 = vmatpush.msra.mxu0 %v1662
    %2958 = vmatpush.msra.mxu0 %v1660
    %2959 = vmatpush.msra.mxu0 %v1658
    %2960 = vmatpush.msra.mxu0 %v1656
    %2961 = vmatmul.f32.gmra.mxu0 %v2923
    %v2962 = vpop.f32.mrf.mxu0
    %v2963 = vadd.f32 0.0, %v2962
    %2964 = vdwg.mxu0
    %v2966 = vrot.slane %v2943, 3
    %v2967 = vrot.slane %v2943, 4
    %v2970 = vadd.f32 %v1700, %v2966
    %v2971 = vadd.f32 %v1703, %v2967
    %v2973 = vrot.slane %v2963, 6
    %v2974 = vrot.slane %v2963, 7
    %v2977 = vadd.f32 %v1723, %v2973
    %v2978 = vadd.f32 %v1726, %v2974
    %v2979 = vxor.u32 %v2970, 2147483648
    %v2980 = vxor.u32 %v2971, 2147483648
    %v2981 = vmul.f32 %v2979, 1.442695
    %v2982 = vpow.pop %v2981
    %v2983 = vmul.f32 %v2980, 1.442695
    %v2984 = vpow.pop %v2983
    %v2985 = vadd.f32 %v2982, 1.0
    %v2986 = vadd.f32 %v2984, 1.0
    %v2987 = vrcp.pop %v2985
    %v2988 = vmul.f32 %v2985, %v2987
    %v2989 = vsub.f32 1.0, %v2988
    %v2990 = vmul.f32 %v2987, %v2989
    %v2991 = vadd.f32 %v2987, %v2990
    %vm2992 = vweird.f32 %v2985
    %vm2993 = vweird.f32 %v2987
    %vm2994 = vmor %vm2992, %vm2993
    %v2995 = vsel %vm2994, %v2987, %v2991
    %v2996 = vand.u32 2147483647, %v2985
    %vm2997 = vcmp.eq.f32.partialorder %v2996, 8.507059e+37
    %v2998 = vand.u32 %v2985, 2147483648
    %v2999 = vor.u32 1.1754944e-38, %v2998
    %v3000 = vsel %vm2997, %v2999, %v2995
    %v3001 = vmul.f32 1.0, %v3000
    %v3002 = vrcp.pop %v2986
    %v3003 = vmul.f32 %v2986, %v3002
    %v3004 = vsub.f32 1.0, %v3003
    %v3005 = vmul.f32 %v3002, %v3004
    %v3006 = vadd.f32 %v3002, %v3005
    %vm3007 = vweird.f32 %v2986
    %vm3008 = vweird.f32 %v3002
    %vm3009 = vmor %vm3007, %vm3008
    %v3010 = vsel %vm3009, %v3002, %v3006
    %v3011 = vand.u32 2147483647, %v2986
    %vm3012 = vcmp.eq.f32.partialorder %v3011, 8.507059e+37
    %v3013 = vand.u32 %v2986, 2147483648
    %v3014 = vor.u32 1.1754944e-38, %v3013
    %v3015 = vsel %vm3012, %v3014, %v3010
    %v3016 = vmul.f32 1.0, %v3015
    %v3017 = vtanh.pop %v2970
    %v3018 = vtanh.pop %v2971
    %v3021 = vrot.slane %v2792, 7
    %v3022 = vrot.slane %v2793, 7
    %v3025 = vmul.f32 %v3001, %v3021
    %v3026 = vmul.f32 %v3016, %v3022
    %3029 = vrot.lane.b32.xlu0 %v3017, 64
    %v3030 = vpop.permute.xlu0 %3029
    %3031 = vrot.lane.b32.xlu0 %v3018, 64
    %v3032 = vpop.permute.xlu0 %3031
    %v3035 = vmul.f32 %v3001, %v3030
    %v3036 = vmul.f32 %v3016, %v3032
    %3039 = vrot.lane.b32.xlu0 %v3035, 32
    %v3040 = vpop.permute.xlu0 %3039
    %3041 = vrot.lane.b32.xlu0 %v3036, 32
    %v3042 = vpop.permute.xlu0 %3041
    %v3045 = vadd.f32 %v3025, %v3040
    %v3046 = vadd.f32 %v3026, %v3042
    %v3047 = vtanh.pop %v3045
    %v3048 = vtanh.pop %v3046
    %3051 = vrot.lane.b32.xlu0 %v3047, 64
    %v3052 = vpop.permute.xlu0 %3051
    %3053 = vrot.lane.b32.xlu0 %v3048, 64
    %v3054 = vpop.permute.xlu0 %3053
    %v3057 = vmul.f32 %v3001, %v3052
    %v3058 = vmul.f32 %v3016, %v3054
    %v3059 = vxor.u32 %v2977, 2147483648
    %v3060 = vxor.u32 %v2978, 2147483648
    %v3061 = vmul.f32 %v3059, 1.442695
    %v3062 = vpow.pop %v3061
    %v3063 = vmul.f32 %v3060, 1.442695
    %v3064 = vpow.pop %v3063
    %v3065 = vadd.f32 %v3062, 1.0
    %v3066 = vadd.f32 %v3064, 1.0
    %v3067 = vrcp.pop %v3065
    %v3068 = vmul.f32 %v3065, %v3067
    %v3069 = vsub.f32 1.0, %v3068
    %v3070 = vmul.f32 %v3067, %v3069
    %v3071 = vadd.f32 %v3067, %v3070
    %vm3072 = vweird.f32 %v3065
    %vm3073 = vweird.f32 %v3067
    %vm3074 = vmor %vm3072, %vm3073
    %v3075 = vsel %vm3074, %v3067, %v3071
    %v3076 = vand.u32 2147483647, %v3065
    %vm3077 = vcmp.eq.f32.partialorder %v3076, 8.507059e+37
    %v3078 = vand.u32 %v3065, 2147483648
    %v3079 = vor.u32 1.1754944e-38, %v3078
    %v3080 = vsel %vm3077, %v3079, %v3075
    %v3081 = vmul.f32 1.0, %v3080
    %v3082 = vrcp.pop %v3066
    %v3083 = vmul.f32 %v3066, %v3082
    %v3084 = vsub.f32 1.0, %v3083
    %v3085 = vmul.f32 %v3082, %v3084
    %v3086 = vadd.f32 %v3082, %v3085
    %vm3087 = vweird.f32 %v3066
    %vm3088 = vweird.f32 %v3082
    %vm3089 = vmor %vm3087, %vm3088
    %v3090 = vsel %vm3089, %v3082, %v3086
    %v3091 = vand.u32 2147483647, %v3066
    %vm3092 = vcmp.eq.f32.partialorder %v3091, 8.507059e+37
    %v3093 = vand.u32 %v3066, 2147483648
    %v3094 = vor.u32 1.1754944e-38, %v3093
    %v3095 = vsel %vm3092, %v3094, %v3090
    %v3096 = vmul.f32 1.0, %v3095
    %v3097 = vtanh.pop %v2977
    %v3098 = vtanh.pop %v2978
    %v3101 = vrot.slane %v2872, 1
    %v3102 = vrot.slane %v2873, 1
    %v3105 = vmul.f32 %v3081, %v3101
    %v3106 = vmul.f32 %v3096, %v3102
    %3109 = vrot.lane.b32.xlu0 %v3097, 64
    %v3110 = vpop.permute.xlu0 %3109
    %3111 = vrot.lane.b32.xlu0 %v3098, 64
    %v3112 = vpop.permute.xlu0 %3111
    %v3115 = vmul.f32 %v3081, %v3110
    %v3116 = vmul.f32 %v3096, %v3112
    %3119 = vrot.lane.b32.xlu0 %v3115, 32
    %v3120 = vpop.permute.xlu0 %3119
    %3121 = vrot.lane.b32.xlu0 %v3116, 32
    %v3122 = vpop.permute.xlu0 %3121
    %v3125 = vadd.f32 %v3105, %v3120
    %v3126 = vadd.f32 %v3106, %v3122
    %v3127 = vtanh.pop %v3125
    %v3128 = vtanh.pop %v3126
    %3131 = vrot.lane.b32.xlu0 %v3127, 64
    %v3132 = vpop.permute.xlu0 %3131
    %3133 = vrot.lane.b32.xlu0 %v3128, 64
    %v3134 = vpop.permute.xlu0 %3133
    %v3137 = vmul.f32 %v3081, %v3132
    %v3138 = vmul.f32 %v3096, %v3134
    %v3141 = vrot.slane %v3058, 7
    %vm3142 = vcmask 1046534
    %v3143 = vsel %vm3142, %v3141, %v3057
    %3144 = vrot.lane.b32.xlu0 %v3143, 32
    %v3145 = vpop.permute.xlu0 %3144
    %v3149 = vrot.slane %v3137, 5
    %v3150 = vrot.slane %v3138, 4
    %v3151 = vsel %vm3142, %v3150, %v3149
    %3152 = vrot.lane.b32.xlu0 %v3151, 64
    %v3153 = vpop.permute.xlu0 %3152
    %v3155 = vsel %vm811, %v3145, %v3153
    %3156 = vrot.lane.b32.xlu0 %v3057, 32
    %v3157 = vpop.permute.xlu0 %3156
    %3158 = vrot.lane.b32.xlu0 %v3058, 32
    %v3159 = vpop.permute.xlu0 %3158
    %vm3162 = vcmask 259077
    %3163 = vst.msk [vmem:[#allocation2] sm:$0x20] %vm3162, %v3157
    %3164 = vst.msk [vmem:[#allocation2 + $0x8] sm:$0x20] %vm3162, %v3159
    %3165 = vrot.lane.b32.xlu0 %v3137, 64
    %v3166 = vpop.permute.xlu0 %3165
    %3167 = vrot.lane.b32.xlu0 %v3138, 64
    %v3168 = vpop.permute.xlu0 %3167
    %vm3171 = vcmask 518402
    %3172 = vst.msk [vmem:[#allocation2] sm:$0x4] %vm3171, %v3166
    %3173 = vst.msk [vmem:[#allocation2 + $0x8] sm:$0x4] %vm3171, %v3168
    %v3175 = vrot.slane %v3155, 5
    %v3176 = vsel %vm1911, %v3175, 0
    %3178 = vmatpush.msra.mxu0 0.0
    %3179 = vmatpush.msra.mxu0 0.0
    %3180 = vmatpush.msra.mxu0 0.0
    %3181 = vmatpush.msra.mxu0 0.0
    %3182 = vmatpush.msra.mxu0 0.0
    %3183 = vmatpush.msra.mxu0 0.0
    %3184 = vmatpush.msra.mxu0 0.0
    %3185 = vmatpush.msra.mxu0 0.0
    %3186 = vmatpush.msra.mxu0 %v1669
    %3187 = vmatpush.msra.mxu0 %v1667
    %3188 = vmatpush.msra.mxu0 %v1665
    %3189 = vmatpush.msra.mxu0 %v1663
    %3190 = vmatpush.msra.mxu0 %v1661
    %3191 = vmatpush.msra.mxu0 %v1659
    %3192 = vmatpush.msra.mxu0 %v1657
    %3193 = vmatpush.msra.mxu0 %v1655
    %3194 = vmatmul.f32.gmra.mxu0 %v3176
    %v3195 = vpop.f32.mrf.mxu0
    %v3196 = vadd.f32 0.0, %v3195
    %3197 = vdwg.mxu0
    %3198 = vmatpush.msra.mxu0 0.0
    %3199 = vmatpush.msra.mxu0 0.0
    %3200 = vmatpush.msra.mxu0 0.0
    %3201 = vmatpush.msra.mxu0 0.0
    %3202 = vmatpush.msra.mxu0 0.0
    %3203 = vmatpush.msra.mxu0 0.0
    %3204 = vmatpush.msra.mxu0 0.0
    %3205 = vmatpush.msra.mxu0 0.0
    %3206 = vmatpush.msra.mxu0 %v1670
    %3207 = vmatpush.msra.mxu0 %v1668
    %3208 = vmatpush.msra.mxu0 %v1666
    %3209 = vmatpush.msra.mxu0 %v1664
    %3210 = vmatpush.msra.mxu0 %v1662
    %3211 = vmatpush.msra.mxu0 %v1660
    %3212 = vmatpush.msra.mxu0 %v1658
    %3213 = vmatpush.msra.mxu0 %v1656
    %3214 = vmatmul.f32.gmra.mxu0 %v3176
    %v3215 = vpop.f32.mrf.mxu0
    %v3216 = vadd.f32 0.0, %v3215
    %3217 = vdwg.mxu0
    %v3219 = vrot.slane %v3196, 2
    %v3220 = vrot.slane %v3196, 3
    %v3223 = vadd.f32 %v1700, %v3219
    %v3224 = vadd.f32 %v1703, %v3220
    %v3226 = vrot.slane %v3216, 7
    %v3229 = vadd.f32 %v1723, %v3226
    %v3230 = vadd.f32 %v1726, %v3216
    %v3231 = vxor.u32 %v3223, 2147483648
    %v3232 = vxor.u32 %v3224, 2147483648
    %v3233 = vmul.f32 %v3231, 1.442695
    %v3234 = vpow.pop %v3233
    %v3235 = vmul.f32 %v3232, 1.442695
    %v3236 = vpow.pop %v3235
    %v3237 = vadd.f32 %v3234, 1.0
    %v3238 = vadd.f32 %v3236, 1.0
    %v3239 = vrcp.pop %v3237
    %v3240 = vmul.f32 %v3237, %v3239
    %v3241 = vsub.f32 1.0, %v3240
    %v3242 = vmul.f32 %v3239, %v3241
    %v3243 = vadd.f32 %v3239, %v3242
    %vm3244 = vweird.f32 %v3237
    %vm3245 = vweird.f32 %v3239
    %vm3246 = vmor %vm3244, %vm3245
    %v3247 = vsel %vm3246, %v3239, %v3243
    %v3248 = vand.u32 2147483647, %v3237
    %vm3249 = vcmp.eq.f32.partialorder %v3248, 8.507059e+37
    %v3250 = vand.u32 %v3237, 2147483648
    %v3251 = vor.u32 1.1754944e-38, %v3250
    %v3252 = vsel %vm3249, %v3251, %v3247
    %v3253 = vmul.f32 1.0, %v3252
    %v3254 = vrcp.pop %v3238
    %v3255 = vmul.f32 %v3238, %v3254
    %v3256 = vsub.f32 1.0, %v3255
    %v3257 = vmul.f32 %v3254, %v3256
    %v3258 = vadd.f32 %v3254, %v3257
    %vm3259 = vweird.f32 %v3238
    %vm3260 = vweird.f32 %v3254
    %vm3261 = vmor %vm3259, %vm3260
    %v3262 = vsel %vm3261, %v3254, %v3258
    %v3263 = vand.u32 2147483647, %v3238
    %vm3264 = vcmp.eq.f32.partialorder %v3263, 8.507059e+37
    %v3265 = vand.u32 %v3238, 2147483648
    %v3266 = vor.u32 1.1754944e-38, %v3265
    %v3267 = vsel %vm3264, %v3266, %v3262
    %v3268 = vmul.f32 1.0, %v3267
    %v3269 = vtanh.pop %v3223
    %v3270 = vtanh.pop %v3224
    %v3273 = vrot.slane %v3045, 7
    %v3274 = vrot.slane %v3046, 7
    %v3277 = vmul.f32 %v3253, %v3273
    %v3278 = vmul.f32 %v3268, %v3274
    %3281 = vrot.lane.b32.xlu0 %v3269, 64
    %v3282 = vpop.permute.xlu0 %3281
    %3283 = vrot.lane.b32.xlu0 %v3270, 64
    %v3284 = vpop.permute.xlu0 %3283
    %v3287 = vmul.f32 %v3253, %v3282
    %v3288 = vmul.f32 %v3268, %v3284
    %3291 = vrot.lane.b32.xlu0 %v3287, 32
    %v3292 = vpop.permute.xlu0 %3291
    %3293 = vrot.lane.b32.xlu0 %v3288, 32
    %v3294 = vpop.permute.xlu0 %3293
    %v3297 = vadd.f32 %v3277, %v3292
    %v3298 = vadd.f32 %v3278, %v3294
    %v3299 = vtanh.pop %v3297
    %v3300 = vtanh.pop %v3298
    %3303 = vrot.lane.b32.xlu0 %v3299, 64
    %v3304 = vpop.permute.xlu0 %3303
    %3305 = vrot.lane.b32.xlu0 %v3300, 64
    %v3306 = vpop.permute.xlu0 %3305
    %v3309 = vmul.f32 %v3253, %v3304
    %v3310 = vmul.f32 %v3268, %v3306
    %v3311 = vxor.u32 %v3229, 2147483648
    %v3312 = vxor.u32 %v3230, 2147483648
    %v3313 = vmul.f32 %v3311, 1.442695
    %v3314 = vpow.pop %v3313
    %v3315 = vmul.f32 %v3312, 1.442695
    %v3316 = vpow.pop %v3315
    %v3317 = vadd.f32 %v3314, 1.0
    %v3318 = vadd.f32 %v3316, 1.0
    %v3319 = vrcp.pop %v3317
    %v3320 = vmul.f32 %v3317, %v3319
    %v3321 = vsub.f32 1.0, %v3320
    %v3322 = vmul.f32 %v3319, %v3321
    %v3323 = vadd.f32 %v3319, %v3322
    %vm3324 = vweird.f32 %v3317
    %vm3325 = vweird.f32 %v3319
    %vm3326 = vmor %vm3324, %vm3325
    %v3327 = vsel %vm3326, %v3319, %v3323
    %v3328 = vand.u32 2147483647, %v3317
    %vm3329 = vcmp.eq.f32.partialorder %v3328, 8.507059e+37
    %v3330 = vand.u32 %v3317, 2147483648
    %v3331 = vor.u32 1.1754944e-38, %v3330
    %v3332 = vsel %vm3329, %v3331, %v3327
    %v3333 = vmul.f32 1.0, %v3332
    %v3334 = vrcp.pop %v3318
    %v3335 = vmul.f32 %v3318, %v3334
    %v3336 = vsub.f32 1.0, %v3335
    %v3337 = vmul.f32 %v3334, %v3336
    %v3338 = vadd.f32 %v3334, %v3337
    %vm3339 = vweird.f32 %v3318
    %vm3340 = vweird.f32 %v3334
    %vm3341 = vmor %vm3339, %vm3340
    %v3342 = vsel %vm3341, %v3334, %v3338
    %v3343 = vand.u32 2147483647, %v3318
    %vm3344 = vcmp.eq.f32.partialorder %v3343, 8.507059e+37
    %v3345 = vand.u32 %v3318, 2147483648
    %v3346 = vor.u32 1.1754944e-38, %v3345
    %v3347 = vsel %vm3344, %v3346, %v3342
    %v3348 = vmul.f32 1.0, %v3347
    %v3349 = vtanh.pop %v3229
    %v3350 = vtanh.pop %v3230
    %v3353 = vrot.slane %v3125, 1
    %v3354 = vrot.slane %v3126, 1
    %v3357 = vmul.f32 %v3333, %v3353
    %v3358 = vmul.f32 %v3348, %v3354
    %3361 = vrot.lane.b32.xlu0 %v3349, 64
    %v3362 = vpop.permute.xlu0 %3361
    %3363 = vrot.lane.b32.xlu0 %v3350, 64
    %v3364 = vpop.permute.xlu0 %3363
    %v3367 = vmul.f32 %v3333, %v3362
    %v3368 = vmul.f32 %v3348, %v3364
    %3371 = vrot.lane.b32.xlu0 %v3367, 32
    %v3372 = vpop.permute.xlu0 %3371
    %3373 = vrot.lane.b32.xlu0 %v3368, 32
    %v3374 = vpop.permute.xlu0 %3373
    %v3377 = vadd.f32 %v3357, %v3372
    %v3378 = vadd.f32 %v3358, %v3374
    %v3379 = vtanh.pop %v3377
    %v3380 = vtanh.pop %v3378
    %3383 = vrot.lane.b32.xlu0 %v3379, 64
    %v3384 = vpop.permute.xlu0 %3383
    %3385 = vrot.lane.b32.xlu0 %v3380, 64
    %v3386 = vpop.permute.xlu0 %3385
    %v3389 = vmul.f32 %v3333, %v3384
    %v3390 = vmul.f32 %v3348, %v3386
    %v3393 = vrot.slane %v3310, 7
    %vm3394 = vcmask 1047559
    %v3395 = vsel %vm3394, %v3393, %v3309
    %3396 = vrot.lane.b32.xlu0 %v3395, 32
    %v3397 = vpop.permute.xlu0 %3396
    %v3401 = vrot.slane %v3389, 3
    %v3402 = vrot.slane %v3390, 2
    %v3403 = vsel %vm3394, %v3402, %v3401
    %3404 = vrot.lane.b32.xlu0 %v3403, 64
    %v3405 = vpop.permute.xlu0 %3404
    %v3407 = vsel %vm811, %v3397, %v3405
    %3408 = vrot.lane.b32.xlu0 %v3309, 32
    %v3409 = vpop.permute.xlu0 %3408
    %3410 = vrot.lane.b32.xlu0 %v3310, 32
    %v3411 = vpop.permute.xlu0 %3410
    %vm3414 = vcmask 260102
    %3415 = vst.msk [vmem:[#allocation2] sm:$0x40] %vm3414, %v3409
    %3416 = vst.msk [vmem:[#allocation2 + $0x8] sm:$0x40] %vm3414, %v3411
    %3417 = vrot.lane.b32.xlu0 %v3389, 64
    %v3418 = vpop.permute.xlu0 %3417
    %3419 = vrot.lane.b32.xlu0 %v3390, 64
    %v3420 = vpop.permute.xlu0 %3419
    %vm3423 = vcmask 517377
    %3424 = vst.msk [vmem:[#allocation2] sm:$0x2] %vm3423, %v3418
    %3425 = vst.msk [vmem:[#allocation2 + $0x8] sm:$0x2] %vm3423, %v3420
    %v3427 = vrot.slane %v3407, 6
    %v3428 = vsel %vm1911, %v3427, 0
    %3430 = vmatpush.msra.mxu0 0.0
    %3431 = vmatpush.msra.mxu0 0.0
    %3432 = vmatpush.msra.mxu0 0.0
    %3433 = vmatpush.msra.mxu0 0.0
    %3434 = vmatpush.msra.mxu0 0.0
    %3435 = vmatpush.msra.mxu0 0.0
    %3436 = vmatpush.msra.mxu0 0.0
    %3437 = vmatpush.msra.mxu0 0.0
    %3438 = vmatpush.msra.mxu0 %v1669
    %3439 = vmatpush.msra.mxu0 %v1667
    %3440 = vmatpush.msra.mxu0 %v1665
    %3441 = vmatpush.msra.mxu0 %v1663
    %3442 = vmatpush.msra.mxu0 %v1661
    %3443 = vmatpush.msra.mxu0 %v1659
    %3444 = vmatpush.msra.mxu0 %v1657
    %3445 = vmatpush.msra.mxu0 %v1655
    %3446 = vmatmul.f32.gmra.mxu0 %v3428
    %v3447 = vpop.f32.mrf.mxu0
    %v3448 = vadd.f32 0.0, %v3447
    %3449 = vdwg.mxu0
    %3450 = vmatpush.msra.mxu0 0.0
    %3451 = vmatpush.msra.mxu0 0.0
    %3452 = vmatpush.msra.mxu0 0.0
    %3453 = vmatpush.msra.mxu0 0.0
    %3454 = vmatpush.msra.mxu0 0.0
    %3455 = vmatpush.msra.mxu0 0.0
    %3456 = vmatpush.msra.mxu0 0.0
    %3457 = vmatpush.msra.mxu0 0.0
    %3458 = vmatpush.msra.mxu0 %v1670
    %3459 = vmatpush.msra.mxu0 %v1668
    %3460 = vmatpush.msra.mxu0 %v1666
    %3461 = vmatpush.msra.mxu0 %v1664
    %3462 = vmatpush.msra.mxu0 %v1662
    %3463 = vmatpush.msra.mxu0 %v1660
    %3464 = vmatpush.msra.mxu0 %v1658
    %3465 = vmatpush.msra.mxu0 %v1656
    %3466 = vmatmul.f32.gmra.mxu0 %v3428
    %v3467 = vpop.f32.mrf.mxu0
    %v3468 = vadd.f32 0.0, %v3467
    %3469 = vdwg.mxu0
    %v3471 = vrot.slane %v3448, 1
    %v3472 = vrot.slane %v3448, 2
    %v3475 = vadd.f32 %v1700, %v3471
    %v3476 = vadd.f32 %v1703, %v3472
    %v3478 = vrot.slane %v3468, 1
    %v3481 = vadd.f32 %v1723, %v3468
    %v3482 = vadd.f32 %v1726, %v3478
    %v3483 = vxor.u32 %v3475, 2147483648
    %v3484 = vxor.u32 %v3476, 2147483648
    %v3485 = vmul.f32 %v3483, 1.442695
    %v3486 = vpow.pop %v3485
    %v3487 = vmul.f32 %v3484, 1.442695
    %v3488 = vpow.pop %v3487
    %v3489 = vadd.f32 %v3486, 1.0
    %v3490 = vadd.f32 %v3488, 1.0
    %v3491 = vrcp.pop %v3489
    %v3492 = vmul.f32 %v3489, %v3491
    %v3493 = vsub.f32 1.0, %v3492
    %v3494 = vmul.f32 %v3491, %v3493
    %v3495 = vadd.f32 %v3491, %v3494
    %vm3496 = vweird.f32 %v3489
    %vm3497 = vweird.f32 %v3491
    %vm3498 = vmor %vm3496, %vm3497
    %v3499 = vsel %vm3498, %v3491, %v3495
    %v3500 = vand.u32 2147483647, %v3489
    %vm3501 = vcmp.eq.f32.partialorder %v3500, 8.507059e+37
    %v3502 = vand.u32 %v3489, 2147483648
    %v3503 = vor.u32 1.1754944e-38, %v3502
    %v3504 = vsel %vm3501, %v3503, %v3499
    %v3505 = vmul.f32 1.0, %v3504
    %v3506 = vrcp.pop %v3490
    %v3507 = vmul.f32 %v3490, %v3506
    %v3508 = vsub.f32 1.0, %v3507
    %v3509 = vmul.f32 %v3506, %v3508
    %v3510 = vadd.f32 %v3506, %v3509
    %vm3511 = vweird.f32 %v3490
    %vm3512 = vweird.f32 %v3506
    %vm3513 = vmor %vm3511, %vm3512
    %v3514 = vsel %vm3513, %v3506, %v3510
    %v3515 = vand.u32 2147483647, %v3490
    %vm3516 = vcmp.eq.f32.partialorder %v3515, 8.507059e+37
    %v3517 = vand.u32 %v3490, 2147483648
    %v3518 = vor.u32 1.1754944e-38, %v3517
    %v3519 = vsel %vm3516, %v3518, %v3514
    %v3520 = vmul.f32 1.0, %v3519
    %v3521 = vtanh.pop %v3475
    %v3522 = vtanh.pop %v3476
    %v3525 = vrot.slane %v3297, 7
    %v3526 = vrot.slane %v3298, 7
    %v3529 = vmul.f32 %v3505, %v3525
    %v3530 = vmul.f32 %v3520, %v3526
    %3533 = vrot.lane.b32.xlu0 %v3521, 64
    %v3534 = vpop.permute.xlu0 %3533
    %3535 = vrot.lane.b32.xlu0 %v3522, 64
    %v3536 = vpop.permute.xlu0 %3535
    %v3539 = vmul.f32 %v3505, %v3534
    %v3540 = vmul.f32 %v3520, %v3536
    %3543 = vrot.lane.b32.xlu0 %v3539, 32
    %v3544 = vpop.permute.xlu0 %3543
    %3545 = vrot.lane.b32.xlu0 %v3540, 32
    %v3546 = vpop.permute.xlu0 %3545
    %v3549 = vadd.f32 %v3529, %v3544
    %v3550 = vadd.f32 %v3530, %v3546
    %v3551 = vtanh.pop %v3549
    %v3552 = vtanh.pop %v3550
    %3555 = vrot.lane.b32.xlu0 %v3551, 64
    %v3556 = vpop.permute.xlu0 %3555
    %3557 = vrot.lane.b32.xlu0 %v3552, 64
    %v3558 = vpop.permute.xlu0 %3557
    %v3561 = vmul.f32 %v3505, %v3556
    %v3562 = vmul.f32 %v3520, %v3558
    %v3563 = vxor.u32 %v3481, 2147483648
    %v3564 = vxor.u32 %v3482, 2147483648
    %v3565 = vmul.f32 %v3563, 1.442695
    %v3566 = vpow.pop %v3565
    %v3567 = vmul.f32 %v3564, 1.442695
    %v3568 = vpow.pop %v3567
    %v3569 = vadd.f32 %v3566, 1.0
    %v3570 = vadd.f32 %v3568, 1.0
    %v3571 = vrcp.pop %v3569
    %v3572 = vmul.f32 %v3569, %v3571
    %v3573 = vsub.f32 1.0, %v3572
    %v3574 = vmul.f32 %v3571, %v3573
    %v3575 = vadd.f32 %v3571, %v3574
    %vm3576 = vweird.f32 %v3569
    %vm3577 = vweird.f32 %v3571
    %vm3578 = vmor %vm3576, %vm3577
    %v3579 = vsel %vm3578, %v3571, %v3575
    %v3580 = vand.u32 2147483647, %v3569
    %vm3581 = vcmp.eq.f32.partialorder %v3580, 8.507059e+37
    %v3582 = vand.u32 %v3569, 2147483648
    %v3583 = vor.u32 1.1754944e-38, %v3582
    %v3584 = vsel %vm3581, %v3583, %v3579
    %v3585 = vmul.f32 1.0, %v3584
    %v3586 = vrcp.pop %v3570
    %v3587 = vmul.f32 %v3570, %v3586
    %v3588 = vsub.f32 1.0, %v3587
    %v3589 = vmul.f32 %v3586, %v3588
    %v3590 = vadd.f32 %v3586, %v3589
    %vm3591 = vweird.f32 %v3570
    %vm3592 = vweird.f32 %v3586
    %vm3593 = vmor %vm3591, %vm3592
    %v3594 = vsel %vm3593, %v3586, %v3590
    %v3595 = vand.u32 2147483647, %v3570
    %vm3596 = vcmp.eq.f32.partialorder %v3595, 8.507059e+37
    %v3597 = vand.u32 %v3570, 2147483648
    %v3598 = vor.u32 1.1754944e-38, %v3597
    %v3599 = vsel %vm3596, %v3598, %v3594
    %v3600 = vmul.f32 1.0, %v3599
    %v3601 = vtanh.pop %v3481
    %v3602 = vtanh.pop %v3482
    %v3605 = vrot.slane %v3377, 1
    %v3606 = vrot.slane %v3378, 1
    %v3609 = vmul.f32 %v3585, %v3605
    %v3610 = vmul.f32 %v3600, %v3606
    %3613 = vrot.lane.b32.xlu0 %v3601, 64
    %v3614 = vpop.permute.xlu0 %3613
    %3615 = vrot.lane.b32.xlu0 %v3602, 64
    %v3616 = vpop.permute.xlu0 %3615
    %v3619 = vmul.f32 %v3585, %v3614
    %v3620 = vmul.f32 %v3600, %v3616
    %3623 = vrot.lane.b32.xlu0 %v3619, 32
    %v3624 = vpop.permute.xlu0 %3623
    %3625 = vrot.lane.b32.xlu0 %v3620, 32
    %v3626 = vpop.permute.xlu0 %3625
    %v3629 = vadd.f32 %v3609, %v3624
    %v3630 = vadd.f32 %v3610, %v3626
    %v3631 = vtanh.pop %v3629
    %v3632 = vtanh.pop %v3630
    %3635 = vrot.lane.b32.xlu0 %v3631, 64
    %v3636 = vpop.permute.xlu0 %3635
    %3637 = vrot.lane.b32.xlu0 %v3632, 64
    %v3638 = vpop.permute.xlu0 %3637
    %v3641 = vmul.f32 %v3585, %v3636
    %v3642 = vmul.f32 %v3600, %v3638
    %3645 = vrot.lane.b32.xlu0 %v3561, 32
    %v3646 = vpop.permute.xlu0 %3645
    %3647 = vrot.lane.b32.xlu0 %v3562, 32
    %v3648 = vpop.permute.xlu0 %3647
    %vm3651 = vcmask 261127
    %3652 = vst.msk [vmem:[#allocation2] sm:$0x80] %vm3651, %v3646
    %3653 = vst.msk [vmem:[#allocation2 + $0x8] sm:$0x80] %vm3651, %v3648
    %3656 = vrot.lane.b32.xlu0 %v3641, 64
    %v3657 = vpop.permute.xlu0 %3656
    %3658 = vrot.lane.b32.xlu0 %v3642, 64
    %v3659 = vpop.permute.xlu0 %3658
    %vm3662 = vcmask 516352
    %3663 = vst.msk [vmem:[#allocation2] sm:$0x1] %vm3662, %v3657
    %3664 = vst.msk [vmem:[#allocation2 + $0x8] sm:$0x1] %vm3662, %v3659
    %v3665 = vld [vmem:[#allocation2] sm:$0xff]
    %v3666 = vld [vmem:[#allocation2 + $0x8] sm:$0xff]
    %v3667 = vld [vmem:[%s53] sm:$0xff]
    %v3668 = vld [vmem:[%s53 + $0x8] sm:$0xff]
    %v3669 = vld [vmem:[%s53 + $0x10] sm:$0xff]
    %v3670 = vld [vmem:[%s53 + $0x18] sm:$0xff]
    %v3671 = vld [vmem:[%s53 + $0x20] sm:$0xff]
    %v3672 = vld [vmem:[%s53 + $0x28] sm:$0xff]
    %v3673 = vld [vmem:[%s53 + $0x30] sm:$0xff]
    %v3674 = vld [vmem:[%s53 + $0x38] sm:$0xff]
    %v3675 = vld [vmem:[%s53 + $0x40] sm:$0xff]
    %v3676 = vld [vmem:[%s53 + $0x48] sm:$0xff]
    %v3677 = vld [vmem:[%s53 + $0x50] sm:$0xff]
    %v3678 = vld [vmem:[%s53 + $0x58] sm:$0xff]
    %v3679 = vld [vmem:[%s53 + $0x60] sm:$0xff]
    %v3680 = vld [vmem:[%s53 + $0x68] sm:$0xff]
    %v3681 = vld [vmem:[%s53 + $0x70] sm:$0xff]
    %v3682 = vld [vmem:[%s53 + $0x78] sm:$0xff]
    %v3683 = vld [vmem:[%s55] sm:$0x3]
    %v3684 = vld [vmem:[%s57] sm:$0xff]
    %v3685 = vld [vmem:[%s57 + $0x10] sm:$0xff]
    %v3686 = vld [vmem:[%s57 + $0x20] sm:$0xff]
    %v3687 = vld [vmem:[%s57 + $0x30] sm:$0xff]
    %v3689 = vperm.slane %v3683, 0
    %v3690 = vperm.slane %v3683, 1
    %v3694 = vsel %vm1911, %v3665, 0
    %v3697 = vsel %vm1911, %v3666, 0
    %3699 = vmatpush.msra.mxu0 0.0
    %3700 = vmatpush.msra.mxu0 0.0
    %3701 = vmatpush.msra.mxu0 0.0
    %3702 = vmatpush.msra.mxu0 0.0
    %3703 = vmatpush.msra.mxu0 0.0
    %3704 = vmatpush.msra.mxu0 0.0
    %3705 = vmatpush.msra.mxu0 0.0
    %3706 = vmatpush.msra.mxu0 0.0
    %3707 = vmatpush.msra.mxu0 %v3681
    %3708 = vmatpush.msra.mxu0 %v3679
    %3709 = vmatpush.msra.mxu0 %v3677
    %3710 = vmatpush.msra.mxu0 %v3675
    %3711 = vmatpush.msra.mxu0 %v3673
    %3712 = vmatpush.msra.mxu0 %v3671
    %3713 = vmatpush.msra.mxu0 %v3669
    %3714 = vmatpush.msra.mxu0 %v3667
    %3715 = vmatmul.f32.gmra.mxu0 %v3694
    %v3716 = vpop.f32.mrf.mxu0
    %v3717 = vadd.f32 %v3689, %v3716
    %3718 = vmatmul.f32.gmra.mxu0 %v3697
    %v3719 = vpop.f32.mrf.mxu0
    %v3720 = vadd.f32 %v3689, %v3719
    %3721 = vdwg.mxu0
    %3722 = vmatpush.msra.mxu0 0.0
    %3723 = vmatpush.msra.mxu0 0.0
    %3724 = vmatpush.msra.mxu0 0.0
    %3725 = vmatpush.msra.mxu0 0.0
    %3726 = vmatpush.msra.mxu0 0.0
    %3727 = vmatpush.msra.mxu0 0.0
    %3728 = vmatpush.msra.mxu0 0.0
    %3729 = vmatpush.msra.mxu0 0.0
    %3730 = vmatpush.msra.mxu0 %v3682
    %3731 = vmatpush.msra.mxu0 %v3680
    %3732 = vmatpush.msra.mxu0 %v3678
    %3733 = vmatpush.msra.mxu0 %v3676
    %3734 = vmatpush.msra.mxu0 %v3674
    %3735 = vmatpush.msra.mxu0 %v3672
    %3736 = vmatpush.msra.mxu0 %v3670
    %3737 = vmatpush.msra.mxu0 %v3668
    %3738 = vmatmul.f32.gmra.mxu0 %v3694
    %v3739 = vpop.f32.mrf.mxu0
    %v3740 = vadd.f32 %v3690, %v3739
    %3741 = vmatmul.f32.gmra.mxu0 %v3697
    %v3742 = vpop.f32.mrf.mxu0
    %v3743 = vadd.f32 %v3690, %v3742
    %3744 = vdwg.mxu0
    %v3745 = vxor.u32 %v3717, 2147483648
    %v3746 = vxor.u32 %v3720, 2147483648
    %v3747 = vmul.f32 %v3745, 1.442695
    %v3748 = vpow.pop %v3747
    %v3749 = vmul.f32 %v3746, 1.442695
    %v3750 = vpow.pop %v3749
    %v3751 = vadd.f32 %v3748, 1.0
    %v3752 = vadd.f32 %v3750, 1.0
    %v3753 = vrcp.pop %v3751
    %v3754 = vmul.f32 %v3751, %v3753
    %v3755 = vsub.f32 1.0, %v3754
    %v3756 = vmul.f32 %v3753, %v3755
    %v3757 = vadd.f32 %v3753, %v3756
    %vm3758 = vweird.f32 %v3751
    %vm3759 = vweird.f32 %v3753
    %vm3760 = vmor %vm3758, %vm3759
    %v3761 = vsel %vm3760, %v3753, %v3757
    %v3762 = vand.u32 2147483647, %v3751
    %vm3763 = vcmp.eq.f32.partialorder %v3762, 8.507059e+37
    %v3764 = vand.u32 %v3751, 2147483648
    %v3765 = vor.u32 1.1754944e-38, %v3764
    %v3766 = vsel %vm3763, %v3765, %v3761
    %v3767 = vmul.f32 1.0, %v3766
    %v3768 = vrcp.pop %v3752
    %v3769 = vmul.f32 %v3752, %v3768
    %v3770 = vsub.f32 1.0, %v3769
    %v3771 = vmul.f32 %v3768, %v3770
    %v3772 = vadd.f32 %v3768, %v3771
    %vm3773 = vweird.f32 %v3752
    %vm3774 = vweird.f32 %v3768
    %vm3775 = vmor %vm3773, %vm3774
    %v3776 = vsel %vm3775, %v3768, %v3772
    %v3777 = vand.u32 2147483647, %v3752
    %vm3778 = vcmp.eq.f32.partialorder %v3777, 8.507059e+37
    %v3779 = vand.u32 %v3752, 2147483648
    %v3780 = vor.u32 1.1754944e-38, %v3779
    %v3781 = vsel %vm3778, %v3780, %v3776
    %v3782 = vmul.f32 1.0, %v3781
    %v3783 = vtanh.pop %v3717
    %v3784 = vtanh.pop %v3720
    %v3785 = vmul.f32 %v3767, 0.0
    %v3786 = vmul.f32 %v3782, 0.0
    %3789 = vrot.lane.b32.xlu0 %v3783, 64
    %v3790 = vpop.permute.xlu0 %3789
    %3791 = vrot.lane.b32.xlu0 %v3784, 64
    %v3792 = vpop.permute.xlu0 %3791
    %v3795 = vmul.f32 %v3767, %v3790
    %v3796 = vmul.f32 %v3782, %v3792
    %3799 = vrot.lane.b32.xlu0 %v3795, 32
    %v3800 = vpop.permute.xlu0 %3799
    %3801 = vrot.lane.b32.xlu0 %v3796, 32
    %v3802 = vpop.permute.xlu0 %3801
    %v3805 = vadd.f32 %v3785, %v3800
    %v3806 = vadd.f32 %v3786, %v3802
    %v3807 = vtanh.pop %v3805
    %v3808 = vtanh.pop %v3806
    %3811 = vrot.lane.b32.xlu0 %v3807, 64
    %v3812 = vpop.permute.xlu0 %3811
    %3813 = vrot.lane.b32.xlu0 %v3808, 64
    %v3814 = vpop.permute.xlu0 %3813
    %v3817 = vmul.f32 %v3767, %v3812
    %v3818 = vmul.f32 %v3782, %v3814
    %v3821 = vrot.slane %v3818, 7
    %v3822 = vsel %vm1879, %v3821, %v3817
    %3823 = vrot.lane.b32.xlu0 %v3822, 32
    %v3824 = vpop.permute.xlu0 %3823
    %v3825 = vsel %vm811, %v3824, 0
    %3827 = vmatpush.msra.mxu0 0.0
    %3828 = vmatpush.msra.mxu0 0.0
    %3829 = vmatpush.msra.mxu0 0.0
    %3830 = vmatpush.msra.mxu0 0.0
    %3831 = vmatpush.msra.mxu0 0.0
    %3832 = vmatpush.msra.mxu0 0.0
    %3833 = vmatpush.msra.mxu0 0.0
    %3834 = vmatpush.msra.mxu0 0.0
    %3835 = vmatpush.msra.mxu0 0.0
    %3836 = vmatpush.msra.mxu0 0.0
    %3837 = vmatpush.msra.mxu0 0.0
    %3838 = vmatpush.msra.mxu0 0.0
    %3839 = vmatpush.msra.mxu0 %v3687
    %3840 = vmatpush.msra.mxu0 %v3686
    %3841 = vmatpush.msra.mxu0 %v3685
    %3842 = vmatpush.msra.mxu0 %v3684
    %3843 = vmatmul.f32.gmra.mxu0 %v3825
    %v3844 = vpop.f32.mrf.mxu0
    %v3845 = vadd.f32 0.0, %v3844
    %3846 = vdwg.mxu0
    %v3848 = vrot.slane %v3845, 7
    %v3851 = vadd.f32 %v3717, %v3848
    %v3852 = vadd.f32 %v3720, %v3845
    %v3853 = vxor.u32 %v3851, 2147483648
    %v3854 = vxor.u32 %v3852, 2147483648
    %v3855 = vmul.f32 %v3853, 1.442695
    %v3856 = vpow.pop %v3855
    %v3857 = vmul.f32 %v3854, 1.442695
    %v3858 = vpow.pop %v3857
    %v3859 = vadd.f32 %v3856, 1.0
    %v3860 = vadd.f32 %v3858, 1.0
    %v3861 = vrcp.pop %v3859
    %v3862 = vmul.f32 %v3859, %v3861
    %v3863 = vsub.f32 1.0, %v3862
    %v3864 = vmul.f32 %v3861, %v3863
    %v3865 = vadd.f32 %v3861, %v3864
    %vm3866 = vweird.f32 %v3859
    %vm3867 = vweird.f32 %v3861
    %vm3868 = vmor %vm3866, %vm3867
    %v3869 = vsel %vm3868, %v3861, %v3865
    %v3870 = vand.u32 2147483647, %v3859
    %vm3871 = vcmp.eq.f32.partialorder %v3870, 8.507059e+37
    %v3872 = vand.u32 %v3859, 2147483648
    %v3873 = vor.u32 1.1754944e-38, %v3872
    %v3874 = vsel %vm3871, %v3873, %v3869
    %v3875 = vmul.f32 1.0, %v3874
    %v3876 = vrcp.pop %v3860
    %v3877 = vmul.f32 %v3860, %v3876
    %v3878 = vsub.f32 1.0, %v3877
    %v3879 = vmul.f32 %v3876, %v3878
    %v3880 = vadd.f32 %v3876, %v3879
    %vm3881 = vweird.f32 %v3860
    %vm3882 = vweird.f32 %v3876
    %vm3883 = vmor %vm3881, %vm3882
    %v3884 = vsel %vm3883, %v3876, %v3880
    %v3885 = vand.u32 2147483647, %v3860
    %vm3886 = vcmp.eq.f32.partialorder %v3885, 8.507059e+37
    %v3887 = vand.u32 %v3860, 2147483648
    %v3888 = vor.u32 1.1754944e-38, %v3887
    %v3889 = vsel %vm3886, %v3888, %v3884
    %v3890 = vmul.f32 1.0, %v3889
    %v3891 = vtanh.pop %v3851
    %v3892 = vtanh.pop %v3852
    %v3895 = vrot.slane %v3805, 7
    %v3896 = vrot.slane %v3806, 7
    %v3899 = vmul.f32 %v3875, %v3895
    %v3900 = vmul.f32 %v3890, %v3896
    %3903 = vrot.lane.b32.xlu0 %v3891, 64
    %v3904 = vpop.permute.xlu0 %3903
    %3905 = vrot.lane.b32.xlu0 %v3892, 64
    %v3906 = vpop.permute.xlu0 %3905
    %v3909 = vmul.f32 %v3875, %v3904
    %v3910 = vmul.f32 %v3890, %v3906
    %3913 = vrot.lane.b32.xlu0 %v3909, 32
    %v3914 = vpop.permute.xlu0 %3913
    %3915 = vrot.lane.b32.xlu0 %v3910, 32
    %v3916 = vpop.permute.xlu0 %3915
    %v3919 = vadd.f32 %v3899, %v3914
    %v3920 = vadd.f32 %v3900, %v3916
    %v3921 = vtanh.pop %v3919
    %v3922 = vtanh.pop %v3920
    %3925 = vrot.lane.b32.xlu0 %v3921, 64
    %v3926 = vpop.permute.xlu0 %3925
    %3927 = vrot.lane.b32.xlu0 %v3922, 64
    %v3928 = vpop.permute.xlu0 %3927
    %v3931 = vmul.f32 %v3875, %v3926
    %v3932 = vmul.f32 %v3890, %v3928
    %v3935 = vrot.slane %v3931, 1
    %v3936 = vsel %vm1879, %v3932, %v3935
    %3937 = vrot.lane.b32.xlu0 %v3936, 32
    %v3938 = vpop.permute.xlu0 %3937
    %v3939 = vsel %vm811, %v3938, 0
    %3941 = vmatpush.msra.mxu0 0.0
    %3942 = vmatpush.msra.mxu0 0.0
    %3943 = vmatpush.msra.mxu0 0.0
    %3944 = vmatpush.msra.mxu0 0.0
    %3945 = vmatpush.msra.mxu0 0.0
    %3946 = vmatpush.msra.mxu0 0.0
    %3947 = vmatpush.msra.mxu0 0.0
    %3948 = vmatpush.msra.mxu0 0.0
    %3949 = vmatpush.msra.mxu0 0.0
    %3950 = vmatpush.msra.mxu0 0.0
    %3951 = vmatpush.msra.mxu0 0.0
    %3952 = vmatpush.msra.mxu0 0.0
    %3953 = vmatpush.msra.mxu0 %v3687
    %3954 = vmatpush.msra.mxu0 %v3686
    %3955 = vmatpush.msra.mxu0 %v3685
    %3956 = vmatpush.msra.mxu0 %v3684
    %3957 = vmatmul.f32.gmra.mxu0 %v3939
    %v3958 = vpop.f32.mrf.mxu0
    %v3959 = vadd.f32 0.0, %v3958
    %3960 = vdwg.mxu0
    %v3962 = vrot.slane %v3959, 6
    %v3963 = vrot.slane %v3959, 7
    %v3966 = vadd.f32 %v3717, %v3962
    %v3967 = vadd.f32 %v3720, %v3963
    %v3968 = vxor.u32 %v3966, 2147483648
    %v3969 = vxor.u32 %v3967, 2147483648
    %v3970 = vmul.f32 %v3968, 1.442695
    %v3971 = vpow.pop %v3970
    %v3972 = vmul.f32 %v3969, 1.442695
    %v3973 = vpow.pop %v3972
    %v3974 = vadd.f32 %v3971, 1.0
    %v3975 = vadd.f32 %v3973, 1.0
    %v3976 = vrcp.pop %v3974
    %v3977 = vmul.f32 %v3974, %v3976
    %v3978 = vsub.f32 1.0, %v3977
    %v3979 = vmul.f32 %v3976, %v3978
    %v3980 = vadd.f32 %v3976, %v3979
    %vm3981 = vweird.f32 %v3974
    %vm3982 = vweird.f32 %v3976
    %vm3983 = vmor %vm3981, %vm3982
    %v3984 = vsel %vm3983, %v3976, %v3980
    %v3985 = vand.u32 2147483647, %v3974
    %vm3986 = vcmp.eq.f32.partialorder %v3985, 8.507059e+37
    %v3987 = vand.u32 %v3974, 2147483648
    %v3988 = vor.u32 1.1754944e-38, %v3987
    %v3989 = vsel %vm3986, %v3988, %v3984
    %v3990 = vmul.f32 1.0, %v3989
    %v3991 = vrcp.pop %v3975
    %v3992 = vmul.f32 %v3975, %v3991
    %v3993 = vsub.f32 1.0, %v3992
    %v3994 = vmul.f32 %v3991, %v3993
    %v3995 = vadd.f32 %v3991, %v3994
    %vm3996 = vweird.f32 %v3975
    %vm3997 = vweird.f32 %v3991
    %vm3998 = vmor %vm3996, %vm3997
    %v3999 = vsel %vm3998, %v3991, %v3995
    %v4000 = vand.u32 2147483647, %v3975
    %vm4001 = vcmp.eq.f32.partialorder %v4000, 8.507059e+37
    %v4002 = vand.u32 %v3975, 2147483648
    %v4003 = vor.u32 1.1754944e-38, %v4002
    %v4004 = vsel %vm4001, %v4003, %v3999
    %v4005 = vmul.f32 1.0, %v4004
    %v4006 = vtanh.pop %v3966
    %v4007 = vtanh.pop %v3967
    %v4010 = vrot.slane %v3919, 7
    %v4011 = vrot.slane %v3920, 7
    %v4014 = vmul.f32 %v3990, %v4010
    %v4015 = vmul.f32 %v4005, %v4011
    %4018 = vrot.lane.b32.xlu0 %v4006, 64
    %v4019 = vpop.permute.xlu0 %4018
    %4020 = vrot.lane.b32.xlu0 %v4007, 64
    %v4021 = vpop.permute.xlu0 %4020
    %v4024 = vmul.f32 %v3990, %v4019
    %v4025 = vmul.f32 %v4005, %v4021
    %4028 = vrot.lane.b32.xlu0 %v4024, 32
    %v4029 = vpop.permute.xlu0 %4028
    %4030 = vrot.lane.b32.xlu0 %v4025, 32
    %v4031 = vpop.permute.xlu0 %4030
    %v4034 = vadd.f32 %v4014, %v4029
    %v4035 = vadd.f32 %v4015, %v4031
    %v4036 = vtanh.pop %v4034
    %v4037 = vtanh.pop %v4035
    %4040 = vrot.lane.b32.xlu0 %v4036, 64
    %v4041 = vpop.permute.xlu0 %4040
    %4042 = vrot.lane.b32.xlu0 %v4037, 64
    %v4043 = vpop.permute.xlu0 %4042
    %v4046 = vmul.f32 %v3990, %v4041
    %v4047 = vmul.f32 %v4005, %v4043
    %v4050 = vrot.slane %v4046, 2
    %v4051 = vrot.slane %v4047, 1
    %v4052 = vsel %vm1879, %v4051, %v4050
    %4053 = vrot.lane.b32.xlu0 %v4052, 32
    %v4054 = vpop.permute.xlu0 %4053
    %v4055 = vsel %vm811, %v4054, 0
    %4057 = vmatpush.msra.mxu0 0.0
    %4058 = vmatpush.msra.mxu0 0.0
    %4059 = vmatpush.msra.mxu0 0.0
    %4060 = vmatpush.msra.mxu0 0.0
    %4061 = vmatpush.msra.mxu0 0.0
    %4062 = vmatpush.msra.mxu0 0.0
    %4063 = vmatpush.msra.mxu0 0.0
    %4064 = vmatpush.msra.mxu0 0.0
    %4065 = vmatpush.msra.mxu0 0.0
    %4066 = vmatpush.msra.mxu0 0.0
    %4067 = vmatpush.msra.mxu0 0.0
    %4068 = vmatpush.msra.mxu0 0.0
    %4069 = vmatpush.msra.mxu0 %v3687
    %4070 = vmatpush.msra.mxu0 %v3686
    %4071 = vmatpush.msra.mxu0 %v3685
    %4072 = vmatpush.msra.mxu0 %v3684
    %4073 = vmatmul.f32.gmra.mxu0 %v4055
    %v4074 = vpop.f32.mrf.mxu0
    %v4075 = vadd.f32 0.0, %v4074
    %4076 = vdwg.mxu0
    %v4078 = vrot.slane %v4075, 5
    %v4079 = vrot.slane %v4075, 6
    %v4082 = vadd.f32 %v3717, %v4078
    %v4083 = vadd.f32 %v3720, %v4079
    %v4084 = vxor.u32 %v4082, 2147483648
    %v4085 = vxor.u32 %v4083, 2147483648
    %v4086 = vmul.f32 %v4084, 1.442695
    %v4087 = vpow.pop %v4086
    %v4088 = vmul.f32 %v4085, 1.442695
    %v4089 = vpow.pop %v4088
    %v4090 = vadd.f32 %v4087, 1.0
    %v4091 = vadd.f32 %v4089, 1.0
    %v4092 = vrcp.pop %v4090
    %v4093 = vmul.f32 %v4090, %v4092
    %v4094 = vsub.f32 1.0, %v4093
    %v4095 = vmul.f32 %v4092, %v4094
    %v4096 = vadd.f32 %v4092, %v4095
    %vm4097 = vweird.f32 %v4090
    %vm4098 = vweird.f32 %v4092
    %vm4099 = vmor %vm4097, %vm4098
    %v4100 = vsel %vm4099, %v4092, %v4096
    %v4101 = vand.u32 2147483647, %v4090
    %vm4102 = vcmp.eq.f32.partialorder %v4101, 8.507059e+37
    %v4103 = vand.u32 %v4090, 2147483648
    %v4104 = vor.u32 1.1754944e-38, %v4103
    %v4105 = vsel %vm4102, %v4104, %v4100
    %v4106 = vmul.f32 1.0, %v4105
    %v4107 = vrcp.pop %v4091
    %v4108 = vmul.f32 %v4091, %v4107
    %v4109 = vsub.f32 1.0, %v4108
    %v4110 = vmul.f32 %v4107, %v4109
    %v4111 = vadd.f32 %v4107, %v4110
    %vm4112 = vweird.f32 %v4091
    %vm4113 = vweird.f32 %v4107
    %vm4114 = vmor %vm4112, %vm4113
    %v4115 = vsel %vm4114, %v4107, %v4111
    %v4116 = vand.u32 2147483647, %v4091
    %vm4117 = vcmp.eq.f32.partialorder %v4116, 8.507059e+37
    %v4118 = vand.u32 %v4091, 2147483648
    %v4119 = vor.u32 1.1754944e-38, %v4118
    %v4120 = vsel %vm4117, %v4119, %v4115
    %v4121 = vmul.f32 1.0, %v4120
    %v4122 = vtanh.pop %v4082
    %v4123 = vtanh.pop %v4083
    %v4126 = vrot.slane %v4034, 7
    %v4127 = vrot.slane %v4035, 7
    %v4130 = vmul.f32 %v4106, %v4126
    %v4131 = vmul.f32 %v4121, %v4127
    %4134 = vrot.lane.b32.xlu0 %v4122, 64
    %v4135 = vpop.permute.xlu0 %4134
    %4136 = vrot.lane.b32.xlu0 %v4123, 64
    %v4137 = vpop.permute.xlu0 %4136
    %v4140 = vmul.f32 %v4106, %v4135
    %v4141 = vmul.f32 %v4121, %v4137
    %4144 = vrot.lane.b32.xlu0 %v4140, 32
    %v4145 = vpop.permute.xlu0 %4144
    %4146 = vrot.lane.b32.xlu0 %v4141, 32
    %v4147 = vpop.permute.xlu0 %4146
    %v4150 = vadd.f32 %v4130, %v4145
    %v4151 = vadd.f32 %v4131, %v4147
    %v4152 = vtanh.pop %v4150
    %v4153 = vtanh.pop %v4151
    %4156 = vrot.lane.b32.xlu0 %v4152, 64
    %v4157 = vpop.permute.xlu0 %4156
    %4158 = vrot.lane.b32.xlu0 %v4153, 64
    %v4159 = vpop.permute.xlu0 %4158
    %v4162 = vmul.f32 %v4106, %v4157
    %v4163 = vmul.f32 %v4121, %v4159
    %v4166 = vrot.slane %v4162, 3
    %v4167 = vrot.slane %v4163, 2
    %v4168 = vsel %vm1879, %v4167, %v4166
    %4169 = vrot.lane.b32.xlu0 %v4168, 32
    %v4170 = vpop.permute.xlu0 %4169
    %v4171 = vsel %vm811, %v4170, 0
    %4173 = vmatpush.msra.mxu0 0.0
    %4174 = vmatpush.msra.mxu0 0.0
    %4175 = vmatpush.msra.mxu0 0.0
    %4176 = vmatpush.msra.mxu0 0.0
    %4177 = vmatpush.msra.mxu0 0.0
    %4178 = vmatpush.msra.mxu0 0.0
    %4179 = vmatpush.msra.mxu0 0.0
    %4180 = vmatpush.msra.mxu0 0.0
    %4181 = vmatpush.msra.mxu0 0.0
    %4182 = vmatpush.msra.mxu0 0.0
    %4183 = vmatpush.msra.mxu0 0.0
    %4184 = vmatpush.msra.mxu0 0.0
    %4185 = vmatpush.msra.mxu0 %v3687
    %4186 = vmatpush.msra.mxu0 %v3686
    %4187 = vmatpush.msra.mxu0 %v3685
    %4188 = vmatpush.msra.mxu0 %v3684
    %4189 = vmatmul.f32.gmra.mxu0 %v4171
    %v4190 = vpop.f32.mrf.mxu0
    %v4191 = vadd.f32 0.0, %v4190
    %4192 = vdwg.mxu0
    %v4194 = vrot.slane %v4191, 4
    %v4195 = vrot.slane %v4191, 5
    %v4198 = vadd.f32 %v3717, %v4194
    %v4199 = vadd.f32 %v3720, %v4195
    %v4200 = vxor.u32 %v4198, 2147483648
    %v4201 = vxor.u32 %v4199, 2147483648
    %v4202 = vmul.f32 %v4200, 1.442695
    %v4203 = vpow.pop %v4202
    %v4204 = vmul.f32 %v4201, 1.442695
    %v4205 = vpow.pop %v4204
    %v4206 = vadd.f32 %v4203, 1.0
    %v4207 = vadd.f32 %v4205, 1.0
    %v4208 = vrcp.pop %v4206
    %v4209 = vmul.f32 %v4206, %v4208
    %v4210 = vsub.f32 1.0, %v4209
    %v4211 = vmul.f32 %v4208, %v4210
    %v4212 = vadd.f32 %v4208, %v4211
    %vm4213 = vweird.f32 %v4206
    %vm4214 = vweird.f32 %v4208
    %vm4215 = vmor %vm4213, %vm4214
    %v4216 = vsel %vm4215, %v4208, %v4212
    %v4217 = vand.u32 2147483647, %v4206
    %vm4218 = vcmp.eq.f32.partialorder %v4217, 8.507059e+37
    %v4219 = vand.u32 %v4206, 2147483648
    %v4220 = vor.u32 1.1754944e-38, %v4219
    %v4221 = vsel %vm4218, %v4220, %v4216
    %v4222 = vmul.f32 1.0, %v4221
    %v4223 = vrcp.pop %v4207
    %v4224 = vmul.f32 %v4207, %v4223
    %v4225 = vsub.f32 1.0, %v4224
    %v4226 = vmul.f32 %v4223, %v4225
    %v4227 = vadd.f32 %v4223, %v4226
    %vm4228 = vweird.f32 %v4207
    %vm4229 = vweird.f32 %v4223
    %vm4230 = vmor %vm4228, %vm4229
    %v4231 = vsel %vm4230, %v4223, %v4227
    %v4232 = vand.u32 2147483647, %v4207
    %vm4233 = vcmp.eq.f32.partialorder %v4232, 8.507059e+37
    %v4234 = vand.u32 %v4207, 2147483648
    %v4235 = vor.u32 1.1754944e-38, %v4234
    %v4236 = vsel %vm4233, %v4235, %v4231
    %v4237 = vmul.f32 1.0, %v4236
    %v4238 = vtanh.pop %v4198
    %v4239 = vtanh.pop %v4199
    %v4242 = vrot.slane %v4150, 7
    %v4243 = vrot.slane %v4151, 7
    %v4246 = vmul.f32 %v4222, %v4242
    %v4247 = vmul.f32 %v4237, %v4243
    %4250 = vrot.lane.b32.xlu0 %v4238, 64
    %v4251 = vpop.permute.xlu0 %4250
    %4252 = vrot.lane.b32.xlu0 %v4239, 64
    %v4253 = vpop.permute.xlu0 %4252
    %v4256 = vmul.f32 %v4222, %v4251
    %v4257 = vmul.f32 %v4237, %v4253
    %4260 = vrot.lane.b32.xlu0 %v4256, 32
    %v4261 = vpop.permute.xlu0 %4260
    %4262 = vrot.lane.b32.xlu0 %v4257, 32
    %v4263 = vpop.permute.xlu0 %4262
    %v4266 = vadd.f32 %v4246, %v4261
    %v4267 = vadd.f32 %v4247, %v4263
    %v4268 = vtanh.pop %v4266
    %v4269 = vtanh.pop %v4267
    %4272 = vrot.lane.b32.xlu0 %v4268, 64
    %v4273 = vpop.permute.xlu0 %4272
    %4274 = vrot.lane.b32.xlu0 %v4269, 64
    %v4275 = vpop.permute.xlu0 %4274
    %v4278 = vmul.f32 %v4222, %v4273
    %v4279 = vmul.f32 %v4237, %v4275
    %v4282 = vrot.slane %v4278, 4
    %v4283 = vrot.slane %v4279, 3
    %v4284 = vsel %vm1879, %v4283, %v4282
    %4285 = vrot.lane.b32.xlu0 %v4284, 32
    %v4286 = vpop.permute.xlu0 %4285
    %v4287 = vsel %vm811, %v4286, 0
    %4289 = vmatpush.msra.mxu0 0.0
    %4290 = vmatpush.msra.mxu0 0.0
    %4291 = vmatpush.msra.mxu0 0.0
    %4292 = vmatpush.msra.mxu0 0.0
    %4293 = vmatpush.msra.mxu0 0.0
    %4294 = vmatpush.msra.mxu0 0.0
    %4295 = vmatpush.msra.mxu0 0.0
    %4296 = vmatpush.msra.mxu0 0.0
    %4297 = vmatpush.msra.mxu0 0.0
    %4298 = vmatpush.msra.mxu0 0.0
    %4299 = vmatpush.msra.mxu0 0.0
    %4300 = vmatpush.msra.mxu0 0.0
    %4301 = vmatpush.msra.mxu0 %v3687
    %4302 = vmatpush.msra.mxu0 %v3686
    %4303 = vmatpush.msra.mxu0 %v3685
    %4304 = vmatpush.msra.mxu0 %v3684
    %4305 = vmatmul.f32.gmra.mxu0 %v4287
    %v4306 = vpop.f32.mrf.mxu0
    %v4307 = vadd.f32 0.0, %v4306
    %4308 = vdwg.mxu0
    %v4310 = vrot.slane %v4307, 3
    %v4311 = vrot.slane %v4307, 4
    %v4314 = vadd.f32 %v3717, %v4310
    %v4315 = vadd.f32 %v3720, %v4311
    %v4316 = vxor.u32 %v4314, 2147483648
    %v4317 = vxor.u32 %v4315, 2147483648
    %v4318 = vmul.f32 %v4316, 1.442695
    %v4319 = vpow.pop %v4318
    %v4320 = vmul.f32 %v4317, 1.442695
    %v4321 = vpow.pop %v4320
    %v4322 = vadd.f32 %v4319, 1.0
    %v4323 = vadd.f32 %v4321, 1.0
    %v4324 = vrcp.pop %v4322
    %v4325 = vmul.f32 %v4322, %v4324
    %v4326 = vsub.f32 1.0, %v4325
    %v4327 = vmul.f32 %v4324, %v4326
    %v4328 = vadd.f32 %v4324, %v4327
    %vm4329 = vweird.f32 %v4322
    %vm4330 = vweird.f32 %v4324
    %vm4331 = vmor %vm4329, %vm4330
    %v4332 = vsel %vm4331, %v4324, %v4328
    %v4333 = vand.u32 2147483647, %v4322
    %vm4334 = vcmp.eq.f32.partialorder %v4333, 8.507059e+37
    %v4335 = vand.u32 %v4322, 2147483648
    %v4336 = vor.u32 1.1754944e-38, %v4335
    %v4337 = vsel %vm4334, %v4336, %v4332
    %v4338 = vmul.f32 1.0, %v4337
    %v4339 = vrcp.pop %v4323
    %v4340 = vmul.f32 %v4323, %v4339
    %v4341 = vsub.f32 1.0, %v4340
    %v4342 = vmul.f32 %v4339, %v4341
    %v4343 = vadd.f32 %v4339, %v4342
    %vm4344 = vweird.f32 %v4323
    %vm4345 = vweird.f32 %v4339
    %vm4346 = vmor %vm4344, %vm4345
    %v4347 = vsel %vm4346, %v4339, %v4343
    %v4348 = vand.u32 2147483647, %v4323
    %vm4349 = vcmp.eq.f32.partialorder %v4348, 8.507059e+37
    %v4350 = vand.u32 %v4323, 2147483648
    %v4351 = vor.u32 1.1754944e-38, %v4350
    %v4352 = vsel %vm4349, %v4351, %v4347
    %v4353 = vmul.f32 1.0, %v4352
    %v4354 = vtanh.pop %v4314
    %v4355 = vtanh.pop %v4315
    %v4358 = vrot.slane %v4266, 7
    %v4359 = vrot.slane %v4267, 7
    %v4362 = vmul.f32 %v4338, %v4358
    %v4363 = vmul.f32 %v4353, %v4359
    %4366 = vrot.lane.b32.xlu0 %v4354, 64
    %v4367 = vpop.permute.xlu0 %4366
    %4368 = vrot.lane.b32.xlu0 %v4355, 64
    %v4369 = vpop.permute.xlu0 %4368
    %v4372 = vmul.f32 %v4338, %v4367
    %v4373 = vmul.f32 %v4353, %v4369
    %4376 = vrot.lane.b32.xlu0 %v4372, 32
    %v4377 = vpop.permute.xlu0 %4376
    %4378 = vrot.lane.b32.xlu0 %v4373, 32
    %v4379 = vpop.permute.xlu0 %4378
    %v4382 = vadd.f32 %v4362, %v4377
    %v4383 = vadd.f32 %v4363, %v4379
    %v4384 = vtanh.pop %v4382
    %v4385 = vtanh.pop %v4383
    %4388 = vrot.lane.b32.xlu0 %v4384, 64
    %v4389 = vpop.permute.xlu0 %4388
    %4390 = vrot.lane.b32.xlu0 %v4385, 64
    %v4391 = vpop.permute.xlu0 %4390
    %v4394 = vmul.f32 %v4338, %v4389
    %v4395 = vmul.f32 %v4353, %v4391
    %v4398 = vrot.slane %v4394, 5
    %v4399 = vrot.slane %v4395, 4
    %v4400 = vsel %vm1879, %v4399, %v4398
    %4401 = vrot.lane.b32.xlu0 %v4400, 32
    %v4402 = vpop.permute.xlu0 %4401
    %v4403 = vsel %vm811, %v4402, 0
    %4405 = vmatpush.msra.mxu0 0.0
    %4406 = vmatpush.msra.mxu0 0.0
    %4407 = vmatpush.msra.mxu0 0.0
    %4408 = vmatpush.msra.mxu0 0.0
    %4409 = vmatpush.msra.mxu0 0.0
    %4410 = vmatpush.msra.mxu0 0.0
    %4411 = vmatpush.msra.mxu0 0.0
    %4412 = vmatpush.msra.mxu0 0.0
    %4413 = vmatpush.msra.mxu0 0.0
    %4414 = vmatpush.msra.mxu0 0.0
    %4415 = vmatpush.msra.mxu0 0.0
    %4416 = vmatpush.msra.mxu0 0.0
    %4417 = vmatpush.msra.mxu0 %v3687
    %4418 = vmatpush.msra.mxu0 %v3686
    %4419 = vmatpush.msra.mxu0 %v3685
    %4420 = vmatpush.msra.mxu0 %v3684
    %4421 = vmatmul.f32.gmra.mxu0 %v4403
    %v4422 = vpop.f32.mrf.mxu0
    %v4423 = vadd.f32 0.0, %v4422
    %4424 = vdwg.mxu0
    %v4426 = vrot.slane %v4423, 2
    %v4427 = vrot.slane %v4423, 3
    %v4430 = vadd.f32 %v3717, %v4426
    %v4431 = vadd.f32 %v3720, %v4427
    %v4432 = vxor.u32 %v4430, 2147483648
    %v4433 = vxor.u32 %v4431, 2147483648
    %v4434 = vmul.f32 %v4432, 1.442695
    %v4435 = vpow.pop %v4434
    %v4436 = vmul.f32 %v4433, 1.442695
    %v4437 = vpow.pop %v4436
    %v4438 = vadd.f32 %v4435, 1.0
    %v4439 = vadd.f32 %v4437, 1.0
    %v4440 = vrcp.pop %v4438
    %v4441 = vmul.f32 %v4438, %v4440
    %v4442 = vsub.f32 1.0, %v4441
    %v4443 = vmul.f32 %v4440, %v4442
    %v4444 = vadd.f32 %v4440, %v4443
    %vm4445 = vweird.f32 %v4438
    %vm4446 = vweird.f32 %v4440
    %vm4447 = vmor %vm4445, %vm4446
    %v4448 = vsel %vm4447, %v4440, %v4444
    %v4449 = vand.u32 2147483647, %v4438
    %vm4450 = vcmp.eq.f32.partialorder %v4449, 8.507059e+37
    %v4451 = vand.u32 %v4438, 2147483648
    %v4452 = vor.u32 1.1754944e-38, %v4451
    %v4453 = vsel %vm4450, %v4452, %v4448
    %v4454 = vmul.f32 1.0, %v4453
    %v4455 = vrcp.pop %v4439
    %v4456 = vmul.f32 %v4439, %v4455
    %v4457 = vsub.f32 1.0, %v4456
    %v4458 = vmul.f32 %v4455, %v4457
    %v4459 = vadd.f32 %v4455, %v4458
    %vm4460 = vweird.f32 %v4439
    %vm4461 = vweird.f32 %v4455
    %vm4462 = vmor %vm4460, %vm4461
    %v4463 = vsel %vm4462, %v4455, %v4459
    %v4464 = vand.u32 2147483647, %v4439
    %vm4465 = vcmp.eq.f32.partialorder %v4464, 8.507059e+37
    %v4466 = vand.u32 %v4439, 2147483648
    %v4467 = vor.u32 1.1754944e-38, %v4466
    %v4468 = vsel %vm4465, %v4467, %v4463
    %v4469 = vmul.f32 1.0, %v4468
    %v4470 = vtanh.pop %v4430
    %v4471 = vtanh.pop %v4431
    %v4474 = vrot.slane %v4382, 7
    %v4475 = vrot.slane %v4383, 7
    %v4478 = vmul.f32 %v4454, %v4474
    %v4479 = vmul.f32 %v4469, %v4475
    %4482 = vrot.lane.b32.xlu0 %v4470, 64
    %v4483 = vpop.permute.xlu0 %4482
    %4484 = vrot.lane.b32.xlu0 %v4471, 64
    %v4485 = vpop.permute.xlu0 %4484
    %v4488 = vmul.f32 %v4454, %v4483
    %v4489 = vmul.f32 %v4469, %v4485
    %4492 = vrot.lane.b32.xlu0 %v4488, 32
    %v4493 = vpop.permute.xlu0 %4492
    %4494 = vrot.lane.b32.xlu0 %v4489, 32
    %v4495 = vpop.permute.xlu0 %4494
    %v4498 = vadd.f32 %v4478, %v4493
    %v4499 = vadd.f32 %v4479, %v4495
    %v4500 = vtanh.pop %v4498
    %v4501 = vtanh.pop %v4499
    %4504 = vrot.lane.b32.xlu0 %v4500, 64
    %v4505 = vpop.permute.xlu0 %4504
    %4506 = vrot.lane.b32.xlu0 %v4501, 64
    %v4507 = vpop.permute.xlu0 %4506
    %v4510 = vmul.f32 %v4454, %v4505
    %v4511 = vmul.f32 %v4469, %v4507
    %v4514 = vrot.slane %v4510, 6
    %v4515 = vrot.slane %v4511, 5
    %v4516 = vsel %vm1879, %v4515, %v4514
    %4517 = vrot.lane.b32.xlu0 %v4516, 32
    %v4518 = vpop.permute.xlu0 %4517
    %v4519 = vsel %vm811, %v4518, 0
    %4521 = vmatpush.msra.mxu0 0.0
    %4522 = vmatpush.msra.mxu0 0.0
    %4523 = vmatpush.msra.mxu0 0.0
    %4524 = vmatpush.msra.mxu0 0.0
    %4525 = vmatpush.msra.mxu0 0.0
    %4526 = vmatpush.msra.mxu0 0.0
    %4527 = vmatpush.msra.mxu0 0.0
    %4528 = vmatpush.msra.mxu0 0.0
    %4529 = vmatpush.msra.mxu0 0.0
    %4530 = vmatpush.msra.mxu0 0.0
    %4531 = vmatpush.msra.mxu0 0.0
    %4532 = vmatpush.msra.mxu0 0.0
    %4533 = vmatpush.msra.mxu0 %v3687
    %4534 = vmatpush.msra.mxu0 %v3686
    %4535 = vmatpush.msra.mxu0 %v3685
    %4536 = vmatpush.msra.mxu0 %v3684
    %4537 = vmatmul.f32.gmra.mxu0 %v4519
    %v4538 = vpop.f32.mrf.mxu0
    %v4539 = vadd.f32 0.0, %v4538
    %4540 = vdwg.mxu0
    %v4542 = vrot.slane %v4539, 1
    %v4543 = vrot.slane %v4539, 2
    %v4546 = vadd.f32 %v3717, %v4542
    %v4547 = vadd.f32 %v3720, %v4543
    %v4548 = vxor.u32 %v4546, 2147483648
    %v4549 = vxor.u32 %v4547, 2147483648
    %v4550 = vmul.f32 %v4548, 1.442695
    %v4551 = vpow.pop %v4550
    %v4552 = vmul.f32 %v4549, 1.442695
    %v4553 = vpow.pop %v4552
    %v4554 = vadd.f32 %v4551, 1.0
    %v4555 = vadd.f32 %v4553, 1.0
    %v4556 = vrcp.pop %v4554
    %v4557 = vmul.f32 %v4554, %v4556
    %v4558 = vsub.f32 1.0, %v4557
    %v4559 = vmul.f32 %v4556, %v4558
    %v4560 = vadd.f32 %v4556, %v4559
    %vm4561 = vweird.f32 %v4554
    %vm4562 = vweird.f32 %v4556
    %vm4563 = vmor %vm4561, %vm4562
    %v4564 = vsel %vm4563, %v4556, %v4560
    %v4565 = vand.u32 2147483647, %v4554
    %vm4566 = vcmp.eq.f32.partialorder %v4565, 8.507059e+37
    %v4567 = vand.u32 %v4554, 2147483648
    %v4568 = vor.u32 1.1754944e-38, %v4567
    %v4569 = vsel %vm4566, %v4568, %v4564
    %v4570 = vmul.f32 1.0, %v4569
    %v4571 = vrcp.pop %v4555
    %v4572 = vmul.f32 %v4555, %v4571
    %v4573 = vsub.f32 1.0, %v4572
    %v4574 = vmul.f32 %v4571, %v4573
    %v4575 = vadd.f32 %v4571, %v4574
    %vm4576 = vweird.f32 %v4555
    %vm4577 = vweird.f32 %v4571
    %vm4578 = vmor %vm4576, %vm4577
    %v4579 = vsel %vm4578, %v4571, %v4575
    %v4580 = vand.u32 2147483647, %v4555
    %vm4581 = vcmp.eq.f32.partialorder %v4580, 8.507059e+37
    %v4582 = vand.u32 %v4555, 2147483648
    %v4583 = vor.u32 1.1754944e-38, %v4582
    %v4584 = vsel %vm4581, %v4583, %v4579
    %v4585 = vmul.f32 1.0, %v4584
    %v4586 = vtanh.pop %v4546
    %v4587 = vtanh.pop %v4547
    %v4590 = vrot.slane %v4498, 7
    %v4591 = vrot.slane %v4499, 7
    %v4594 = vmul.f32 %v4570, %v4590
    %v4595 = vmul.f32 %v4585, %v4591
    %4598 = vrot.lane.b32.xlu0 %v4586, 64
    %v4599 = vpop.permute.xlu0 %4598
    %4600 = vrot.lane.b32.xlu0 %v4587, 64
    %v4601 = vpop.permute.xlu0 %4600
    %v4604 = vmul.f32 %v4570, %v4599
    %v4605 = vmul.f32 %v4585, %v4601
    %4608 = vrot.lane.b32.xlu0 %v4604, 32
    %v4609 = vpop.permute.xlu0 %4608
    %4610 = vrot.lane.b32.xlu0 %v4605, 32
    %v4611 = vpop.permute.xlu0 %4610
    %v4614 = vadd.f32 %v4594, %v4609
    %v4615 = vadd.f32 %v4595, %v4611
    %v4616 = vtanh.pop %v4614
    %v4617 = vtanh.pop %v4615
    %4620 = vrot.lane.b32.xlu0 %v4616, 64
    %v4621 = vpop.permute.xlu0 %4620
    %4622 = vrot.lane.b32.xlu0 %v4617, 64
    %v4623 = vpop.permute.xlu0 %4622
    %v4626 = vmul.f32 %v4570, %v4621
    %v4627 = vmul.f32 %v4585, %v4623
    %v4628 = vxor.u32 %v3740, 2147483648
    %v4629 = vxor.u32 %v3743, 2147483648
    %v4630 = vmul.f32 %v4628, 1.442695
    %v4631 = vpow.pop %v4630
    %v4632 = vmul.f32 %v4629, 1.442695
    %v4633 = vpow.pop %v4632
    %v4634 = vadd.f32 %v4631, 1.0
    %v4635 = vadd.f32 %v4633, 1.0
    %v4636 = vrcp.pop %v4634
    %v4637 = vmul.f32 %v4634, %v4636
    %v4638 = vsub.f32 1.0, %v4637
    %v4639 = vmul.f32 %v4636, %v4638
    %v4640 = vadd.f32 %v4636, %v4639
    %vm4641 = vweird.f32 %v4634
    %vm4642 = vweird.f32 %v4636
    %vm4643 = vmor %vm4641, %vm4642
    %v4644 = vsel %vm4643, %v4636, %v4640
    %v4645 = vand.u32 2147483647, %v4634
    %vm4646 = vcmp.eq.f32.partialorder %v4645, 8.507059e+37
    %v4647 = vand.u32 %v4634, 2147483648
    %v4648 = vor.u32 1.1754944e-38, %v4647
    %v4649 = vsel %vm4646, %v4648, %v4644
    %v4650 = vmul.f32 1.0, %v4649
    %v4651 = vrcp.pop %v4635
    %v4652 = vmul.f32 %v4635, %v4651
    %v4653 = vsub.f32 1.0, %v4652
    %v4654 = vmul.f32 %v4651, %v4653
    %v4655 = vadd.f32 %v4651, %v4654
    %vm4656 = vweird.f32 %v4635
    %vm4657 = vweird.f32 %v4651
    %vm4658 = vmor %vm4656, %vm4657
    %v4659 = vsel %vm4658, %v4651, %v4655
    %v4660 = vand.u32 2147483647, %v4635
    %vm4661 = vcmp.eq.f32.partialorder %v4660, 8.507059e+37
    %v4662 = vand.u32 %v4635, 2147483648
    %v4663 = vor.u32 1.1754944e-38, %v4662
    %v4664 = vsel %vm4661, %v4663, %v4659
    %v4665 = vmul.f32 1.0, %v4664
    %v4666 = vtanh.pop %v3740
    %v4667 = vtanh.pop %v3743
    %v4668 = vmul.f32 %v4650, 0.0
    %v4669 = vmul.f32 %v4665, 0.0
    %4672 = vrot.lane.b32.xlu0 %v4666, 64
    %v4673 = vpop.permute.xlu0 %4672
    %4674 = vrot.lane.b32.xlu0 %v4667, 64
    %v4675 = vpop.permute.xlu0 %4674
    %v4678 = vmul.f32 %v4650, %v4673
    %v4679 = vmul.f32 %v4665, %v4675
    %4682 = vrot.lane.b32.xlu0 %v4678, 32
    %v4683 = vpop.permute.xlu0 %4682
    %4684 = vrot.lane.b32.xlu0 %v4679, 32
    %v4685 = vpop.permute.xlu0 %4684
    %v4688 = vadd.f32 %v4668, %v4683
    %v4689 = vadd.f32 %v4669, %v4685
    %v4690 = vtanh.pop %v4688
    %v4691 = vtanh.pop %v4689
    %4694 = vrot.lane.b32.xlu0 %v4690, 64
    %v4695 = vpop.permute.xlu0 %4694
    %4696 = vrot.lane.b32.xlu0 %v4691, 64
    %v4697 = vpop.permute.xlu0 %4696
    %v4700 = vmul.f32 %v4650, %v4695
    %v4701 = vmul.f32 %v4665, %v4697
    %v4704 = vrot.slane %v4627, 7
    %4705 = vrot.lane.b32.xlu0 %v4626, 32
    %v4706 = vpop.permute.xlu0 %4705
    %4707 = vrot.lane.b32.xlu0 %v4704, 32
    %v4708 = vpop.permute.xlu0 %4707
    %v4713 = vrot.slane %v4701, 7
    %4714 = vrot.lane.b32.xlu0 %v4700, 64
    %v4715 = vpop.permute.xlu0 %4714
    %4716 = vrot.lane.b32.xlu0 %v4713, 64
    %v4717 = vpop.permute.xlu0 %4716
    %v4720 = vsel %vm811, %v4706, %v4715
    %v4721 = vsel %vm811, %v4708, %v4717
    %v4722 = vld [vmem:[%s59] sm:$0xff]
    %v4723 = vld [vmem:[%s59 + $0x8] sm:$0xff]
    %v4724 = vld [vmem:[%s59 + $0x10] sm:$0xff]
    %v4725 = vld [vmem:[%s59 + $0x18] sm:$0xff]
    %v4726 = vld [vmem:[%s59 + $0x20] sm:$0xff]
    %v4727 = vld [vmem:[%s59 + $0x28] sm:$0xff]
    %v4728 = vld [vmem:[%s59 + $0x30] sm:$0xff]
    %v4729 = vld [vmem:[%s59 + $0x38] sm:$0xff]
    %v4730 = vld [vmem:[%s61] sm:$0x1]
    %v4732 = vperm.slane %v4730, 0
    %vm4736 = vcmask 1040384
    %v4737 = vrot.slane %v4720, 7
    %v4738 = vrot.slane %v4721, 7
    %v4739 = vsel %vm4736, %v4737, %v4738
    %v4740 = vsel %vm1911, %v4739, 0
    %4742 = vmatpush.msra.mxu0 0.0
    %4743 = vmatpush.msra.mxu0 0.0
    %4744 = vmatpush.msra.mxu0 0.0
    %4745 = vmatpush.msra.mxu0 0.0
    %4746 = vmatpush.msra.mxu0 0.0
    %4747 = vmatpush.msra.mxu0 0.0
    %4748 = vmatpush.msra.mxu0 0.0
    %4749 = vmatpush.msra.mxu0 0.0
    %4750 = vmatpush.msra.mxu0 %v4729
    %4751 = vmatpush.msra.mxu0 %v4728
    %4752 = vmatpush.msra.mxu0 %v4727
    %4753 = vmatpush.msra.mxu0 %v4726
    %4754 = vmatpush.msra.mxu0 %v4725
    %4755 = vmatpush.msra.mxu0 %v4724
    %4756 = vmatpush.msra.mxu0 %v4723
    %4757 = vmatpush.msra.mxu0 %v4722
    %4758 = vmatmul.f32.gmra.mxu0 %v4740
    %v4759 = vpop.f32.mrf.mxu0
    %v4760 = vadd.f32 %v4732, %v4759
    %4761 = vdwg.mxu0
    %vm4762 = vcmask 25600
    %4763 = vst.msk [vmem:[#allocation3] sm:$0x3] %vm4762, %v4760
    // Predicated region
    $region126: #{transformer_bilstm_forward.1} parent=1 // pred_check
      _
    $region127: #{transformer_bilstm_forward.1} parent=1 // pred_check_branch
      %4765 = sbr.rel (0) target = $region129
    $region128: #{transformer_bilstm_forward.1} parent=1 // pred_region
      %4767 = vsyncadd [#allocation4], 0
      %s4769 = sshll.u32 [#allocation3], 4
      %s4770 = int_to_ptr.vmem [resolvable:$true] %s4769
      %s4771 = sshll.u32 %s63, 4
      %s4772 = int_to_ptr.hbm [resolvable:$true] %s4771
      %4774 = dma.vmem_to_hbm [thread:$0]  %s4770, 32, %s4772, [#allocation4]
    $region129: #{transformer_bilstm_forward.1} parent=1 // pred_fallthru
      _
    // Predicated region
    $region130: #{transformer_bilstm_forward.1} parent=1 // pred_check
      _
    $region131: #{transformer_bilstm_forward.1} parent=1 // pred_check_branch
      %4776 = sbr.rel (0) target = $region133
    $region132: #{transformer_bilstm_forward.1} parent=1 // pred_region
      %4778 = dma.done [#allocation4], 32
    $region133: #{transformer_bilstm_forward.1} parent=1 // pred_fallthru
      _
    %4779 = vsyncpa [#allocation4], 1

</llo_original>
